<compile_context>
chip_gen: v7x
topology: tpu7x:2x2x1
jax: 0.10.0
libtpu: 0.0.40
codegen_flags: <defaults>
</compile_context>

<pallas_src>
import functools

import jax
import jax.numpy as jnp
from jax.experimental import pallas as pl
from jax.experimental.pallas import tpu as pltpu

HIDDEN = 768     # BERT hidden size (pooler / fc1 input)
FC1 = 512        # fc1 output size
NCLASS = 2       # fc2 output size
DROPOUT_P = 0.1


def bert_head_kernel(*refs, training: bool):
    if training:
        (pooled_ref, wp_ref, bp_ref, w1_ref, b1_ref,
         w2_ref, b2_ref, drop_ref, out_ref) = refs
    else:
        (pooled_ref, wp_ref, bp_ref, w1_ref, b1_ref,
         w2_ref, b2_ref, out_ref) = refs
        drop_ref = None

    # ---- BERT pooler: dense + tanh -> 'pooler_output' --------------------
    x = pooled_ref[...].astype(jnp.bfloat16)
    cls_hs = jnp.tanh(
        jnp.dot(x, wp_ref[...], preferred_element_type=jnp.float32)
        + bp_ref[...])

    # ---- fc1 + ReLU -------------------------------------------------------
    h = jnp.dot(cls_hs.astype(jnp.bfloat16), w1_ref[...],
                preferred_element_type=jnp.float32) + b1_ref[...]
    h = jnp.maximum(h, jnp.float32(0.0))

    # ---- Dropout(p=0.1): host-generated keep mask, pre-scaled by 1/(1-p) --
    if training:
        h = h * drop_ref[...]

    # ---- fc2 ---------------------------------------------------------------
    logits = jnp.dot(h.astype(jnp.bfloat16), w2_ref[...],
                     preferred_element_type=jnp.float32) + b2_ref[...]

    # ---- LogSoftmax over dim=1 (classes) -----------------------------------
    m = jnp.max(logits, axis=1, keepdims=True)
    lse = jnp.log(jnp.sum(jnp.exp(logits - m), axis=1, keepdims=True)) + m
    out_ref[...] = (logits - lse).astype(out_ref.dtype)


def bert_arch_head(pooled, wp, bp, w1, b1, w2, b2, *,
                   training=False, rng_key=None, batch_tile=256):
    """Pooler dense+tanh, fc1, ReLU, dropout (if training), fc2, log_softmax.

    `pooled` is (B, 768) float32 (stand-in for the encoder output feeding the
    pooler).  Weights are cast to bf16 for the MXU; accumulation is f32.
    """
    B = pooled.shape[0]
    # Batch tile: multiple of 8 sublanes, capped at `batch_tile` (256 keeps the
    # v7x 64 MiB part comfortable; raise on v6e/v5e if desired).
    tb = min(batch_tile, ((B + 7) // 8) * 8)
    tb = max(8, (tb // 8) * 8)
    grid = (pl.cdiv(B, tb),)

    wp = wp.astype(jnp.bfloat16)
    w1 = w1.astype(jnp.bfloat16)
    w2 = w2.astype(jnp.bfloat16)

    in_specs = [
        pl.BlockSpec((tb, HIDDEN),      lambda i: (i, 0)),   # pooled (tiled)
        pl.BlockSpec((HIDDEN, HIDDEN),  lambda i: (0, 0)),   # wp  (resident)
        pl.BlockSpec((1, HIDDEN),       lambda i: (0, 0)),   # bp
        pl.BlockSpec((HIDDEN, FC1),     lambda i: (0, 0)),   # w1
        pl.BlockSpec((1, FC1),          lambda i: (0, 0)),   # b1
        pl.BlockSpec((FC1, NCLASS),     lambda i: (0, 0)),   # w2
        pl.BlockSpec((1, NCLASS),       lambda i: (0, 0)),   # b2
    ]
    args = [pooled, wp, bp, w1, b1, w2, b2]

    if training:
        if rng_key is None:
            rng_key = jax.random.PRNGKey(0)
        keep = jax.random.bernoulli(rng_key, 1.0 - DROPOUT_P, (B, FC1))
        drop = keep.astype(jnp.float32) * jnp.float32(1.0 / (1.0 - DROPOUT_P))
        in_specs.append(pl.BlockSpec((tb, FC1), lambda i: (i, 0)))
        args.append(drop)

    return pl.pallas_call(
        functools.partial(bert_head_kernel, training=training),
        out_shape=jax.ShapeDtypeStruct((B, NCLASS), jnp.float32),
        grid=grid,
        in_specs=in_specs,
        out_specs=pl.BlockSpec((tb, NCLASS), lambda i: (i, 0)),
        compiler_params=pltpu.CompilerParams(
            dimension_semantics=("parallel",)),
    )(*args)


def bert_pooler_input_stub(sent_id, mask, emb_table):
    """Deterministic stand-in for the BERT encoder output feeding the pooler:
    token-embedding lookup + attention-mask-weighted mean over the sequence."""
    emb = emb_table[sent_id]                               # (B, S, 768)
    m = mask.astype(jnp.float32)[..., None]                # (B, S, 1)
    return (emb * m).sum(axis=1) / jnp.maximum(m.sum(axis=1), 1.0)  # (B, 768)


def bert_arch_forward(sent_id, mask, params, *, training=False, rng_key=None):
    pooled = bert_pooler_input_stub(sent_id, mask, params["emb"])
    return bert_arch_head(pooled,
                          params["wp"], params["bp"],
                          params["w1"], params["b1"],
                          params["w2"], params["b2"],
                          training=training, rng_key=rng_key)


def _head_reference(pooled, wp, bp, w1, b1, w2, b2):
    """Pure-JAX reference of the eval-mode head (same bf16 matmul casts)."""
    cls_hs = jnp.tanh(
        jnp.dot(pooled.astype(jnp.bfloat16), wp.astype(jnp.bfloat16),
                preferred_element_type=jnp.float32) + bp)
    h = jnp.dot(cls_hs.astype(jnp.bfloat16), w1.astype(jnp.bfloat16),
                preferred_element_type=jnp.float32) + b1
    h = jnp.maximum(h, 0.0)
    logits = jnp.dot(h.astype(jnp.bfloat16), w2.astype(jnp.bfloat16),
                     preferred_element_type=jnp.float32) + b2
    return jax.nn.log_softmax(logits, axis=1)


if __name__ == "__main__":
    B, S, VOCAB = 2, 8, 64
    key = jax.random.PRNGKey(0)
    k_ids, k_emb, k_wp, k_w1, k_w2, k_drop = jax.random.split(key, 6)

    sent_id = jax.random.randint(k_ids, (B, S), 0, VOCAB, dtype=jnp.int32)
    mask = jnp.ones((B, S), dtype=jnp.int32)

    params = {
        "emb": 0.02 * jax.random.normal(k_emb, (VOCAB, HIDDEN), jnp.float32),
        "wp":  0.02 * jax.random.normal(k_wp,  (HIDDEN, HIDDEN), jnp.float32),
        "bp":  jnp.zeros((1, HIDDEN), jnp.float32),
        "w1":  0.02 * jax.random.normal(k_w1,  (HIDDEN, FC1), jnp.float32),
        "b1":  jnp.zeros((1, FC1), jnp.float32),
        "w2":  0.02 * jax.random.normal(k_w2,  (FC1, NCLASS), jnp.float32),
        "b2":  jnp.zeros((1, NCLASS), jnp.float32),
    }

    # Eval-mode (dropout disabled) — check against pure-JAX reference.
    out_eval = bert_arch_forward(sent_id, mask, params, training=False)
    out_eval = jax.block_until_ready(out_eval)
    assert out_eval.shape == (B, NCLASS) and out_eval.dtype == jnp.float32

    pooled_ref = bert_pooler_input_stub(sent_id, mask, params["emb"])
    ref = _head_reference(pooled_ref, params["wp"], params["bp"],
                          params["w1"], params["b1"],
                          params["w2"], params["b2"])
    assert jnp.allclose(out_eval, ref, atol=1e-2, rtol=1e-2), \
        f"mismatch: {out_eval} vs {ref}"

    # Train-mode (dropout enabled) — log-probabilities must still normalize.
    out_train = bert_arch_forward(sent_id, mask, params,
                                  training=True, rng_key=k_drop)
    out_train = jax.block_until_ready(out_train)
    assert out_train.shape == (B, NCLASS)
    assert jnp.allclose(jnp.exp(out_train).sum(axis=1), 1.0, atol=1e-3)

    print("KERNEL_OK")
</pallas_src>

<mosaic_0001>
module attributes {stable_mosaic.version = 11 : i64} {
  func.func @bert_head_kernel(%arg0: i32, %arg1: memref<8x768xf32, #tpu.memory_space<vmem>>, %arg2: memref<768x768xbf16, #tpu.memory_space<vmem>>, %arg3: memref<1x768xf32, #tpu.memory_space<vmem>>, %arg4: memref<768x512xbf16, #tpu.memory_space<vmem>>, %arg5: memref<1x512xf32, #tpu.memory_space<vmem>>, %arg6: memref<512x2xbf16, #tpu.memory_space<vmem>>, %arg7: memref<1x2xf32, #tpu.memory_space<vmem>>, %arg8: memref<8x2xf32, #tpu.memory_space<vmem>>) attributes {dimension_semantics = [#tpu.dimension_semantics<parallel>], iteration_bounds = array<i64: 1>, scalar_prefetch = 0 : i64, scratch_operands = 0 : i64, tpu.core_type = #tpu.core_type<tc>, window_params = [{transform_indices = @transform_0, window_bounds = array<i64: 8, 768>}, {pipeline_mode = #tpu.pipeline_mode<synchronous>, transform_indices = @transform_1, window_bounds = array<i64: 768, 768>}, {pipeline_mode = #tpu.pipeline_mode<synchronous>, transform_indices = @transform_2, window_bounds = array<i64: 1, 768>}, {pipeline_mode = #tpu.pipeline_mode<synchronous>, transform_indices = @transform_3, window_bounds = array<i64: 768, 512>}, {pipeline_mode = #tpu.pipeline_mode<synchronous>, transform_indices = @transform_4, window_bounds = array<i64: 1, 512>}, {pipeline_mode = #tpu.pipeline_mode<synchronous>, transform_indices = @transform_5, window_bounds = array<i64: 512, 2>}, {pipeline_mode = #tpu.pipeline_mode<synchronous>, transform_indices = @transform_6, window_bounds = array<i64: 1, 2>}, {transform_indices = @transform_7, window_bounds = array<i64: 8, 2>}]} {
    %c0 = arith.constant 0 : index
    %c0_0 = arith.constant 0 : index
    %0 = vector.load %arg1[%c0, %c0_0] : memref<8x768xf32, #tpu.memory_space<vmem>>, vector<8x768xf32>
    %1 = arith.truncf %0 : vector<8x768xf32> to vector<8x768xbf16>
    %c0_1 = arith.constant 0 : index
    %c0_2 = arith.constant 0 : index
    %2 = vector.load %arg2[%c0_1, %c0_2] : memref<768x768xbf16, #tpu.memory_space<vmem>>, vector<768x768xbf16>
    %cst = arith.constant dense<0.000000e+00> : vector<8x768xf32>
    %3 = tpu.matmul %1, %2, %cst {dimension_numbers = #tpu.dot_dimension_numbers<[1], [0], [0], [1], [0, 0, 1, 1], [], []>} : vector<8x768xbf16>, vector<768x768xbf16>, vector<8x768xf32> -> vector<8x768xf32>
    %c0_3 = arith.constant 0 : index
    %c0_4 = arith.constant 0 : index
    %4 = vector.load %arg3[%c0_3, %c0_4] : memref<1x768xf32, #tpu.memory_space<vmem>>, vector<1x768xf32>
    %5 = vector.broadcast %4 : vector<1x768xf32> to vector<8x768xf32>
    %6 = arith.addf %3, %5 : vector<8x768xf32>
    %7 = math.tanh %6 : vector<8x768xf32>
    %8 = arith.truncf %7 : vector<8x768xf32> to vector<8x768xbf16>
    %c0_5 = arith.constant 0 : index
    %c0_6 = arith.constant 0 : index
    %9 = vector.load %arg4[%c0_5, %c0_6] : memref<768x512xbf16, #tpu.memory_space<vmem>>, vector<768x512xbf16>
    %cst_7 = arith.constant dense<0.000000e+00> : vector<8x512xf32>
    %10 = tpu.matmul %8, %9, %cst_7 {dimension_numbers = #tpu.dot_dimension_numbers<[1], [0], [0], [1], [0, 0, 1, 1], [], []>} : vector<8x768xbf16>, vector<768x512xbf16>, vector<8x512xf32> -> vector<8x512xf32>
    %c0_8 = arith.constant 0 : index
    %c0_9 = arith.constant 0 : index
    %11 = vector.load %arg5[%c0_8, %c0_9] : memref<1x512xf32, #tpu.memory_space<vmem>>, vector<1x512xf32>
    %12 = vector.broadcast %11 : vector<1x512xf32> to vector<8x512xf32>
    %13 = arith.addf %10, %12 : vector<8x512xf32>
    %cst_10 = arith.constant 0.000000e+00 : f32
    %14 = vector.broadcast %cst_10 : f32 to vector<8x512xf32>
    %15 = arith.maximumf %13, %14 : vector<8x512xf32>
    %16 = arith.truncf %15 : vector<8x512xf32> to vector<8x512xbf16>
    %c0_11 = arith.constant 0 : index
    %c0_12 = arith.constant 0 : index
    %17 = vector.load %arg6[%c0_11, %c0_12] : memref<512x2xbf16, #tpu.memory_space<vmem>>, vector<512x2xbf16>
    %cst_13 = arith.constant dense<0.000000e+00> : vector<8x2xf32>
    %18 = tpu.matmul %16, %17, %cst_13 {dimension_numbers = #tpu.dot_dimension_numbers<[1], [0], [0], [1], [0, 0, 1, 1], [], []>} : vector<8x512xbf16>, vector<512x2xbf16>, vector<8x2xf32> -> vector<8x2xf32>
    %c0_14 = arith.constant 0 : index
    %c0_15 = arith.constant 0 : index
    %19 = vector.load %arg7[%c0_14, %c0_15] : memref<1x2xf32, #tpu.memory_space<vmem>>, vector<1x2xf32>
    %20 = vector.broadcast %19 : vector<1x2xf32> to vector<8x2xf32>
    %21 = arith.addf %18, %20 : vector<8x2xf32>
    %cst_16 = arith.constant dense<0xFF800000> : vector<8xf32>
    %22 = vector.multi_reduction <maximumf>, %21, %cst_16 [1] : vector<8x2xf32> to vector<8xf32>
    %23 = vector.shape_cast %22 : vector<8xf32> to vector<8x1xf32>
    %24 = vector.broadcast %23 : vector<8x1xf32> to vector<8x2xf32>
    %25 = arith.subf %21, %24 : vector<8x2xf32>
    %26 = math.exp %25 : vector<8x2xf32>
    %cst_17 = arith.constant dense<0.000000e+00> : vector<8xf32>
    %27 = vector.multi_reduction <add>, %26, %cst_17 [1] : vector<8x2xf32> to vector<8xf32>
    %28 = vector.shape_cast %27 : vector<8xf32> to vector<8x1xf32>
    %29 = math.log %28 : vector<8x1xf32>
    %30 = arith.addf %29, %23 : vector<8x1xf32>
    %31 = vector.broadcast %30 : vector<8x1xf32> to vector<8x2xf32>
    %32 = arith.subf %21, %31 : vector<8x2xf32>
    %c0_18 = arith.constant 0 : index
    %c0_19 = arith.constant 0 : index
    %33 = vector.load %arg8[%c0_18, %c0_19] : memref<8x2xf32, #tpu.memory_space<vmem>>, vector<8x2xf32>
    tpu.vector_store %arg8[%c0_18, %c0_19], %32 {strides = array<i32>} : memref<8x2xf32, #tpu.memory_space<vmem>>, vector<8x2xf32>,
    return
  }
  func.func @transform_0(%arg0: i32) -> (i32, i32) {
    %c0_i32 = arith.constant 0 : i32
    %c0_i32_0 = arith.constant 0 : i32
    return %arg0, %c0_i32 : i32, i32
  }
  func.func @transform_1(%arg0: i32) -> (i32, i32) {
    %c0_i32 = arith.constant 0 : i32
    %c0_i32_0 = arith.constant 0 : i32
    %c0_i32_1 = arith.constant 0 : i32
    return %c0_i32, %c0_i32_0 : i32, i32
  }
  func.func @transform_2(%arg0: i32) -> (i32, i32) {
    %c0_i32 = arith.constant 0 : i32
    %c0_i32_0 = arith.constant 0 : i32
    %c0_i32_1 = arith.constant 0 : i32
    return %c0_i32, %c0_i32_0 : i32, i32
  }
  func.func @transform_3(%arg0: i32) -> (i32, i32) {
    %c0_i32 = arith.constant 0 : i32
    %c0_i32_0 = arith.constant 0 : i32
    %c0_i32_1 = arith.constant 0 : i32
    return %c0_i32, %c0_i32_0 : i32, i32
  }
  func.func @transform_4(%arg0: i32) -> (i32, i32) {
    %c0_i32 = arith.constant 0 : i32
    %c0_i32_0 = arith.constant 0 : i32
    %c0_i32_1 = arith.constant 0 : i32
    return %c0_i32, %c0_i32_0 : i32, i32
  }
  func.func @transform_5(%arg0: i32) -> (i32, i32) {
    %c0_i32 = arith.constant 0 : i32
    %c0_i32_0 = arith.constant 0 : i32
    %c0_i32_1 = arith.constant 0 : i32
    return %c0_i32, %c0_i32_0 : i32, i32
  }
  func.func @transform_6(%arg0: i32) -> (i32, i32) {
    %c0_i32 = arith.constant 0 : i32
    %c0_i32_0 = arith.constant 0 : i32
    %c0_i32_1 = arith.constant 0 : i32
    return %c0_i32, %c0_i32_0 : i32, i32
  }
  func.func @transform_7(%arg0: i32) -> (i32, i32) {
    %c0_i32 = arith.constant 0 : i32
    %c0_i32_0 = arith.constant 0 : i32
    return %arg0, %c0_i32 : i32, i32
  }
}

</mosaic_0001>

<llo_original>
// kernel: tpu_custom_call.1
$region0: #{tpu_custom_call.1}
  #allocation0 [shape = 'u32[]', space=smem, size = 0x4, offset = 0x4, fixed_abs, tag = 'smem constant byte address 0x4 - core index']
  #allocation1 [shape = 'u32[144,128]{1,0:T(1,128)}', space=vmem, size = 0x12000, scoped, tag = 'internal scratch']
  %s0 = inlined_call_operand.hbm [shape: f32[2,768], index: 0, kind: input, shape index: {}]
  %s1 = inlined_call_operand.hbm [shape: bf16[768,768], index: 1, kind: input, shape index: {}]
  %s2 = inlined_call_operand.hbm [shape: f32[1,768], index: 2, kind: input, shape index: {}]
  %s3 = inlined_call_operand.hbm [shape: bf16[768,512], index: 3, kind: input, shape index: {}]
  %s4 = inlined_call_operand.hbm [shape: f32[1,512], index: 4, kind: input, shape index: {}]
  %s5 = inlined_call_operand.vmem [shape: bf16[512,2], index: 5, kind: input, shape index: {}]
  %s6 = inlined_call_operand.hbm [shape: f32[1,2], index: 6, kind: input, shape index: {}]
  %s7 = inlined_call_operand.hbm [shape: f32[2,2], index: 7, kind: output, shape index: {}]
  %s8 = sld [smem:[#allocation0]]
  $region62: #{tpu_custom_call.1} parent=0
    _
  %s10 = ssub.s32 1, %s8
  %s11 = scalar_select 0, %s10, %s8
  $region1: #{tpu_custom_call.1} parent=0
    #allocation2 [shape = 'u8[24576]{0}', space=vmem, size = 0x6000, scoped, tag = 'input window, operand 0, single buffered']
    #allocation3 [shape = 's32[1]{0}', space=sflag, size = 0x4, scoped, tag = 'scoped memory for tpu_custom_call.1']
    #allocation4 [shape = 's32[1]{0}', space=sflag, size = 0x4, scoped, tag = 'scoped memory for tpu_custom_call.1']
    #allocation5 [shape = 'u8[1179648]{0}', space=vmem, size = 0x120000, scoped, tag = 'input window, operand 1, single buffered']
    #allocation6 [shape = 's32[1]{0}', space=sflag, size = 0x4, scoped, tag = 'scoped memory for tpu_custom_call.1']
    #allocation7 [shape = 'u8[3072]{0}', space=vmem, size = 0xc00, scoped, tag = 'input window, operand 2, single buffered']
    #allocation8 [shape = 'u8[786432]{0}', space=vmem, size = 0xc0000, scoped, tag = 'input window, operand 3, single buffered']
    #allocation9 [shape = 's32[1]{0}', space=sflag, size = 0x4, scoped, tag = 'scoped memory for tpu_custom_call.1']
    #allocation10 [shape = 'u8[2048]{0}', space=vmem, size = 0x800, scoped, tag = 'input window, operand 4, single buffered']
    #allocation11 [shape = 'u8[512]{0}', space=vmem, size = 0x400, scoped, tag = 'input window, operand 6, single buffered']
    #allocation12 [shape = 's32[1]{0}', space=sflag, size = 0x4, scoped, tag = 'scoped memory for tpu_custom_call.1']
    #allocation13 [shape = 'u8[4096]{0}', space=vmem, size = 0x1000, scoped, tag = 'output window, operand 0, single buffered']
    %12 = vsyncpa [#allocation3], 0
    %13 = vsyncpa [#allocation6], 0
    %14 = vsyncpa [#allocation9], 0
    %15 = vsyncpa [#allocation12], 0
    %16 = vsyncpa [#allocation4], 0
    // Predicated region
    $region2: #{tpu_custom_call.1} parent=1 // pred_check
      _
    $region3: #{tpu_custom_call.1} parent=1 // pred_check_branch
      %18 = sbr.rel (0) target = $region5
    $region4: #{tpu_custom_call.1} parent=1 // pred_region
      %s20 = ssub.s32 768, 192
      %21 = vsyncadd [#allocation3], %s20
      %s22 = sshll.u32 [#allocation2], 4
      %s23 = int_to_ptr.vmem [resolvable:$true] %s22
      %28 = dma.hbm_to_vmem [thread:$0]  %s0, 192, %s23, [#allocation3], 192, 192, 12
    $region5: #{tpu_custom_call.1} parent=1 // pred_fallthru
      _
    // Predicated region
    $region6: #{tpu_custom_call.1} parent=1 // pred_check
      _
    $region7: #{tpu_custom_call.1} parent=1 // pred_check_branch
      %30 = sbr.rel (0) target = $region9
    $region8: #{tpu_custom_call.1} parent=1 // pred_region
      %s32 = ssub.s32 36864, 36864
      %33 = vsyncadd [#allocation6], %s32
      %s34 = sshll.u32 [#allocation5], 4
      %s35 = int_to_ptr.vmem [resolvable:$true] %s34
      %40 = dma.hbm_to_vmem [thread:$0]  %s1, 36864, %s35, [#allocation6], 384, 384, 24
    $region9: #{tpu_custom_call.1} parent=1 // pred_fallthru
      _
    // Predicated region
    $region10: #{tpu_custom_call.1} parent=1 // pred_check
      _
    $region11: #{tpu_custom_call.1} parent=1 // pred_check_branch
      %42 = sbr.rel (0) target = $region13
    $region12: #{tpu_custom_call.1} parent=1 // pred_region
      %s44 = ssub.s32 96, 96
      %45 = vsyncadd [#allocation6], %s44
      %s47 = sshll.u32 [#allocation7], 4
      %s48 = int_to_ptr.vmem [resolvable:$true] %s47
      %50 = dma.hbm_to_vmem [thread:$0]  %s2, 96, %s48, [#allocation6]
    $region13: #{tpu_custom_call.1} parent=1 // pred_fallthru
      _
    // Predicated region
    $region14: #{tpu_custom_call.1} parent=1 // pred_check
      _
    $region15: #{tpu_custom_call.1} parent=1 // pred_check_branch
      %52 = sbr.rel (0) target = $region17
    $region16: #{tpu_custom_call.1} parent=1 // pred_region
      %s54 = ssub.s32 24576, 24576
      %55 = vsyncadd [#allocation9], %s54
      %s56 = sshll.u32 [#allocation8], 4
      %s57 = int_to_ptr.vmem [resolvable:$true] %s56
      %62 = dma.hbm_to_vmem [thread:$0]  %s3, 24576, %s57, [#allocation9], 256, 256, 16
    $region17: #{tpu_custom_call.1} parent=1 // pred_fallthru
      _
    // Predicated region
    $region18: #{tpu_custom_call.1} parent=1 // pred_check
      _
    $region19: #{tpu_custom_call.1} parent=1 // pred_check_branch
      %64 = sbr.rel (0) target = $region21
    $region20: #{tpu_custom_call.1} parent=1 // pred_region
      %s66 = ssub.s32 64, 64
      %67 = vsyncadd [#allocation9], %s66
      %s69 = sshll.u32 [#allocation10], 4
      %s70 = int_to_ptr.vmem [resolvable:$true] %s69
      %72 = dma.hbm_to_vmem [thread:$0]  %s4, 64, %s70, [#allocation9]
    $region21: #{tpu_custom_call.1} parent=1 // pred_fallthru
      _
    // Predicated region
    $region22: #{tpu_custom_call.1} parent=1 // pred_check
      _
    $region23: #{tpu_custom_call.1} parent=1 // pred_check_branch
      %74 = sbr.rel (0) target = $region25
    $region24: #{tpu_custom_call.1} parent=1 // pred_region
      _
    $region25: #{tpu_custom_call.1} parent=1 // pred_fallthru
      _
    // Predicated region
    $region26: #{tpu_custom_call.1} parent=1 // pred_check
      _
    $region27: #{tpu_custom_call.1} parent=1 // pred_check_branch
      %76 = sbr.rel (0) target = $region29
    $region28: #{tpu_custom_call.1} parent=1 // pred_region
      %s78 = ssub.s32 16, 16
      %79 = vsyncadd [#allocation12], %s78
      %s81 = sshll.u32 [#allocation11], 4
      %s82 = int_to_ptr.vmem [resolvable:$true] %s81
      %84 = dma.hbm_to_vmem [thread:$0]  %s6, 16, %s82, [#allocation12]
    $region29: #{tpu_custom_call.1} parent=1 // pred_fallthru
      _
    // Predicated region
    $region30: #{tpu_custom_call.1} parent=1 // pred_check
      _
    $region31: #{tpu_custom_call.1} parent=1 // pred_check_branch
      %86 = sbr.rel (0) target = $region33
    $region32: #{tpu_custom_call.1} parent=1 // pred_region
      %87 = dma.done [#allocation3], 768
    $region33: #{tpu_custom_call.1} parent=1 // pred_fallthru
      _
    // Predicated region
    $region34: #{tpu_custom_call.1} parent=1 // pred_check
      _
    $region35: #{tpu_custom_call.1} parent=1 // pred_check_branch
      %89 = sbr.rel (0) target = $region37
    $region36: #{tpu_custom_call.1} parent=1 // pred_region
      %90 = dma.done [#allocation6], 36864
    $region37: #{tpu_custom_call.1} parent=1 // pred_fallthru
      _
    // Predicated region
    $region38: #{tpu_custom_call.1} parent=1 // pred_check
      _
    $region39: #{tpu_custom_call.1} parent=1 // pred_check_branch
      %92 = sbr.rel (0) target = $region41
    $region40: #{tpu_custom_call.1} parent=1 // pred_region
      %93 = dma.done [#allocation6], 96
    $region41: #{tpu_custom_call.1} parent=1 // pred_fallthru
      _
    // Predicated region
    $region42: #{tpu_custom_call.1} parent=1 // pred_check
      _
    $region43: #{tpu_custom_call.1} parent=1 // pred_check_branch
      %95 = sbr.rel (0) target = $region45
    $region44: #{tpu_custom_call.1} parent=1 // pred_region
      %96 = dma.done [#allocation9], 24576
    $region45: #{tpu_custom_call.1} parent=1 // pred_fallthru
      _
    // Predicated region
    $region46: #{tpu_custom_call.1} parent=1 // pred_check
      _
    $region47: #{tpu_custom_call.1} parent=1 // pred_check_branch
      %98 = sbr.rel (0) target = $region49
    $region48: #{tpu_custom_call.1} parent=1 // pred_region
      %99 = dma.done [#allocation9], 64
    $region49: #{tpu_custom_call.1} parent=1 // pred_fallthru
      _
    // Predicated region
    $region50: #{tpu_custom_call.1} parent=1 // pred_check
      _
    $region51: #{tpu_custom_call.1} parent=1 // pred_check_branch
      %101 = sbr.rel (0) target = $region53
    $region52: #{tpu_custom_call.1} parent=1 // pred_region
      %102 = dma.done [#allocation12], 16
    $region53: #{tpu_custom_call.1} parent=1 // pred_fallthru
      _
    %v104 = vld [vmem:[#allocation2] sm:$0xff]
    %v105 = vld [vmem:[#allocation2 + $0x8] sm:$0xf]
    %v106 = vld [vmem:[#allocation2 + $0xc] sm:$0xff]
    %v107 = vld [vmem:[#allocation2 + $0x14] sm:$0xf]
    %v108 = vld [vmem:[#allocation2 + $0x18] sm:$0xff]
    %v109 = vld [vmem:[#allocation2 + $0x20] sm:$0xf]
    %v110 = vld [vmem:[#allocation2 + $0x24] sm:$0xff]
    %v111 = vld [vmem:[#allocation2 + $0x2c] sm:$0xf]
    %v120 = vcombine.low %v104, %v106
    %v121 = vcombine.high %v104, %v106
    %v122 = vcombine.low %v108, %v110
    %v123 = vcombine.high %v108, %v110
    %v125 = vunpack.c.l.s4 1983009808
    %v126 = vunpack.c.0.s8 %v125
    %v127 = vlaneseq
    %v128 = vshrl.u32 %v127, 7
    %v129 = vsub.s32 %v126, %v128
    %v130 = vrot.slane %v120, %v129
    %v132 = vunpack.c.l.s4 1983009808
    %v133 = vunpack.c.0.s8 %v132
    %v134 = vlaneseq
    %v135 = vshrl.u32 %v134, 7
    %v136 = vsub.s32 %v133, %v135
    %v137 = vrot.slane %v121, %v136
    %v139 = vunpack.c.l.s4 1983009808
    %v140 = vunpack.c.0.s8 %v139
    %v141 = vlaneseq
    %v142 = vshrl.u32 %v141, 7
    %v143 = vsub.s32 %v140, %v142
    %v144 = vrot.slane %v122, %v143
    %v146 = vunpack.c.l.s4 1983009808
    %v147 = vunpack.c.0.s8 %v146
    %v148 = vlaneseq
    %v149 = vshrl.u32 %v148, 7
    %v150 = vsub.s32 %v147, %v149
    %v151 = vrot.slane %v123, %v150
    %v152 = vcombine.low %v130, %v144
    %v153 = vcombine.high %v130, %v144
    %v154 = vcombine.low %v137, %v151
    %v155 = vcombine.high %v137, %v151
    %v156 = vcombine.low %v105, %v107
    %v157 = vcombine.low %v109, %v111
    %v159 = vunpack.c.l.s4 1983009808
    %v160 = vunpack.c.0.s8 %v159
    %v161 = vlaneseq
    %v162 = vshrl.u32 %v161, 7
    %v163 = vsub.s32 %v160, %v162
    %v164 = vrot.slane %v156, %v163
    %v166 = vunpack.c.l.s4 1983009808
    %v167 = vunpack.c.0.s8 %v166
    %v168 = vlaneseq
    %v169 = vshrl.u32 %v168, 7
    %v170 = vsub.s32 %v167, %v169
    %v171 = vrot.slane %v157, %v170
    %v172 = vcombine.low %v164, %v171
    %v173 = vcombine.high %v164, %v171
    %v180 = vpack.c.bf16 %v152, %v152
    %v181 = vpack.c.bf16 %v153, %v153
    %v182 = vpack.c.bf16 %v154, %v154
    %v183 = vpack.c.bf16 %v155, %v155
    %v184 = vpack.c.bf16 %v172, %v172
    %v185 = vpack.c.bf16 %v173, %v173
    %v186 = vld [vmem:[#allocation5] sm:$0xff]
    %v187 = vld [vmem:[#allocation5 + $0x8] sm:$0xff]
    %v188 = vld [vmem:[#allocation5 + $0x10] sm:$0xff]
    %v189 = vld [vmem:[#allocation5 + $0x18] sm:$0xff]
    %v190 = vld [vmem:[#allocation5 + $0x20] sm:$0xff]
    %v191 = vld [vmem:[#allocation5 + $0x28] sm:$0xff]
    %v192 = vld [vmem:[#allocation5 + $0x30] sm:$0xff]
    %v193 = vld [vmem:[#allocation5 + $0x38] sm:$0xff]
    %v194 = vld [vmem:[#allocation5 + $0x40] sm:$0xff]
    %v195 = vld [vmem:[#allocation5 + $0x48] sm:$0xff]
    %v196 = vld [vmem:[#allocation5 + $0x50] sm:$0xff]
    %v197 = vld [vmem:[#allocation5 + $0x58] sm:$0xff]
    %v198 = vld [vmem:[#allocation5 + $0x60] sm:$0xff]
    %v199 = vld [vmem:[#allocation5 + $0x68] sm:$0xff]
    %v200 = vld [vmem:[#allocation5 + $0x70] sm:$0xff]
    %v201 = vld [vmem:[#allocation5 + $0x78] sm:$0xff]
    %v202 = vld [vmem:[#allocation5 + $0x80] sm:$0xff]
    %v203 = vld [vmem:[#allocation5 + $0x88] sm:$0xff]
    %v204 = vld [vmem:[#allocation5 + $0x90] sm:$0xff]
    %v205 = vld [vmem:[#allocation5 + $0x98] sm:$0xff]
    %v206 = vld [vmem:[#allocation5 + $0xa0] sm:$0xff]
    %v207 = vld [vmem:[#allocation5 + $0xa8] sm:$0xff]
    %v208 = vld [vmem:[#allocation5 + $0xb0] sm:$0xff]
    %v209 = vld [vmem:[#allocation5 + $0xb8] sm:$0xff]
    %v210 = vld [vmem:[#allocation5 + $0xc0] sm:$0xff]
    %v211 = vld [vmem:[#allocation5 + $0xc8] sm:$0xff]
    %v212 = vld [vmem:[#allocation5 + $0xd0] sm:$0xff]
    %v213 = vld [vmem:[#allocation5 + $0xd8] sm:$0xff]
    %v214 = vld [vmem:[#allocation5 + $0xe0] sm:$0xff]
    %v215 = vld [vmem:[#allocation5 + $0xe8] sm:$0xff]
    %v216 = vld [vmem:[#allocation5 + $0xf0] sm:$0xff]
    %v217 = vld [vmem:[#allocation5 + $0xf8] sm:$0xff]
    %v218 = vld [vmem:[#allocation5 + $0x100] sm:$0xff]
    %v219 = vld [vmem:[#allocation5 + $0x108] sm:$0xff]
    %v220 = vld [vmem:[#allocation5 + $0x110] sm:$0xff]
    %v221 = vld [vmem:[#allocation5 + $0x118] sm:$0xff]
    %v222 = vld [vmem:[#allocation5 + $0x120] sm:$0xff]
    %v223 = vld [vmem:[#allocation5 + $0x128] sm:$0xff]
    %v224 = vld [vmem:[#allocation5 + $0x130] sm:$0xff]
    %v225 = vld [vmem:[#allocation5 + $0x138] sm:$0xff]
    %v226 = vld [vmem:[#allocation5 + $0x140] sm:$0xff]
    %v227 = vld [vmem:[#allocation5 + $0x148] sm:$0xff]
    %v228 = vld [vmem:[#allocation5 + $0x150] sm:$0xff]
    %v229 = vld [vmem:[#allocation5 + $0x158] sm:$0xff]
    %v230 = vld [vmem:[#allocation5 + $0x160] sm:$0xff]
    %v231 = vld [vmem:[#allocation5 + $0x168] sm:$0xff]
    %v232 = vld [vmem:[#allocation5 + $0x170] sm:$0xff]
    %v233 = vld [vmem:[#allocation5 + $0x178] sm:$0xff]
    %v234 = vld [vmem:[#allocation5 + $0x180] sm:$0xff]
    %v235 = vld [vmem:[#allocation5 + $0x188] sm:$0xff]
    %v236 = vld [vmem:[#allocation5 + $0x190] sm:$0xff]
    %v237 = vld [vmem:[#allocation5 + $0x198] sm:$0xff]
    %v238 = vld [vmem:[#allocation5 + $0x1a0] sm:$0xff]
    %v239 = vld [vmem:[#allocation5 + $0x1a8] sm:$0xff]
    %v240 = vld [vmem:[#allocation5 + $0x1b0] sm:$0xff]
    %v241 = vld [vmem:[#allocation5 + $0x1b8] sm:$0xff]
    %v242 = vld [vmem:[#allocation5 + $0x1c0] sm:$0xff]
    %v243 = vld [vmem:[#allocation5 + $0x1c8] sm:$0xff]
    %v244 = vld [vmem:[#allocation5 + $0x1d0] sm:$0xff]
    %v245 = vld [vmem:[#allocation5 + $0x1d8] sm:$0xff]
    %v246 = vld [vmem:[#allocation5 + $0x1e0] sm:$0xff]
    %v247 = vld [vmem:[#allocation5 + $0x1e8] sm:$0xff]
    %v248 = vld [vmem:[#allocation5 + $0x1f0] sm:$0xff]
    %v249 = vld [vmem:[#allocation5 + $0x1f8] sm:$0xff]
    %v250 = vld [vmem:[#allocation5 + $0x200] sm:$0xff]
    %v251 = vld [vmem:[#allocation5 + $0x208] sm:$0xff]
    %v252 = vld [vmem:[#allocation5 + $0x210] sm:$0xff]
    %v253 = vld [vmem:[#allocation5 + $0x218] sm:$0xff]
    %v254 = vld [vmem:[#allocation5 + $0x220] sm:$0xff]
    %v255 = vld [vmem:[#allocation5 + $0x228] sm:$0xff]
    %v256 = vld [vmem:[#allocation5 + $0x230] sm:$0xff]
    %v257 = vld [vmem:[#allocation5 + $0x238] sm:$0xff]
    %v258 = vld [vmem:[#allocation5 + $0x240] sm:$0xff]
    %v259 = vld [vmem:[#allocation5 + $0x248] sm:$0xff]
    %v260 = vld [vmem:[#allocation5 + $0x250] sm:$0xff]
    %v261 = vld [vmem:[#allocation5 + $0x258] sm:$0xff]
    %v262 = vld [vmem:[#allocation5 + $0x260] sm:$0xff]
    %v263 = vld [vmem:[#allocation5 + $0x268] sm:$0xff]
    %v264 = vld [vmem:[#allocation5 + $0x270] sm:$0xff]
    %v265 = vld [vmem:[#allocation5 + $0x278] sm:$0xff]
    %v266 = vld [vmem:[#allocation5 + $0x280] sm:$0xff]
    %v267 = vld [vmem:[#allocation5 + $0x288] sm:$0xff]
    %v268 = vld [vmem:[#allocation5 + $0x290] sm:$0xff]
    %v269 = vld [vmem:[#allocation5 + $0x298] sm:$0xff]
    %v270 = vld [vmem:[#allocation5 + $0x2a0] sm:$0xff]
    %v271 = vld [vmem:[#allocation5 + $0x2a8] sm:$0xff]
    %v272 = vld [vmem:[#allocation5 + $0x2b0] sm:$0xff]
    %v273 = vld [vmem:[#allocation5 + $0x2b8] sm:$0xff]
    %v274 = vld [vmem:[#allocation5 + $0x2c0] sm:$0xff]
    %v275 = vld [vmem:[#allocation5 + $0x2c8] sm:$0xff]
    %v276 = vld [vmem:[#allocation5 + $0x2d0] sm:$0xff]
    %v277 = vld [vmem:[#allocation5 + $0x2d8] sm:$0xff]
    %v278 = vld [vmem:[#allocation5 + $0x2e0] sm:$0xff]
    %v279 = vld [vmem:[#allocation5 + $0x2e8] sm:$0xff]
    %v280 = vld [vmem:[#allocation5 + $0x2f0] sm:$0xff]
    %v281 = vld [vmem:[#allocation5 + $0x2f8] sm:$0xff]
    %v282 = vld [vmem:[#allocation5 + $0x300] sm:$0xff]
    %v283 = vld [vmem:[#allocation5 + $0x308] sm:$0xff]
    %v284 = vld [vmem:[#allocation5 + $0x310] sm:$0xff]
    %v285 = vld [vmem:[#allocation5 + $0x318] sm:$0xff]
    %v286 = vld [vmem:[#allocation5 + $0x320] sm:$0xff]
    %v287 = vld [vmem:[#allocation5 + $0x328] sm:$0xff]
    %v288 = vld [vmem:[#allocation5 + $0x330] sm:$0xff]
    %v289 = vld [vmem:[#allocation5 + $0x338] sm:$0xff]
    %v290 = vld [vmem:[#allocation5 + $0x340] sm:$0xff]
    %v291 = vld [vmem:[#allocation5 + $0x348] sm:$0xff]
    %v292 = vld [vmem:[#allocation5 + $0x350] sm:$0xff]
    %v293 = vld [vmem:[#allocation5 + $0x358] sm:$0xff]
    %v294 = vld [vmem:[#allocation5 + $0x360] sm:$0xff]
    %v295 = vld [vmem:[#allocation5 + $0x368] sm:$0xff]
    %v296 = vld [vmem:[#allocation5 + $0x370] sm:$0xff]
    %v297 = vld [vmem:[#allocation5 + $0x378] sm:$0xff]
    %v298 = vld [vmem:[#allocation5 + $0x380] sm:$0xff]
    %v299 = vld [vmem:[#allocation5 + $0x388] sm:$0xff]
    %v300 = vld [vmem:[#allocation5 + $0x390] sm:$0xff]
    %v301 = vld [vmem:[#allocation5 + $0x398] sm:$0xff]
    %v302 = vld [vmem:[#allocation5 + $0x3a0] sm:$0xff]
    %v303 = vld [vmem:[#allocation5 + $0x3a8] sm:$0xff]
    %v304 = vld [vmem:[#allocation5 + $0x3b0] sm:$0xff]
    %v305 = vld [vmem:[#allocation5 + $0x3b8] sm:$0xff]
    %v306 = vld [vmem:[#allocation5 + $0x3c0] sm:$0xff]
    %v307 = vld [vmem:[#allocation5 + $0x3c8] sm:$0xff]
    %v308 = vld [vmem:[#allocation5 + $0x3d0] sm:$0xff]
    %v309 = vld [vmem:[#allocation5 + $0x3d8] sm:$0xff]
    %v310 = vld [vmem:[#allocation5 + $0x3e0] sm:$0xff]
    %v311 = vld [vmem:[#allocation5 + $0x3e8] sm:$0xff]
    %v312 = vld [vmem:[#allocation5 + $0x3f0] sm:$0xff]
    %v313 = vld [vmem:[#allocation5 + $0x3f8] sm:$0xff]
    %v314 = vld [vmem:[#allocation5 + $0x400] sm:$0xff]
    %v315 = vld [vmem:[#allocation5 + $0x408] sm:$0xff]
    %v316 = vld [vmem:[#allocation5 + $0x410] sm:$0xff]
    %v317 = vld [vmem:[#allocation5 + $0x418] sm:$0xff]
    %v318 = vld [vmem:[#allocation5 + $0x420] sm:$0xff]
    %v319 = vld [vmem:[#allocation5 + $0x428] sm:$0xff]
    %v320 = vld [vmem:[#allocation5 + $0x430] sm:$0xff]
    %v321 = vld [vmem:[#allocation5 + $0x438] sm:$0xff]
    %v322 = vld [vmem:[#allocation5 + $0x440] sm:$0xff]
    %v323 = vld [vmem:[#allocation5 + $0x448] sm:$0xff]
    %v324 = vld [vmem:[#allocation5 + $0x450] sm:$0xff]
    %v325 = vld [vmem:[#allocation5 + $0x458] sm:$0xff]
    %v326 = vld [vmem:[#allocation5 + $0x460] sm:$0xff]
    %v327 = vld [vmem:[#allocation5 + $0x468] sm:$0xff]
    %v328 = vld [vmem:[#allocation5 + $0x470] sm:$0xff]
    %v329 = vld [vmem:[#allocation5 + $0x478] sm:$0xff]
    %v330 = vld [vmem:[#allocation5 + $0x480] sm:$0xff]
    %v331 = vld [vmem:[#allocation5 + $0x488] sm:$0xff]
    %v332 = vld [vmem:[#allocation5 + $0x490] sm:$0xff]
    %v333 = vld [vmem:[#allocation5 + $0x498] sm:$0xff]
    %v334 = vld [vmem:[#allocation5 + $0x4a0] sm:$0xff]
    %v335 = vld [vmem:[#allocation5 + $0x4a8] sm:$0xff]
    %v336 = vld [vmem:[#allocation5 + $0x4b0] sm:$0xff]
    %v337 = vld [vmem:[#allocation5 + $0x4b8] sm:$0xff]
    %v338 = vld [vmem:[#allocation5 + $0x4c0] sm:$0xff]
    %v339 = vld [vmem:[#allocation5 + $0x4c8] sm:$0xff]
    %v340 = vld [vmem:[#allocation5 + $0x4d0] sm:$0xff]
    %v341 = vld [vmem:[#allocation5 + $0x4d8] sm:$0xff]
    %v342 = vld [vmem:[#allocation5 + $0x4e0] sm:$0xff]
    %v343 = vld [vmem:[#allocation5 + $0x4e8] sm:$0xff]
    %v344 = vld [vmem:[#allocation5 + $0x4f0] sm:$0xff]
    %v345 = vld [vmem:[#allocation5 + $0x4f8] sm:$0xff]
    %v346 = vld [vmem:[#allocation5 + $0x500] sm:$0xff]
    %v347 = vld [vmem:[#allocation5 + $0x508] sm:$0xff]
    %v348 = vld [vmem:[#allocation5 + $0x510] sm:$0xff]
    %v349 = vld [vmem:[#allocation5 + $0x518] sm:$0xff]
    %v350 = vld [vmem:[#allocation5 + $0x520] sm:$0xff]
    %v351 = vld [vmem:[#allocation5 + $0x528] sm:$0xff]
    %v352 = vld [vmem:[#allocation5 + $0x530] sm:$0xff]
    %v353 = vld [vmem:[#allocation5 + $0x538] sm:$0xff]
    %v354 = vld [vmem:[#allocation5 + $0x540] sm:$0xff]
    %v355 = vld [vmem:[#allocation5 + $0x548] sm:$0xff]
    %v356 = vld [vmem:[#allocation5 + $0x550] sm:$0xff]
    %v357 = vld [vmem:[#allocation5 + $0x558] sm:$0xff]
    %v358 = vld [vmem:[#allocation5 + $0x560] sm:$0xff]
    %v359 = vld [vmem:[#allocation5 + $0x568] sm:$0xff]
    %v360 = vld [vmem:[#allocation5 + $0x570] sm:$0xff]
    %v361 = vld [vmem:[#allocation5 + $0x578] sm:$0xff]
    %v362 = vld [vmem:[#allocation5 + $0x580] sm:$0xff]
    %v363 = vld [vmem:[#allocation5 + $0x588] sm:$0xff]
    %v364 = vld [vmem:[#allocation5 + $0x590] sm:$0xff]
    %v365 = vld [vmem:[#allocation5 + $0x598] sm:$0xff]
    %v366 = vld [vmem:[#allocation5 + $0x5a0] sm:$0xff]
    %v367 = vld [vmem:[#allocation5 + $0x5a8] sm:$0xff]
    %v368 = vld [vmem:[#allocation5 + $0x5b0] sm:$0xff]
    %v369 = vld [vmem:[#allocation5 + $0x5b8] sm:$0xff]
    %v370 = vld [vmem:[#allocation5 + $0x5c0] sm:$0xff]
    %v371 = vld [vmem:[#allocation5 + $0x5c8] sm:$0xff]
    %v372 = vld [vmem:[#allocation5 + $0x5d0] sm:$0xff]
    %v373 = vld [vmem:[#allocation5 + $0x5d8] sm:$0xff]
    %v374 = vld [vmem:[#allocation5 + $0x5e0] sm:$0xff]
    %v375 = vld [vmem:[#allocation5 + $0x5e8] sm:$0xff]
    %v376 = vld [vmem:[#allocation5 + $0x5f0] sm:$0xff]
    %v377 = vld [vmem:[#allocation5 + $0x5f8] sm:$0xff]
    %v378 = vld [vmem:[#allocation5 + $0x600] sm:$0xff]
    %v379 = vld [vmem:[#allocation5 + $0x608] sm:$0xff]
    %v380 = vld [vmem:[#allocation5 + $0x610] sm:$0xff]
    %v381 = vld [vmem:[#allocation5 + $0x618] sm:$0xff]
    %v382 = vld [vmem:[#allocation5 + $0x620] sm:$0xff]
    %v383 = vld [vmem:[#allocation5 + $0x628] sm:$0xff]
    %v384 = vld [vmem:[#allocation5 + $0x630] sm:$0xff]
    %v385 = vld [vmem:[#allocation5 + $0x638] sm:$0xff]
    %v386 = vld [vmem:[#allocation5 + $0x640] sm:$0xff]
    %v387 = vld [vmem:[#allocation5 + $0x648] sm:$0xff]
    %v388 = vld [vmem:[#allocation5 + $0x650] sm:$0xff]
    %v389 = vld [vmem:[#allocation5 + $0x658] sm:$0xff]
    %v390 = vld [vmem:[#allocation5 + $0x660] sm:$0xff]
    %v391 = vld [vmem:[#allocation5 + $0x668] sm:$0xff]
    %v392 = vld [vmem:[#allocation5 + $0x670] sm:$0xff]
    %v393 = vld [vmem:[#allocation5 + $0x678] sm:$0xff]
    %v394 = vld [vmem:[#allocation5 + $0x680] sm:$0xff]
    %v395 = vld [vmem:[#allocation5 + $0x688] sm:$0xff]
    %v396 = vld [vmem:[#allocation5 + $0x690] sm:$0xff]
    %v397 = vld [vmem:[#allocation5 + $0x698] sm:$0xff]
    %v398 = vld [vmem:[#allocation5 + $0x6a0] sm:$0xff]
    %v399 = vld [vmem:[#allocation5 + $0x6a8] sm:$0xff]
    %v400 = vld [vmem:[#allocation5 + $0x6b0] sm:$0xff]
    %v401 = vld [vmem:[#allocation5 + $0x6b8] sm:$0xff]
    %v402 = vld [vmem:[#allocation5 + $0x6c0] sm:$0xff]
    %v403 = vld [vmem:[#allocation5 + $0x6c8] sm:$0xff]
    %v404 = vld [vmem:[#allocation5 + $0x6d0] sm:$0xff]
    %v405 = vld [vmem:[#allocation5 + $0x6d8] sm:$0xff]
    %v406 = vld [vmem:[#allocation5 + $0x6e0] sm:$0xff]
    %v407 = vld [vmem:[#allocation5 + $0x6e8] sm:$0xff]
    %v408 = vld [vmem:[#allocation5 + $0x6f0] sm:$0xff]
    %v409 = vld [vmem:[#allocation5 + $0x6f8] sm:$0xff]
    %v410 = vld [vmem:[#allocation5 + $0x700] sm:$0xff]
    %v411 = vld [vmem:[#allocation5 + $0x708] sm:$0xff]
    %v412 = vld [vmem:[#allocation5 + $0x710] sm:$0xff]
    %v413 = vld [vmem:[#allocation5 + $0x718] sm:$0xff]
    %v414 = vld [vmem:[#allocation5 + $0x720] sm:$0xff]
    %v415 = vld [vmem:[#allocation5 + $0x728] sm:$0xff]
    %v416 = vld [vmem:[#allocation5 + $0x730] sm:$0xff]
    %v417 = vld [vmem:[#allocation5 + $0x738] sm:$0xff]
    %v418 = vld [vmem:[#allocation5 + $0x740] sm:$0xff]
    %v419 = vld [vmem:[#allocation5 + $0x748] sm:$0xff]
    %v420 = vld [vmem:[#allocation5 + $0x750] sm:$0xff]
    %v421 = vld [vmem:[#allocation5 + $0x758] sm:$0xff]
    %v422 = vld [vmem:[#allocation5 + $0x760] sm:$0xff]
    %v423 = vld [vmem:[#allocation5 + $0x768] sm:$0xff]
    %v424 = vld [vmem:[#allocation5 + $0x770] sm:$0xff]
    %v425 = vld [vmem:[#allocation5 + $0x778] sm:$0xff]
    %v426 = vld [vmem:[#allocation5 + $0x780] sm:$0xff]
    %v427 = vld [vmem:[#allocation5 + $0x788] sm:$0xff]
    %v428 = vld [vmem:[#allocation5 + $0x790] sm:$0xff]
    %v429 = vld [vmem:[#allocation5 + $0x798] sm:$0xff]
    %v430 = vld [vmem:[#allocation5 + $0x7a0] sm:$0xff]
    %v431 = vld [vmem:[#allocation5 + $0x7a8] sm:$0xff]
    %v432 = vld [vmem:[#allocation5 + $0x7b0] sm:$0xff]
    %v433 = vld [vmem:[#allocation5 + $0x7b8] sm:$0xff]
    %v434 = vld [vmem:[#allocation5 + $0x7c0] sm:$0xff]
    %v435 = vld [vmem:[#allocation5 + $0x7c8] sm:$0xff]
    %v436 = vld [vmem:[#allocation5 + $0x7d0] sm:$0xff]
    %v437 = vld [vmem:[#allocation5 + $0x7d8] sm:$0xff]
    %v438 = vld [vmem:[#allocation5 + $0x7e0] sm:$0xff]
    %v439 = vld [vmem:[#allocation5 + $0x7e8] sm:$0xff]
    %v440 = vld [vmem:[#allocation5 + $0x7f0] sm:$0xff]
    %v441 = vld [vmem:[#allocation5 + $0x7f8] sm:$0xff]
    %v442 = vld [vmem:[#allocation5 + $0x800] sm:$0xff]
    %v443 = vld [vmem:[#allocation5 + $0x808] sm:$0xff]
    %v444 = vld [vmem:[#allocation5 + $0x810] sm:$0xff]
    %v445 = vld [vmem:[#allocation5 + $0x818] sm:$0xff]
    %v446 = vld [vmem:[#allocation5 + $0x820] sm:$0xff]
    %v447 = vld [vmem:[#allocation5 + $0x828] sm:$0xff]
    %v448 = vld [vmem:[#allocation5 + $0x830] sm:$0xff]
    %v449 = vld [vmem:[#allocation5 + $0x838] sm:$0xff]
    %v450 = vld [vmem:[#allocation5 + $0x840] sm:$0xff]
    %v451 = vld [vmem:[#allocation5 + $0x848] sm:$0xff]
    %v452 = vld [vmem:[#allocation5 + $0x850] sm:$0xff]
    %v453 = vld [vmem:[#allocation5 + $0x858] sm:$0xff]
    %v454 = vld [vmem:[#allocation5 + $0x860] sm:$0xff]
    %v455 = vld [vmem:[#allocation5 + $0x868] sm:$0xff]
    %v456 = vld [vmem:[#allocation5 + $0x870] sm:$0xff]
    %v457 = vld [vmem:[#allocation5 + $0x878] sm:$0xff]
    %v458 = vld [vmem:[#allocation5 + $0x880] sm:$0xff]
    %v459 = vld [vmem:[#allocation5 + $0x888] sm:$0xff]
    %v460 = vld [vmem:[#allocation5 + $0x890] sm:$0xff]
    %v461 = vld [vmem:[#allocation5 + $0x898] sm:$0xff]
    %v462 = vld [vmem:[#allocation5 + $0x8a0] sm:$0xff]
    %v463 = vld [vmem:[#allocation5 + $0x8a8] sm:$0xff]
    %v464 = vld [vmem:[#allocation5 + $0x8b0] sm:$0xff]
    %v465 = vld [vmem:[#allocation5 + $0x8b8] sm:$0xff]
    %v466 = vld [vmem:[#allocation5 + $0x8c0] sm:$0xff]
    %v467 = vld [vmem:[#allocation5 + $0x8c8] sm:$0xff]
    %v468 = vld [vmem:[#allocation5 + $0x8d0] sm:$0xff]
    %v469 = vld [vmem:[#allocation5 + $0x8d8] sm:$0xff]
    %v470 = vld [vmem:[#allocation5 + $0x8e0] sm:$0xff]
    %v471 = vld [vmem:[#allocation5 + $0x8e8] sm:$0xff]
    %v472 = vld [vmem:[#allocation5 + $0x8f0] sm:$0xff]
    %v473 = vld [vmem:[#allocation5 + $0x8f8] sm:$0xff]
    %v474 = vld [vmem:[#allocation7] sm:$0x3f]
    %v476 = vlaneseq
    %v477 = vshrl.u32 %v476, 7
    %v478 = vsub.s32 0, %v477
    %v479 = vrot.slane %v474, %v478
    %v480 = vlaneseq
    %v481 = vshrl.u32 %v480, 7
    %v482 = vsub.s32 1, %v481
    %v483 = vrot.slane %v474, %v482
    %v484 = vlaneseq
    %v485 = vshrl.u32 %v484, 7
    %v486 = vsub.s32 2, %v485
    %v487 = vrot.slane %v474, %v486
    %v488 = vlaneseq
    %v489 = vshrl.u32 %v488, 7
    %v490 = vsub.s32 3, %v489
    %v491 = vrot.slane %v474, %v490
    %v492 = vlaneseq
    %v493 = vshrl.u32 %v492, 7
    %v494 = vsub.s32 4, %v493
    %v495 = vrot.slane %v474, %v494
    %v496 = vlaneseq
    %v497 = vshrl.u32 %v496, 7
    %v498 = vsub.s32 5, %v497
    %v499 = vrot.slane %v474, %v498
    %v794 = vunpack.c.l.b16 %v186
    %v795 = vunpack.c.h.b16 %v186
    %v796 = vunpack.c.l.b16 %v187
    %v797 = vunpack.c.h.b16 %v187
    %v798 = vunpack.c.l.b16 %v188
    %v799 = vunpack.c.h.b16 %v188
    %v800 = vunpack.c.l.b16 %v189
    %v801 = vunpack.c.h.b16 %v189
    %v802 = vunpack.c.l.b16 %v190
    %v803 = vunpack.c.h.b16 %v190
    %v804 = vunpack.c.l.b16 %v191
    %v805 = vunpack.c.h.b16 %v191
    %v806 = vunpack.c.l.b16 %v192
    %v807 = vunpack.c.h.b16 %v192
    %v808 = vunpack.c.l.b16 %v193
    %v809 = vunpack.c.h.b16 %v193
    %v810 = vunpack.c.l.b16 %v194
    %v811 = vunpack.c.h.b16 %v194
    %v812 = vunpack.c.l.b16 %v195
    %v813 = vunpack.c.h.b16 %v195
    %v814 = vunpack.c.l.b16 %v196
    %v815 = vunpack.c.h.b16 %v196
    %v816 = vunpack.c.l.b16 %v197
    %v817 = vunpack.c.h.b16 %v197
    %v818 = vunpack.c.l.b16 %v198
    %v819 = vunpack.c.h.b16 %v198
    %v820 = vunpack.c.l.b16 %v199
    %v821 = vunpack.c.h.b16 %v199
    %v822 = vunpack.c.l.b16 %v200
    %v823 = vunpack.c.h.b16 %v200
    %v824 = vunpack.c.l.b16 %v201
    %v825 = vunpack.c.h.b16 %v201
    %v826 = vunpack.c.l.b16 %v202
    %v827 = vunpack.c.h.b16 %v202
    %v828 = vunpack.c.l.b16 %v203
    %v829 = vunpack.c.h.b16 %v203
    %v830 = vunpack.c.l.b16 %v204
    %v831 = vunpack.c.h.b16 %v204
    %v832 = vunpack.c.l.b16 %v205
    %v833 = vunpack.c.h.b16 %v205
    %v834 = vunpack.c.l.b16 %v206
    %v835 = vunpack.c.h.b16 %v206
    %v836 = vunpack.c.l.b16 %v207
    %v837 = vunpack.c.h.b16 %v207
    %v838 = vunpack.c.l.b16 %v208
    %v839 = vunpack.c.h.b16 %v208
    %v840 = vunpack.c.l.b16 %v209
    %v841 = vunpack.c.h.b16 %v209
    %v842 = vunpack.c.l.b16 %v210
    %v843 = vunpack.c.h.b16 %v210
    %v844 = vunpack.c.l.b16 %v211
    %v845 = vunpack.c.h.b16 %v211
    %v846 = vunpack.c.l.b16 %v212
    %v847 = vunpack.c.h.b16 %v212
    %v848 = vunpack.c.l.b16 %v213
    %v849 = vunpack.c.h.b16 %v213
    %v850 = vunpack.c.l.b16 %v214
    %v851 = vunpack.c.h.b16 %v214
    %v852 = vunpack.c.l.b16 %v215
    %v853 = vunpack.c.h.b16 %v215
    %v854 = vunpack.c.l.b16 %v216
    %v855 = vunpack.c.h.b16 %v216
    %v856 = vunpack.c.l.b16 %v217
    %v857 = vunpack.c.h.b16 %v217
    %v858 = vunpack.c.l.b16 %v218
    %v859 = vunpack.c.h.b16 %v218
    %v860 = vunpack.c.l.b16 %v219
    %v861 = vunpack.c.h.b16 %v219
    %v862 = vunpack.c.l.b16 %v220
    %v863 = vunpack.c.h.b16 %v220
    %v864 = vunpack.c.l.b16 %v221
    %v865 = vunpack.c.h.b16 %v221
    %v866 = vunpack.c.l.b16 %v222
    %v867 = vunpack.c.h.b16 %v222
    %v868 = vunpack.c.l.b16 %v223
    %v869 = vunpack.c.h.b16 %v223
    %v870 = vunpack.c.l.b16 %v224
    %v871 = vunpack.c.h.b16 %v224
    %v872 = vunpack.c.l.b16 %v225
    %v873 = vunpack.c.h.b16 %v225
    %v874 = vunpack.c.l.b16 %v226
    %v875 = vunpack.c.h.b16 %v226
    %v876 = vunpack.c.l.b16 %v227
    %v877 = vunpack.c.h.b16 %v227
    %v878 = vunpack.c.l.b16 %v228
    %v879 = vunpack.c.h.b16 %v228
    %v880 = vunpack.c.l.b16 %v229
    %v881 = vunpack.c.h.b16 %v229
    %v882 = vunpack.c.l.b16 %v230
    %v883 = vunpack.c.h.b16 %v230
    %v884 = vunpack.c.l.b16 %v231
    %v885 = vunpack.c.h.b16 %v231
    %v886 = vunpack.c.l.b16 %v232
    %v887 = vunpack.c.h.b16 %v232
    %v888 = vunpack.c.l.b16 %v233
    %v889 = vunpack.c.h.b16 %v233
    %v890 = vunpack.c.l.b16 %v234
    %v891 = vunpack.c.h.b16 %v234
    %v892 = vunpack.c.l.b16 %v235
    %v893 = vunpack.c.h.b16 %v235
    %v894 = vunpack.c.l.b16 %v236
    %v895 = vunpack.c.h.b16 %v236
    %v896 = vunpack.c.l.b16 %v237
    %v897 = vunpack.c.h.b16 %v237
    %v898 = vunpack.c.l.b16 %v238
    %v899 = vunpack.c.h.b16 %v238
    %v900 = vunpack.c.l.b16 %v239
    %v901 = vunpack.c.h.b16 %v239
    %v902 = vunpack.c.l.b16 %v240
    %v903 = vunpack.c.h.b16 %v240
    %v904 = vunpack.c.l.b16 %v241
    %v905 = vunpack.c.h.b16 %v241
    %v906 = vunpack.c.l.b16 %v242
    %v907 = vunpack.c.h.b16 %v242
    %v908 = vunpack.c.l.b16 %v243
    %v909 = vunpack.c.h.b16 %v243
    %v910 = vunpack.c.l.b16 %v244
    %v911 = vunpack.c.h.b16 %v244
    %v912 = vunpack.c.l.b16 %v245
    %v913 = vunpack.c.h.b16 %v245
    %v914 = vunpack.c.l.b16 %v246
    %v915 = vunpack.c.h.b16 %v246
    %v916 = vunpack.c.l.b16 %v247
    %v917 = vunpack.c.h.b16 %v247
    %v918 = vunpack.c.l.b16 %v248
    %v919 = vunpack.c.h.b16 %v248
    %v920 = vunpack.c.l.b16 %v249
    %v921 = vunpack.c.h.b16 %v249
    %v922 = vunpack.c.l.b16 %v250
    %v923 = vunpack.c.h.b16 %v250
    %v924 = vunpack.c.l.b16 %v251
    %v925 = vunpack.c.h.b16 %v251
    %v926 = vunpack.c.l.b16 %v252
    %v927 = vunpack.c.h.b16 %v252
    %v928 = vunpack.c.l.b16 %v253
    %v929 = vunpack.c.h.b16 %v253
    %v930 = vunpack.c.l.b16 %v254
    %v931 = vunpack.c.h.b16 %v254
    %v932 = vunpack.c.l.b16 %v255
    %v933 = vunpack.c.h.b16 %v255
    %v934 = vunpack.c.l.b16 %v256
    %v935 = vunpack.c.h.b16 %v256
    %v936 = vunpack.c.l.b16 %v257
    %v937 = vunpack.c.h.b16 %v257
    %v938 = vunpack.c.l.b16 %v258
    %v939 = vunpack.c.h.b16 %v258
    %v940 = vunpack.c.l.b16 %v259
    %v941 = vunpack.c.h.b16 %v259
    %v942 = vunpack.c.l.b16 %v260
    %v943 = vunpack.c.h.b16 %v260
    %v944 = vunpack.c.l.b16 %v261
    %v945 = vunpack.c.h.b16 %v261
    %v946 = vunpack.c.l.b16 %v262
    %v947 = vunpack.c.h.b16 %v262
    %v948 = vunpack.c.l.b16 %v263
    %v949 = vunpack.c.h.b16 %v263
    %v950 = vunpack.c.l.b16 %v264
    %v951 = vunpack.c.h.b16 %v264
    %v952 = vunpack.c.l.b16 %v265
    %v953 = vunpack.c.h.b16 %v265
    %v954 = vunpack.c.l.b16 %v266
    %v955 = vunpack.c.h.b16 %v266
    %v956 = vunpack.c.l.b16 %v267
    %v957 = vunpack.c.h.b16 %v267
    %v958 = vunpack.c.l.b16 %v268
    %v959 = vunpack.c.h.b16 %v268
    %v960 = vunpack.c.l.b16 %v269
    %v961 = vunpack.c.h.b16 %v269
    %v962 = vunpack.c.l.b16 %v270
    %v963 = vunpack.c.h.b16 %v270
    %v964 = vunpack.c.l.b16 %v271
    %v965 = vunpack.c.h.b16 %v271
    %v966 = vunpack.c.l.b16 %v272
    %v967 = vunpack.c.h.b16 %v272
    %v968 = vunpack.c.l.b16 %v273
    %v969 = vunpack.c.h.b16 %v273
    %v970 = vunpack.c.l.b16 %v274
    %v971 = vunpack.c.h.b16 %v274
    %v972 = vunpack.c.l.b16 %v275
    %v973 = vunpack.c.h.b16 %v275
    %v974 = vunpack.c.l.b16 %v276
    %v975 = vunpack.c.h.b16 %v276
    %v976 = vunpack.c.l.b16 %v277
    %v977 = vunpack.c.h.b16 %v277
    %v978 = vunpack.c.l.b16 %v278
    %v979 = vunpack.c.h.b16 %v278
    %v980 = vunpack.c.l.b16 %v279
    %v981 = vunpack.c.h.b16 %v279
    %v982 = vunpack.c.l.b16 %v280
    %v983 = vunpack.c.h.b16 %v280
    %v984 = vunpack.c.l.b16 %v281
    %v985 = vunpack.c.h.b16 %v281
    %v986 = vunpack.c.l.b16 %v282
    %v987 = vunpack.c.h.b16 %v282
    %v988 = vunpack.c.l.b16 %v283
    %v989 = vunpack.c.h.b16 %v283
    %v990 = vunpack.c.l.b16 %v284
    %v991 = vunpack.c.h.b16 %v284
    %v992 = vunpack.c.l.b16 %v285
    %v993 = vunpack.c.h.b16 %v285
    %v994 = vunpack.c.l.b16 %v286
    %v995 = vunpack.c.h.b16 %v286
    %v996 = vunpack.c.l.b16 %v287
    %v997 = vunpack.c.h.b16 %v287
    %v998 = vunpack.c.l.b16 %v288
    %v999 = vunpack.c.h.b16 %v288
    %v1000 = vunpack.c.l.b16 %v289
    %v1001 = vunpack.c.h.b16 %v289
    %v1002 = vunpack.c.l.b16 %v290
    %v1003 = vunpack.c.h.b16 %v290
    %v1004 = vunpack.c.l.b16 %v291
    %v1005 = vunpack.c.h.b16 %v291
    %v1006 = vunpack.c.l.b16 %v292
    %v1007 = vunpack.c.h.b16 %v292
    %v1008 = vunpack.c.l.b16 %v293
    %v1009 = vunpack.c.h.b16 %v293
    %v1010 = vunpack.c.l.b16 %v294
    %v1011 = vunpack.c.h.b16 %v294
    %v1012 = vunpack.c.l.b16 %v295
    %v1013 = vunpack.c.h.b16 %v295
    %v1014 = vunpack.c.l.b16 %v296
    %v1015 = vunpack.c.h.b16 %v296
    %v1016 = vunpack.c.l.b16 %v297
    %v1017 = vunpack.c.h.b16 %v297
    %v1018 = vunpack.c.l.b16 %v298
    %v1019 = vunpack.c.h.b16 %v298
    %v1020 = vunpack.c.l.b16 %v299
    %v1021 = vunpack.c.h.b16 %v299
    %v1022 = vunpack.c.l.b16 %v300
    %v1023 = vunpack.c.h.b16 %v300
    %v1024 = vunpack.c.l.b16 %v301
    %v1025 = vunpack.c.h.b16 %v301
    %v1026 = vunpack.c.l.b16 %v302
    %v1027 = vunpack.c.h.b16 %v302
    %v1028 = vunpack.c.l.b16 %v303
    %v1029 = vunpack.c.h.b16 %v303
    %v1030 = vunpack.c.l.b16 %v304
    %v1031 = vunpack.c.h.b16 %v304
    %v1032 = vunpack.c.l.b16 %v305
    %v1033 = vunpack.c.h.b16 %v305
    %v1034 = vunpack.c.l.b16 %v306
    %v1035 = vunpack.c.h.b16 %v306
    %v1036 = vunpack.c.l.b16 %v307
    %v1037 = vunpack.c.h.b16 %v307
    %v1038 = vunpack.c.l.b16 %v308
    %v1039 = vunpack.c.h.b16 %v308
    %v1040 = vunpack.c.l.b16 %v309
    %v1041 = vunpack.c.h.b16 %v309
    %v1042 = vunpack.c.l.b16 %v310
    %v1043 = vunpack.c.h.b16 %v310
    %v1044 = vunpack.c.l.b16 %v311
    %v1045 = vunpack.c.h.b16 %v311
    %v1046 = vunpack.c.l.b16 %v312
    %v1047 = vunpack.c.h.b16 %v312
    %v1048 = vunpack.c.l.b16 %v313
    %v1049 = vunpack.c.h.b16 %v313
    %v1050 = vunpack.c.l.b16 %v314
    %v1051 = vunpack.c.h.b16 %v314
    %v1052 = vunpack.c.l.b16 %v315
    %v1053 = vunpack.c.h.b16 %v315
    %v1054 = vunpack.c.l.b16 %v316
    %v1055 = vunpack.c.h.b16 %v316
    %v1056 = vunpack.c.l.b16 %v317
    %v1057 = vunpack.c.h.b16 %v317
    %v1058 = vunpack.c.l.b16 %v318
    %v1059 = vunpack.c.h.b16 %v318
    %v1060 = vunpack.c.l.b16 %v319
    %v1061 = vunpack.c.h.b16 %v319
    %v1062 = vunpack.c.l.b16 %v320
    %v1063 = vunpack.c.h.b16 %v320
    %v1064 = vunpack.c.l.b16 %v321
    %v1065 = vunpack.c.h.b16 %v321
    %v1066 = vunpack.c.l.b16 %v322
    %v1067 = vunpack.c.h.b16 %v322
    %v1068 = vunpack.c.l.b16 %v323
    %v1069 = vunpack.c.h.b16 %v323
    %v1070 = vunpack.c.l.b16 %v324
    %v1071 = vunpack.c.h.b16 %v324
    %v1072 = vunpack.c.l.b16 %v325
    %v1073 = vunpack.c.h.b16 %v325
    %v1074 = vunpack.c.l.b16 %v326
    %v1075 = vunpack.c.h.b16 %v326
    %v1076 = vunpack.c.l.b16 %v327
    %v1077 = vunpack.c.h.b16 %v327
    %v1078 = vunpack.c.l.b16 %v328
    %v1079 = vunpack.c.h.b16 %v328
    %v1080 = vunpack.c.l.b16 %v329
    %v1081 = vunpack.c.h.b16 %v329
    %v1082 = vunpack.c.l.b16 %v330
    %v1083 = vunpack.c.h.b16 %v330
    %v1084 = vunpack.c.l.b16 %v331
    %v1085 = vunpack.c.h.b16 %v331
    %v1086 = vunpack.c.l.b16 %v332
    %v1087 = vunpack.c.h.b16 %v332
    %v1088 = vunpack.c.l.b16 %v333
    %v1089 = vunpack.c.h.b16 %v333
    %v1090 = vunpack.c.l.b16 %v334
    %v1091 = vunpack.c.h.b16 %v334
    %v1092 = vunpack.c.l.b16 %v335
    %v1093 = vunpack.c.h.b16 %v335
    %v1094 = vunpack.c.l.b16 %v336
    %v1095 = vunpack.c.h.b16 %v336
    %v1096 = vunpack.c.l.b16 %v337
    %v1097 = vunpack.c.h.b16 %v337
    %v1098 = vunpack.c.l.b16 %v338
    %v1099 = vunpack.c.h.b16 %v338
    %v1100 = vunpack.c.l.b16 %v339
    %v1101 = vunpack.c.h.b16 %v339
    %v1102 = vunpack.c.l.b16 %v340
    %v1103 = vunpack.c.h.b16 %v340
    %v1104 = vunpack.c.l.b16 %v341
    %v1105 = vunpack.c.h.b16 %v341
    %v1106 = vunpack.c.l.b16 %v342
    %v1107 = vunpack.c.h.b16 %v342
    %v1108 = vunpack.c.l.b16 %v343
    %v1109 = vunpack.c.h.b16 %v343
    %v1110 = vunpack.c.l.b16 %v344
    %v1111 = vunpack.c.h.b16 %v344
    %v1112 = vunpack.c.l.b16 %v345
    %v1113 = vunpack.c.h.b16 %v345
    %v1114 = vunpack.c.l.b16 %v346
    %v1115 = vunpack.c.h.b16 %v346
    %v1116 = vunpack.c.l.b16 %v347
    %v1117 = vunpack.c.h.b16 %v347
    %v1118 = vunpack.c.l.b16 %v348
    %v1119 = vunpack.c.h.b16 %v348
    %v1120 = vunpack.c.l.b16 %v349
    %v1121 = vunpack.c.h.b16 %v349
    %v1122 = vunpack.c.l.b16 %v350
    %v1123 = vunpack.c.h.b16 %v350
    %v1124 = vunpack.c.l.b16 %v351
    %v1125 = vunpack.c.h.b16 %v351
    %v1126 = vunpack.c.l.b16 %v352
    %v1127 = vunpack.c.h.b16 %v352
    %v1128 = vunpack.c.l.b16 %v353
    %v1129 = vunpack.c.h.b16 %v353
    %v1130 = vunpack.c.l.b16 %v354
    %v1131 = vunpack.c.h.b16 %v354
    %v1132 = vunpack.c.l.b16 %v355
    %v1133 = vunpack.c.h.b16 %v355
    %v1134 = vunpack.c.l.b16 %v356
    %v1135 = vunpack.c.h.b16 %v356
    %v1136 = vunpack.c.l.b16 %v357
    %v1137 = vunpack.c.h.b16 %v357
    %v1138 = vunpack.c.l.b16 %v358
    %v1139 = vunpack.c.h.b16 %v358
    %v1140 = vunpack.c.l.b16 %v359
    %v1141 = vunpack.c.h.b16 %v359
    %v1142 = vunpack.c.l.b16 %v360
    %v1143 = vunpack.c.h.b16 %v360
    %v1144 = vunpack.c.l.b16 %v361
    %v1145 = vunpack.c.h.b16 %v361
    %v1146 = vunpack.c.l.b16 %v362
    %v1147 = vunpack.c.h.b16 %v362
    %v1148 = vunpack.c.l.b16 %v363
    %v1149 = vunpack.c.h.b16 %v363
    %v1150 = vunpack.c.l.b16 %v364
    %v1151 = vunpack.c.h.b16 %v364
    %v1152 = vunpack.c.l.b16 %v365
    %v1153 = vunpack.c.h.b16 %v365
    %v1154 = vunpack.c.l.b16 %v366
    %v1155 = vunpack.c.h.b16 %v366
    %v1156 = vunpack.c.l.b16 %v367
    %v1157 = vunpack.c.h.b16 %v367
    %v1158 = vunpack.c.l.b16 %v368
    %v1159 = vunpack.c.h.b16 %v368
    %v1160 = vunpack.c.l.b16 %v369
    %v1161 = vunpack.c.h.b16 %v369
    %v1162 = vunpack.c.l.b16 %v370
    %v1163 = vunpack.c.h.b16 %v370
    %v1164 = vunpack.c.l.b16 %v371
    %v1165 = vunpack.c.h.b16 %v371
    %v1166 = vunpack.c.l.b16 %v372
    %v1167 = vunpack.c.h.b16 %v372
    %v1168 = vunpack.c.l.b16 %v373
    %v1169 = vunpack.c.h.b16 %v373
    %v1170 = vunpack.c.l.b16 %v374
    %v1171 = vunpack.c.h.b16 %v374
    %v1172 = vunpack.c.l.b16 %v375
    %v1173 = vunpack.c.h.b16 %v375
    %v1174 = vunpack.c.l.b16 %v376
    %v1175 = vunpack.c.h.b16 %v376
    %v1176 = vunpack.c.l.b16 %v377
    %v1177 = vunpack.c.h.b16 %v377
    %v1178 = vunpack.c.l.b16 %v378
    %v1179 = vunpack.c.h.b16 %v378
    %v1180 = vunpack.c.l.b16 %v379
    %v1181 = vunpack.c.h.b16 %v379
    %v1182 = vunpack.c.l.b16 %v380
    %v1183 = vunpack.c.h.b16 %v380
    %v1184 = vunpack.c.l.b16 %v381
    %v1185 = vunpack.c.h.b16 %v381
    %v1186 = vunpack.c.l.b16 %v382
    %v1187 = vunpack.c.h.b16 %v382
    %v1188 = vunpack.c.l.b16 %v383
    %v1189 = vunpack.c.h.b16 %v383
    %v1190 = vunpack.c.l.b16 %v384
    %v1191 = vunpack.c.h.b16 %v384
    %v1192 = vunpack.c.l.b16 %v385
    %v1193 = vunpack.c.h.b16 %v385
    %v1194 = vunpack.c.l.b16 %v386
    %v1195 = vunpack.c.h.b16 %v386
    %v1196 = vunpack.c.l.b16 %v387
    %v1197 = vunpack.c.h.b16 %v387
    %v1198 = vunpack.c.l.b16 %v388
    %v1199 = vunpack.c.h.b16 %v388
    %v1200 = vunpack.c.l.b16 %v389
    %v1201 = vunpack.c.h.b16 %v389
    %v1202 = vunpack.c.l.b16 %v390
    %v1203 = vunpack.c.h.b16 %v390
    %v1204 = vunpack.c.l.b16 %v391
    %v1205 = vunpack.c.h.b16 %v391
    %v1206 = vunpack.c.l.b16 %v392
    %v1207 = vunpack.c.h.b16 %v392
    %v1208 = vunpack.c.l.b16 %v393
    %v1209 = vunpack.c.h.b16 %v393
    %v1210 = vunpack.c.l.b16 %v394
    %v1211 = vunpack.c.h.b16 %v394
    %v1212 = vunpack.c.l.b16 %v395
    %v1213 = vunpack.c.h.b16 %v395
    %v1214 = vunpack.c.l.b16 %v396
    %v1215 = vunpack.c.h.b16 %v396
    %v1216 = vunpack.c.l.b16 %v397
    %v1217 = vunpack.c.h.b16 %v397
    %v1218 = vunpack.c.l.b16 %v398
    %v1219 = vunpack.c.h.b16 %v398
    %v1220 = vunpack.c.l.b16 %v399
    %v1221 = vunpack.c.h.b16 %v399
    %v1222 = vunpack.c.l.b16 %v400
    %v1223 = vunpack.c.h.b16 %v400
    %v1224 = vunpack.c.l.b16 %v401
    %v1225 = vunpack.c.h.b16 %v401
    %v1226 = vunpack.c.l.b16 %v402
    %v1227 = vunpack.c.h.b16 %v402
    %v1228 = vunpack.c.l.b16 %v403
    %v1229 = vunpack.c.h.b16 %v403
    %v1230 = vunpack.c.l.b16 %v404
    %v1231 = vunpack.c.h.b16 %v404
    %v1232 = vunpack.c.l.b16 %v405
    %v1233 = vunpack.c.h.b16 %v405
    %v1234 = vunpack.c.l.b16 %v406
    %v1235 = vunpack.c.h.b16 %v406
    %v1236 = vunpack.c.l.b16 %v407
    %v1237 = vunpack.c.h.b16 %v407
    %v1238 = vunpack.c.l.b16 %v408
    %v1239 = vunpack.c.h.b16 %v408
    %v1240 = vunpack.c.l.b16 %v409
    %v1241 = vunpack.c.h.b16 %v409
    %v1242 = vunpack.c.l.b16 %v410
    %v1243 = vunpack.c.h.b16 %v410
    %v1244 = vunpack.c.l.b16 %v411
    %v1245 = vunpack.c.h.b16 %v411
    %v1246 = vunpack.c.l.b16 %v412
    %v1247 = vunpack.c.h.b16 %v412
    %v1248 = vunpack.c.l.b16 %v413
    %v1249 = vunpack.c.h.b16 %v413
    %v1250 = vunpack.c.l.b16 %v414
    %v1251 = vunpack.c.h.b16 %v414
    %v1252 = vunpack.c.l.b16 %v415
    %v1253 = vunpack.c.h.b16 %v415
    %v1254 = vunpack.c.l.b16 %v416
    %v1255 = vunpack.c.h.b16 %v416
    %v1256 = vunpack.c.l.b16 %v417
    %v1257 = vunpack.c.h.b16 %v417
    %v1258 = vunpack.c.l.b16 %v418
    %v1259 = vunpack.c.h.b16 %v418
    %v1260 = vunpack.c.l.b16 %v419
    %v1261 = vunpack.c.h.b16 %v419
    %v1262 = vunpack.c.l.b16 %v420
    %v1263 = vunpack.c.h.b16 %v420
    %v1264 = vunpack.c.l.b16 %v421
    %v1265 = vunpack.c.h.b16 %v421
    %v1266 = vunpack.c.l.b16 %v422
    %v1267 = vunpack.c.h.b16 %v422
    %v1268 = vunpack.c.l.b16 %v423
    %v1269 = vunpack.c.h.b16 %v423
    %v1270 = vunpack.c.l.b16 %v424
    %v1271 = vunpack.c.h.b16 %v424
    %v1272 = vunpack.c.l.b16 %v425
    %v1273 = vunpack.c.h.b16 %v425
    %v1274 = vunpack.c.l.b16 %v426
    %v1275 = vunpack.c.h.b16 %v426
    %v1276 = vunpack.c.l.b16 %v427
    %v1277 = vunpack.c.h.b16 %v427
    %v1278 = vunpack.c.l.b16 %v428
    %v1279 = vunpack.c.h.b16 %v428
    %v1280 = vunpack.c.l.b16 %v429
    %v1281 = vunpack.c.h.b16 %v429
    %v1282 = vunpack.c.l.b16 %v430
    %v1283 = vunpack.c.h.b16 %v430
    %v1284 = vunpack.c.l.b16 %v431
    %v1285 = vunpack.c.h.b16 %v431
    %v1286 = vunpack.c.l.b16 %v432
    %v1287 = vunpack.c.h.b16 %v432
    %v1288 = vunpack.c.l.b16 %v433
    %v1289 = vunpack.c.h.b16 %v433
    %v1290 = vunpack.c.l.b16 %v434
    %v1291 = vunpack.c.h.b16 %v434
    %v1292 = vunpack.c.l.b16 %v435
    %v1293 = vunpack.c.h.b16 %v435
    %v1294 = vunpack.c.l.b16 %v436
    %v1295 = vunpack.c.h.b16 %v436
    %v1296 = vunpack.c.l.b16 %v437
    %v1297 = vunpack.c.h.b16 %v437
    %v1298 = vunpack.c.l.b16 %v438
    %v1299 = vunpack.c.h.b16 %v438
    %v1300 = vunpack.c.l.b16 %v439
    %v1301 = vunpack.c.h.b16 %v439
    %v1302 = vunpack.c.l.b16 %v440
    %v1303 = vunpack.c.h.b16 %v440
    %v1304 = vunpack.c.l.b16 %v441
    %v1305 = vunpack.c.h.b16 %v441
    %v1306 = vunpack.c.l.b16 %v442
    %v1307 = vunpack.c.h.b16 %v442
    %v1308 = vunpack.c.l.b16 %v443
    %v1309 = vunpack.c.h.b16 %v443
    %v1310 = vunpack.c.l.b16 %v444
    %v1311 = vunpack.c.h.b16 %v444
    %v1312 = vunpack.c.l.b16 %v445
    %v1313 = vunpack.c.h.b16 %v445
    %v1314 = vunpack.c.l.b16 %v446
    %v1315 = vunpack.c.h.b16 %v446
    %v1316 = vunpack.c.l.b16 %v447
    %v1317 = vunpack.c.h.b16 %v447
    %v1318 = vunpack.c.l.b16 %v448
    %v1319 = vunpack.c.h.b16 %v448
    %v1320 = vunpack.c.l.b16 %v449
    %v1321 = vunpack.c.h.b16 %v449
    %v1322 = vunpack.c.l.b16 %v450
    %v1323 = vunpack.c.h.b16 %v450
    %v1324 = vunpack.c.l.b16 %v451
    %v1325 = vunpack.c.h.b16 %v451
    %v1326 = vunpack.c.l.b16 %v452
    %v1327 = vunpack.c.h.b16 %v452
    %v1328 = vunpack.c.l.b16 %v453
    %v1329 = vunpack.c.h.b16 %v453
    %v1330 = vunpack.c.l.b16 %v454
    %v1331 = vunpack.c.h.b16 %v454
    %v1332 = vunpack.c.l.b16 %v455
    %v1333 = vunpack.c.h.b16 %v455
    %v1334 = vunpack.c.l.b16 %v456
    %v1335 = vunpack.c.h.b16 %v456
    %v1336 = vunpack.c.l.b16 %v457
    %v1337 = vunpack.c.h.b16 %v457
    %v1338 = vunpack.c.l.b16 %v458
    %v1339 = vunpack.c.h.b16 %v458
    %v1340 = vunpack.c.l.b16 %v459
    %v1341 = vunpack.c.h.b16 %v459
    %v1342 = vunpack.c.l.b16 %v460
    %v1343 = vunpack.c.h.b16 %v460
    %v1344 = vunpack.c.l.b16 %v461
    %v1345 = vunpack.c.h.b16 %v461
    %v1346 = vunpack.c.l.b16 %v462
    %v1347 = vunpack.c.h.b16 %v462
    %v1348 = vunpack.c.l.b16 %v463
    %v1349 = vunpack.c.h.b16 %v463
    %v1350 = vunpack.c.l.b16 %v464
    %v1351 = vunpack.c.h.b16 %v464
    %v1352 = vunpack.c.l.b16 %v465
    %v1353 = vunpack.c.h.b16 %v465
    %v1354 = vunpack.c.l.b16 %v466
    %v1355 = vunpack.c.h.b16 %v466
    %v1356 = vunpack.c.l.b16 %v467
    %v1357 = vunpack.c.h.b16 %v467
    %v1358 = vunpack.c.l.b16 %v468
    %v1359 = vunpack.c.h.b16 %v468
    %v1360 = vunpack.c.l.b16 %v469
    %v1361 = vunpack.c.h.b16 %v469
    %v1362 = vunpack.c.l.b16 %v470
    %v1363 = vunpack.c.h.b16 %v470
    %v1364 = vunpack.c.l.b16 %v471
    %v1365 = vunpack.c.h.b16 %v471
    %v1366 = vunpack.c.l.b16 %v472
    %v1367 = vunpack.c.h.b16 %v472
    %v1368 = vunpack.c.l.b16 %v473
    %v1369 = vunpack.c.h.b16 %v473
    %v1370 = vpack.c.b16 %v800, %v794
    %v1371 = vpack.c.b16 %v801, %v795
    %v1372 = vpack.c.b16 %v802, %v796
    %v1373 = vpack.c.b16 %v803, %v797
    %v1374 = vpack.c.b16 %v804, %v798
    %v1375 = vpack.c.b16 %v805, %v799
    %v1376 = vpack.c.b16 %v812, %v806
    %v1377 = vpack.c.b16 %v813, %v807
    %v1378 = vpack.c.b16 %v814, %v808
    %v1379 = vpack.c.b16 %v815, %v809
    %v1380 = vpack.c.b16 %v816, %v810
    %v1381 = vpack.c.b16 %v817, %v811
    %v1382 = vpack.c.b16 %v824, %v818
    %v1383 = vpack.c.b16 %v825, %v819
    %v1384 = vpack.c.b16 %v826, %v820
    %v1385 = vpack.c.b16 %v827, %v821
    %v1386 = vpack.c.b16 %v828, %v822
    %v1387 = vpack.c.b16 %v829, %v823
    %v1388 = vpack.c.b16 %v836, %v830
    %v1389 = vpack.c.b16 %v837, %v831
    %v1390 = vpack.c.b16 %v838, %v832
    %v1391 = vpack.c.b16 %v839, %v833
    %v1392 = vpack.c.b16 %v840, %v834
    %v1393 = vpack.c.b16 %v841, %v835
    %v1394 = vpack.c.b16 %v848, %v842
    %v1395 = vpack.c.b16 %v849, %v843
    %v1396 = vpack.c.b16 %v850, %v844
    %v1397 = vpack.c.b16 %v851, %v845
    %v1398 = vpack.c.b16 %v852, %v846
    %v1399 = vpack.c.b16 %v853, %v847
    %v1400 = vpack.c.b16 %v860, %v854
    %v1401 = vpack.c.b16 %v861, %v855
    %v1402 = vpack.c.b16 %v862, %v856
    %v1403 = vpack.c.b16 %v863, %v857
    %v1404 = vpack.c.b16 %v864, %v858
    %v1405 = vpack.c.b16 %v865, %v859
    %v1406 = vpack.c.b16 %v872, %v866
    %v1407 = vpack.c.b16 %v873, %v867
    %v1408 = vpack.c.b16 %v874, %v868
    %v1409 = vpack.c.b16 %v875, %v869
    %v1410 = vpack.c.b16 %v876, %v870
    %v1411 = vpack.c.b16 %v877, %v871
    %v1412 = vpack.c.b16 %v884, %v878
    %v1413 = vpack.c.b16 %v885, %v879
    %v1414 = vpack.c.b16 %v886, %v880
    %v1415 = vpack.c.b16 %v887, %v881
    %v1416 = vpack.c.b16 %v888, %v882
    %v1417 = vpack.c.b16 %v889, %v883
    %v1418 = vpack.c.b16 %v896, %v890
    %v1419 = vpack.c.b16 %v897, %v891
    %v1420 = vpack.c.b16 %v898, %v892
    %v1421 = vpack.c.b16 %v899, %v893
    %v1422 = vpack.c.b16 %v900, %v894
    %v1423 = vpack.c.b16 %v901, %v895
    %v1424 = vpack.c.b16 %v908, %v902
    %v1425 = vpack.c.b16 %v909, %v903
    %v1426 = vpack.c.b16 %v910, %v904
    %v1427 = vpack.c.b16 %v911, %v905
    %v1428 = vpack.c.b16 %v912, %v906
    %v1429 = vpack.c.b16 %v913, %v907
    %v1430 = vpack.c.b16 %v920, %v914
    %v1431 = vpack.c.b16 %v921, %v915
    %v1432 = vpack.c.b16 %v922, %v916
    %v1433 = vpack.c.b16 %v923, %v917
    %v1434 = vpack.c.b16 %v924, %v918
    %v1435 = vpack.c.b16 %v925, %v919
    %v1436 = vpack.c.b16 %v932, %v926
    %v1437 = vpack.c.b16 %v933, %v927
    %v1438 = vpack.c.b16 %v934, %v928
    %v1439 = vpack.c.b16 %v935, %v929
    %v1440 = vpack.c.b16 %v936, %v930
    %v1441 = vpack.c.b16 %v937, %v931
    %v1442 = vpack.c.b16 %v944, %v938
    %v1443 = vpack.c.b16 %v945, %v939
    %v1444 = vpack.c.b16 %v946, %v940
    %v1445 = vpack.c.b16 %v947, %v941
    %v1446 = vpack.c.b16 %v948, %v942
    %v1447 = vpack.c.b16 %v949, %v943
    %v1448 = vpack.c.b16 %v956, %v950
    %v1449 = vpack.c.b16 %v957, %v951
    %v1450 = vpack.c.b16 %v958, %v952
    %v1451 = vpack.c.b16 %v959, %v953
    %v1452 = vpack.c.b16 %v960, %v954
    %v1453 = vpack.c.b16 %v961, %v955
    %v1454 = vpack.c.b16 %v968, %v962
    %v1455 = vpack.c.b16 %v969, %v963
    %v1456 = vpack.c.b16 %v970, %v964
    %v1457 = vpack.c.b16 %v971, %v965
    %v1458 = vpack.c.b16 %v972, %v966
    %v1459 = vpack.c.b16 %v973, %v967
    %v1460 = vpack.c.b16 %v980, %v974
    %v1461 = vpack.c.b16 %v981, %v975
    %v1462 = vpack.c.b16 %v982, %v976
    %v1463 = vpack.c.b16 %v983, %v977
    %v1464 = vpack.c.b16 %v984, %v978
    %v1465 = vpack.c.b16 %v985, %v979
    %v1466 = vpack.c.b16 %v992, %v986
    %v1467 = vpack.c.b16 %v993, %v987
    %v1468 = vpack.c.b16 %v994, %v988
    %v1469 = vpack.c.b16 %v995, %v989
    %v1470 = vpack.c.b16 %v996, %v990
    %v1471 = vpack.c.b16 %v997, %v991
    %v1472 = vpack.c.b16 %v1004, %v998
    %v1473 = vpack.c.b16 %v1005, %v999
    %v1474 = vpack.c.b16 %v1006, %v1000
    %v1475 = vpack.c.b16 %v1007, %v1001
    %v1476 = vpack.c.b16 %v1008, %v1002
    %v1477 = vpack.c.b16 %v1009, %v1003
    %v1478 = vpack.c.b16 %v1016, %v1010
    %v1479 = vpack.c.b16 %v1017, %v1011
    %v1480 = vpack.c.b16 %v1018, %v1012
    %v1481 = vpack.c.b16 %v1019, %v1013
    %v1482 = vpack.c.b16 %v1020, %v1014
    %v1483 = vpack.c.b16 %v1021, %v1015
    %v1484 = vpack.c.b16 %v1028, %v1022
    %v1485 = vpack.c.b16 %v1029, %v1023
    %v1486 = vpack.c.b16 %v1030, %v1024
    %v1487 = vpack.c.b16 %v1031, %v1025
    %v1488 = vpack.c.b16 %v1032, %v1026
    %v1489 = vpack.c.b16 %v1033, %v1027
    %v1490 = vpack.c.b16 %v1040, %v1034
    %v1491 = vpack.c.b16 %v1041, %v1035
    %v1492 = vpack.c.b16 %v1042, %v1036
    %v1493 = vpack.c.b16 %v1043, %v1037
    %v1494 = vpack.c.b16 %v1044, %v1038
    %v1495 = vpack.c.b16 %v1045, %v1039
    %v1496 = vpack.c.b16 %v1052, %v1046
    %v1497 = vpack.c.b16 %v1053, %v1047
    %v1498 = vpack.c.b16 %v1054, %v1048
    %v1499 = vpack.c.b16 %v1055, %v1049
    %v1500 = vpack.c.b16 %v1056, %v1050
    %v1501 = vpack.c.b16 %v1057, %v1051
    %v1502 = vpack.c.b16 %v1064, %v1058
    %v1503 = vpack.c.b16 %v1065, %v1059
    %v1504 = vpack.c.b16 %v1066, %v1060
    %v1505 = vpack.c.b16 %v1067, %v1061
    %v1506 = vpack.c.b16 %v1068, %v1062
    %v1507 = vpack.c.b16 %v1069, %v1063
    %v1508 = vpack.c.b16 %v1076, %v1070
    %v1509 = vpack.c.b16 %v1077, %v1071
    %v1510 = vpack.c.b16 %v1078, %v1072
    %v1511 = vpack.c.b16 %v1079, %v1073
    %v1512 = vpack.c.b16 %v1080, %v1074
    %v1513 = vpack.c.b16 %v1081, %v1075
    %v1514 = vpack.c.b16 %v1088, %v1082
    %v1515 = vpack.c.b16 %v1089, %v1083
    %v1516 = vpack.c.b16 %v1090, %v1084
    %v1517 = vpack.c.b16 %v1091, %v1085
    %v1518 = vpack.c.b16 %v1092, %v1086
    %v1519 = vpack.c.b16 %v1093, %v1087
    %v1520 = vpack.c.b16 %v1100, %v1094
    %v1521 = vpack.c.b16 %v1101, %v1095
    %v1522 = vpack.c.b16 %v1102, %v1096
    %v1523 = vpack.c.b16 %v1103, %v1097
    %v1524 = vpack.c.b16 %v1104, %v1098
    %v1525 = vpack.c.b16 %v1105, %v1099
    %v1526 = vpack.c.b16 %v1112, %v1106
    %v1527 = vpack.c.b16 %v1113, %v1107
    %v1528 = vpack.c.b16 %v1114, %v1108
    %v1529 = vpack.c.b16 %v1115, %v1109
    %v1530 = vpack.c.b16 %v1116, %v1110
    %v1531 = vpack.c.b16 %v1117, %v1111
    %v1532 = vpack.c.b16 %v1124, %v1118
    %v1533 = vpack.c.b16 %v1125, %v1119
    %v1534 = vpack.c.b16 %v1126, %v1120
    %v1535 = vpack.c.b16 %v1127, %v1121
    %v1536 = vpack.c.b16 %v1128, %v1122
    %v1537 = vpack.c.b16 %v1129, %v1123
    %v1538 = vpack.c.b16 %v1136, %v1130
    %v1539 = vpack.c.b16 %v1137, %v1131
    %v1540 = vpack.c.b16 %v1138, %v1132
    %v1541 = vpack.c.b16 %v1139, %v1133
    %v1542 = vpack.c.b16 %v1140, %v1134
    %v1543 = vpack.c.b16 %v1141, %v1135
    %v1544 = vpack.c.b16 %v1148, %v1142
    %v1545 = vpack.c.b16 %v1149, %v1143
    %v1546 = vpack.c.b16 %v1150, %v1144
    %v1547 = vpack.c.b16 %v1151, %v1145
    %v1548 = vpack.c.b16 %v1152, %v1146
    %v1549 = vpack.c.b16 %v1153, %v1147
    %v1550 = vpack.c.b16 %v1160, %v1154
    %v1551 = vpack.c.b16 %v1161, %v1155
    %v1552 = vpack.c.b16 %v1162, %v1156
    %v1553 = vpack.c.b16 %v1163, %v1157
    %v1554 = vpack.c.b16 %v1164, %v1158
    %v1555 = vpack.c.b16 %v1165, %v1159
    %v1556 = vpack.c.b16 %v1172, %v1166
    %v1557 = vpack.c.b16 %v1173, %v1167
    %v1558 = vpack.c.b16 %v1174, %v1168
    %v1559 = vpack.c.b16 %v1175, %v1169
    %v1560 = vpack.c.b16 %v1176, %v1170
    %v1561 = vpack.c.b16 %v1177, %v1171
    %v1562 = vpack.c.b16 %v1184, %v1178
    %v1563 = vpack.c.b16 %v1185, %v1179
    %v1564 = vpack.c.b16 %v1186, %v1180
    %v1565 = vpack.c.b16 %v1187, %v1181
    %v1566 = vpack.c.b16 %v1188, %v1182
    %v1567 = vpack.c.b16 %v1189, %v1183
    %v1568 = vpack.c.b16 %v1196, %v1190
    %v1569 = vpack.c.b16 %v1197, %v1191
    %v1570 = vpack.c.b16 %v1198, %v1192
    %v1571 = vpack.c.b16 %v1199, %v1193
    %v1572 = vpack.c.b16 %v1200, %v1194
    %v1573 = vpack.c.b16 %v1201, %v1195
    %v1574 = vpack.c.b16 %v1208, %v1202
    %v1575 = vpack.c.b16 %v1209, %v1203
    %v1576 = vpack.c.b16 %v1210, %v1204
    %v1577 = vpack.c.b16 %v1211, %v1205
    %v1578 = vpack.c.b16 %v1212, %v1206
    %v1579 = vpack.c.b16 %v1213, %v1207
    %v1580 = vpack.c.b16 %v1220, %v1214
    %v1581 = vpack.c.b16 %v1221, %v1215
    %v1582 = vpack.c.b16 %v1222, %v1216
    %v1583 = vpack.c.b16 %v1223, %v1217
    %v1584 = vpack.c.b16 %v1224, %v1218
    %v1585 = vpack.c.b16 %v1225, %v1219
    %v1586 = vpack.c.b16 %v1232, %v1226
    %v1587 = vpack.c.b16 %v1233, %v1227
    %v1588 = vpack.c.b16 %v1234, %v1228
    %v1589 = vpack.c.b16 %v1235, %v1229
    %v1590 = vpack.c.b16 %v1236, %v1230
    %v1591 = vpack.c.b16 %v1237, %v1231
    %v1592 = vpack.c.b16 %v1244, %v1238
    %v1593 = vpack.c.b16 %v1245, %v1239
    %v1594 = vpack.c.b16 %v1246, %v1240
    %v1595 = vpack.c.b16 %v1247, %v1241
    %v1596 = vpack.c.b16 %v1248, %v1242
    %v1597 = vpack.c.b16 %v1249, %v1243
    %v1598 = vpack.c.b16 %v1256, %v1250
    %v1599 = vpack.c.b16 %v1257, %v1251
    %v1600 = vpack.c.b16 %v1258, %v1252
    %v1601 = vpack.c.b16 %v1259, %v1253
    %v1602 = vpack.c.b16 %v1260, %v1254
    %v1603 = vpack.c.b16 %v1261, %v1255
    %v1604 = vpack.c.b16 %v1268, %v1262
    %v1605 = vpack.c.b16 %v1269, %v1263
    %v1606 = vpack.c.b16 %v1270, %v1264
    %v1607 = vpack.c.b16 %v1271, %v1265
    %v1608 = vpack.c.b16 %v1272, %v1266
    %v1609 = vpack.c.b16 %v1273, %v1267
    %v1610 = vpack.c.b16 %v1280, %v1274
    %v1611 = vpack.c.b16 %v1281, %v1275
    %v1612 = vpack.c.b16 %v1282, %v1276
    %v1613 = vpack.c.b16 %v1283, %v1277
    %v1614 = vpack.c.b16 %v1284, %v1278
    %v1615 = vpack.c.b16 %v1285, %v1279
    %v1616 = vpack.c.b16 %v1292, %v1286
    %v1617 = vpack.c.b16 %v1293, %v1287
    %v1618 = vpack.c.b16 %v1294, %v1288
    %v1619 = vpack.c.b16 %v1295, %v1289
    %v1620 = vpack.c.b16 %v1296, %v1290
    %v1621 = vpack.c.b16 %v1297, %v1291
    %v1622 = vpack.c.b16 %v1304, %v1298
    %v1623 = vpack.c.b16 %v1305, %v1299
    %v1624 = vpack.c.b16 %v1306, %v1300
    %v1625 = vpack.c.b16 %v1307, %v1301
    %v1626 = vpack.c.b16 %v1308, %v1302
    %v1627 = vpack.c.b16 %v1309, %v1303
    %v1628 = vpack.c.b16 %v1316, %v1310
    %v1629 = vpack.c.b16 %v1317, %v1311
    %v1630 = vpack.c.b16 %v1318, %v1312
    %v1631 = vpack.c.b16 %v1319, %v1313
    %v1632 = vpack.c.b16 %v1320, %v1314
    %v1633 = vpack.c.b16 %v1321, %v1315
    %v1634 = vpack.c.b16 %v1328, %v1322
    %v1635 = vpack.c.b16 %v1329, %v1323
    %v1636 = vpack.c.b16 %v1330, %v1324
    %v1637 = vpack.c.b16 %v1331, %v1325
    %v1638 = vpack.c.b16 %v1332, %v1326
    %v1639 = vpack.c.b16 %v1333, %v1327
    %v1640 = vpack.c.b16 %v1340, %v1334
    %v1641 = vpack.c.b16 %v1341, %v1335
    %v1642 = vpack.c.b16 %v1342, %v1336
    %v1643 = vpack.c.b16 %v1343, %v1337
    %v1644 = vpack.c.b16 %v1344, %v1338
    %v1645 = vpack.c.b16 %v1345, %v1339
    %v1646 = vpack.c.b16 %v1352, %v1346
    %v1647 = vpack.c.b16 %v1353, %v1347
    %v1648 = vpack.c.b16 %v1354, %v1348
    %v1649 = vpack.c.b16 %v1355, %v1349
    %v1650 = vpack.c.b16 %v1356, %v1350
    %v1651 = vpack.c.b16 %v1357, %v1351
    %v1652 = vpack.c.b16 %v1364, %v1358
    %v1653 = vpack.c.b16 %v1365, %v1359
    %v1654 = vpack.c.b16 %v1366, %v1360
    %v1655 = vpack.c.b16 %v1367, %v1361
    %v1656 = vpack.c.b16 %v1368, %v1362
    %v1657 = vpack.c.b16 %v1369, %v1363
    %1946 = vmatprep.subr.bf16.mxu0 %v1371
    %1947 = vmatpush1.bf16.msra.mxu0 %v1370
    %1948 = vmatprep.subr.bf16.mxu0 %v1377
    %1949 = vmatpush1.bf16.msra.mxu0 %v1376
    %1950 = vmatprep.subr.bf16.mxu0 %v1383
    %1951 = vmatpush1.bf16.msra.mxu0 %v1382
    %1952 = vmatprep.subr.bf16.mxu0 %v1389
    %1953 = vmatpush1.bf16.msra.mxu0 %v1388
    %1954 = vmatprep.subr.bf16.mxu0 %v1395
    %1955 = vmatpush1.bf16.msra.mxu0 %v1394
    %1956 = vmatprep.subr.bf16.mxu0 %v1401
    %1957 = vmatpush1.bf16.msra.mxu0 %v1400
    %1958 = vmatprep.subr.bf16.mxu0 %v1407
    %1959 = vmatpush1.bf16.msra.mxu0 %v1406
    %1960 = vmatprep.subr.bf16.mxu0 %v1413
    %1961 = vmatpush1.bf16.msra.mxu0 %v1412
    %1962 = vmatprep.subr.bf16.mxu0 %v1419
    %1963 = vmatpush1.bf16.msra.mxu0 %v1418
    %1964 = vmatprep.subr.bf16.mxu0 %v1425
    %1965 = vmatpush1.bf16.msra.mxu0 %v1424
    %1966 = vmatprep.subr.bf16.mxu0 %v1431
    %1967 = vmatpush1.bf16.msra.mxu0 %v1430
    %1968 = vmatprep.subr.bf16.mxu0 %v1437
    %1969 = vmatpush1.bf16.msra.mxu0 %v1436
    %1970 = vmatprep.subr.bf16.mxu0 %v1443
    %1971 = vmatpush1.bf16.msra.mxu0 %v1442
    %1972 = vmatprep.subr.bf16.mxu0 %v1449
    %1973 = vmatpush1.bf16.msra.mxu0 %v1448
    %1974 = vmatprep.subr.bf16.mxu0 %v1455
    %1975 = vmatpush1.bf16.msra.mxu0 %v1454
    %1976 = vmatprep.subr.bf16.mxu0 %v1461
    %1977 = vmatpush1.bf16.msra.mxu0 %v1460
    %1978 = vmatprep.mubr.bf16.mxu0 %v181
    %1979 = vmatmul.mubr.bf16.gmra.mrb[0].mxu0 %v180
    %v1980 = vpop.f32.mrb[0].mxu0
    %v1981 = vadd.f32 %v479, %v1980
    %v1982 = vpop.f32.mrb[0].mxu0
    %v1983 = vadd.f32 %v483, %v1982
    %v1984 = vpop.f32.mrb[0].mxu0
    %v1985 = vpop.f32.mrb[0].mxu0
    %1986 = vdwg.mxu0
    %1987 = vmatprep.subr.bf16.mxu0 %v1467
    %1988 = vmatpush1.bf16.msra.mxu0 %v1466
    %1989 = vmatprep.subr.bf16.mxu0 %v1473
    %1990 = vmatpush1.bf16.msra.mxu0 %v1472
    %1991 = vmatprep.subr.bf16.mxu0 %v1479
    %1992 = vmatpush1.bf16.msra.mxu0 %v1478
    %1993 = vmatprep.subr.bf16.mxu0 %v1485
    %1994 = vmatpush1.bf16.msra.mxu0 %v1484
    %1995 = vmatprep.subr.bf16.mxu0 %v1491
    %1996 = vmatpush1.bf16.msra.mxu0 %v1490
    %1997 = vmatprep.subr.bf16.mxu0 %v1497
    %1998 = vmatpush1.bf16.msra.mxu0 %v1496
    %1999 = vmatprep.subr.bf16.mxu0 %v1503
    %2000 = vmatpush1.bf16.msra.mxu0 %v1502
    %2001 = vmatprep.subr.bf16.mxu0 %v1509
    %2002 = vmatpush1.bf16.msra.mxu0 %v1508
    %2003 = vmatprep.subr.bf16.mxu0 %v1515
    %2004 = vmatpush1.bf16.msra.mxu0 %v1514
    %2005 = vmatprep.subr.bf16.mxu0 %v1521
    %2006 = vmatpush1.bf16.msra.mxu0 %v1520
    %2007 = vmatprep.subr.bf16.mxu0 %v1527
    %2008 = vmatpush1.bf16.msra.mxu0 %v1526
    %2009 = vmatprep.subr.bf16.mxu0 %v1533
    %2010 = vmatpush1.bf16.msra.mxu0 %v1532
    %2011 = vmatprep.subr.bf16.mxu0 %v1539
    %2012 = vmatpush1.bf16.msra.mxu0 %v1538
    %2013 = vmatprep.subr.bf16.mxu0 %v1545
    %2014 = vmatpush1.bf16.msra.mxu0 %v1544
    %2015 = vmatprep.subr.bf16.mxu0 %v1551
    %2016 = vmatpush1.bf16.msra.mxu0 %v1550
    %2017 = vmatprep.subr.bf16.mxu0 %v1557
    %2018 = vmatpush1.bf16.msra.mxu0 %v1556
    %2019 = vmatprep.mubr.bf16.mxu0 %v183
    %2020 = vmatmul.mubr.bf16.gmra.mrb[0].mxu0 %v182
    %v2021 = vpop.f32.mrb[0].mxu0
    %v2022 = vadd.f32 %v1981, %v2021
    %v2023 = vpop.f32.mrb[0].mxu0
    %v2024 = vadd.f32 %v1983, %v2023
    %v2025 = vpop.f32.mrb[0].mxu0
    %v2026 = vpop.f32.mrb[0].mxu0
    %2027 = vdwg.mxu0
    %2028 = vmatprep.subr.bf16.mxu0 %v1563
    %2029 = vmatpush1.bf16.msra.mxu0 %v1562
    %2030 = vmatprep.subr.bf16.mxu0 %v1569
    %2031 = vmatpush1.bf16.msra.mxu0 %v1568
    %2032 = vmatprep.subr.bf16.mxu0 %v1575
    %2033 = vmatpush1.bf16.msra.mxu0 %v1574
    %2034 = vmatprep.subr.bf16.mxu0 %v1581
    %2035 = vmatpush1.bf16.msra.mxu0 %v1580
    %2036 = vmatprep.subr.bf16.mxu0 %v1587
    %2037 = vmatpush1.bf16.msra.mxu0 %v1586
    %2038 = vmatprep.subr.bf16.mxu0 %v1593
    %2039 = vmatpush1.bf16.msra.mxu0 %v1592
    %2040 = vmatprep.subr.bf16.mxu0 %v1599
    %2041 = vmatpush1.bf16.msra.mxu0 %v1598
    %2042 = vmatprep.subr.bf16.mxu0 %v1605
    %2043 = vmatpush1.bf16.msra.mxu0 %v1604
    %2044 = vmatprep.subr.bf16.mxu0 %v1611
    %2045 = vmatpush1.bf16.msra.mxu0 %v1610
    %2046 = vmatprep.subr.bf16.mxu0 %v1617
    %2047 = vmatpush1.bf16.msra.mxu0 %v1616
    %2048 = vmatprep.subr.bf16.mxu0 %v1623
    %2049 = vmatpush1.bf16.msra.mxu0 %v1622
    %2050 = vmatprep.subr.bf16.mxu0 %v1629
    %2051 = vmatpush1.bf16.msra.mxu0 %v1628
    %2052 = vmatprep.subr.bf16.mxu0 %v1635
    %2053 = vmatpush1.bf16.msra.mxu0 %v1634
    %2054 = vmatprep.subr.bf16.mxu0 %v1641
    %2055 = vmatpush1.bf16.msra.mxu0 %v1640
    %2056 = vmatprep.subr.bf16.mxu0 %v1647
    %2057 = vmatpush1.bf16.msra.mxu0 %v1646
    %2058 = vmatprep.subr.bf16.mxu0 %v1653
    %2059 = vmatpush1.bf16.msra.mxu0 %v1652
    %2060 = vmatprep.mubr.bf16.mxu0 %v185
    %2061 = vmatmul.mubr.bf16.gmra.mrb[0].mxu0 %v184
    %v2062 = vpop.f32.mrb[0].mxu0
    %v2063 = vadd.f32 %v2022, %v2062
    %v2064 = vpop.f32.mrb[0].mxu0
    %v2065 = vadd.f32 %v2024, %v2064
    %v2066 = vpop.f32.mrb[0].mxu0
    %v2067 = vpop.f32.mrb[0].mxu0
    %2068 = vdwg.mxu0
    %2069 = vmatprep.subr.bf16.mxu0 %v1373
    %2070 = vmatpush1.bf16.msra.mxu0 %v1372
    %2071 = vmatprep.subr.bf16.mxu0 %v1379
    %2072 = vmatpush1.bf16.msra.mxu0 %v1378
    %2073 = vmatprep.subr.bf16.mxu0 %v1385
    %2074 = vmatpush1.bf16.msra.mxu0 %v1384
    %2075 = vmatprep.subr.bf16.mxu0 %v1391
    %2076 = vmatpush1.bf16.msra.mxu0 %v1390
    %2077 = vmatprep.subr.bf16.mxu0 %v1397
    %2078 = vmatpush1.bf16.msra.mxu0 %v1396
    %2079 = vmatprep.subr.bf16.mxu0 %v1403
    %2080 = vmatpush1.bf16.msra.mxu0 %v1402
    %2081 = vmatprep.subr.bf16.mxu0 %v1409
    %2082 = vmatpush1.bf16.msra.mxu0 %v1408
    %2083 = vmatprep.subr.bf16.mxu0 %v1415
    %2084 = vmatpush1.bf16.msra.mxu0 %v1414
    %2085 = vmatprep.subr.bf16.mxu0 %v1421
    %2086 = vmatpush1.bf16.msra.mxu0 %v1420
    %2087 = vmatprep.subr.bf16.mxu0 %v1427
    %2088 = vmatpush1.bf16.msra.mxu0 %v1426
    %2089 = vmatprep.subr.bf16.mxu0 %v1433
    %2090 = vmatpush1.bf16.msra.mxu0 %v1432
    %2091 = vmatprep.subr.bf16.mxu0 %v1439
    %2092 = vmatpush1.bf16.msra.mxu0 %v1438
    %2093 = vmatprep.subr.bf16.mxu0 %v1445
    %2094 = vmatpush1.bf16.msra.mxu0 %v1444
    %2095 = vmatprep.subr.bf16.mxu0 %v1451
    %2096 = vmatpush1.bf16.msra.mxu0 %v1450
    %2097 = vmatprep.subr.bf16.mxu0 %v1457
    %2098 = vmatpush1.bf16.msra.mxu0 %v1456
    %2099 = vmatprep.subr.bf16.mxu0 %v1463
    %2100 = vmatpush1.bf16.msra.mxu0 %v1462
    %2101 = vmatprep.mubr.bf16.mxu0 %v181
    %2102 = vmatmul.mubr.bf16.gmra.mrb[0].mxu0 %v180
    %v2103 = vpop.f32.mrb[0].mxu0
    %v2104 = vadd.f32 %v487, %v2103
    %v2105 = vpop.f32.mrb[0].mxu0
    %v2106 = vadd.f32 %v491, %v2105
    %v2107 = vpop.f32.mrb[0].mxu0
    %v2108 = vpop.f32.mrb[0].mxu0
    %2109 = vdwg.mxu0
    %2110 = vmatprep.subr.bf16.mxu0 %v1469
    %2111 = vmatpush1.bf16.msra.mxu0 %v1468
    %2112 = vmatprep.subr.bf16.mxu0 %v1475
    %2113 = vmatpush1.bf16.msra.mxu0 %v1474
    %2114 = vmatprep.subr.bf16.mxu0 %v1481
    %2115 = vmatpush1.bf16.msra.mxu0 %v1480
    %2116 = vmatprep.subr.bf16.mxu0 %v1487
    %2117 = vmatpush1.bf16.msra.mxu0 %v1486
    %2118 = vmatprep.subr.bf16.mxu0 %v1493
    %2119 = vmatpush1.bf16.msra.mxu0 %v1492
    %2120 = vmatprep.subr.bf16.mxu0 %v1499
    %2121 = vmatpush1.bf16.msra.mxu0 %v1498
    %2122 = vmatprep.subr.bf16.mxu0 %v1505
    %2123 = vmatpush1.bf16.msra.mxu0 %v1504
    %2124 = vmatprep.subr.bf16.mxu0 %v1511
    %2125 = vmatpush1.bf16.msra.mxu0 %v1510
    %2126 = vmatprep.subr.bf16.mxu0 %v1517
    %2127 = vmatpush1.bf16.msra.mxu0 %v1516
    %2128 = vmatprep.subr.bf16.mxu0 %v1523
    %2129 = vmatpush1.bf16.msra.mxu0 %v1522
    %2130 = vmatprep.subr.bf16.mxu0 %v1529
    %2131 = vmatpush1.bf16.msra.mxu0 %v1528
    %2132 = vmatprep.subr.bf16.mxu0 %v1535
    %2133 = vmatpush1.bf16.msra.mxu0 %v1534
    %2134 = vmatprep.subr.bf16.mxu0 %v1541
    %2135 = vmatpush1.bf16.msra.mxu0 %v1540
    %2136 = vmatprep.subr.bf16.mxu0 %v1547
    %2137 = vmatpush1.bf16.msra.mxu0 %v1546
    %2138 = vmatprep.subr.bf16.mxu0 %v1553
    %2139 = vmatpush1.bf16.msra.mxu0 %v1552
    %2140 = vmatprep.subr.bf16.mxu0 %v1559
    %2141 = vmatpush1.bf16.msra.mxu0 %v1558
    %2142 = vmatprep.mubr.bf16.mxu0 %v183
    %2143 = vmatmul.mubr.bf16.gmra.mrb[0].mxu0 %v182
    %v2144 = vpop.f32.mrb[0].mxu0
    %v2145 = vadd.f32 %v2104, %v2144
    %v2146 = vpop.f32.mrb[0].mxu0
    %v2147 = vadd.f32 %v2106, %v2146
    %v2148 = vpop.f32.mrb[0].mxu0
    %v2149 = vpop.f32.mrb[0].mxu0
    %2150 = vdwg.mxu0
    %2151 = vmatprep.subr.bf16.mxu0 %v1565
    %2152 = vmatpush1.bf16.msra.mxu0 %v1564
    %2153 = vmatprep.subr.bf16.mxu0 %v1571
    %2154 = vmatpush1.bf16.msra.mxu0 %v1570
    %2155 = vmatprep.subr.bf16.mxu0 %v1577
    %2156 = vmatpush1.bf16.msra.mxu0 %v1576
    %2157 = vmatprep.subr.bf16.mxu0 %v1583
    %2158 = vmatpush1.bf16.msra.mxu0 %v1582
    %2159 = vmatprep.subr.bf16.mxu0 %v1589
    %2160 = vmatpush1.bf16.msra.mxu0 %v1588
    %2161 = vmatprep.subr.bf16.mxu0 %v1595
    %2162 = vmatpush1.bf16.msra.mxu0 %v1594
    %2163 = vmatprep.subr.bf16.mxu0 %v1601
    %2164 = vmatpush1.bf16.msra.mxu0 %v1600
    %2165 = vmatprep.subr.bf16.mxu0 %v1607
    %2166 = vmatpush1.bf16.msra.mxu0 %v1606
    %2167 = vmatprep.subr.bf16.mxu0 %v1613
    %2168 = vmatpush1.bf16.msra.mxu0 %v1612
    %2169 = vmatprep.subr.bf16.mxu0 %v1619
    %2170 = vmatpush1.bf16.msra.mxu0 %v1618
    %2171 = vmatprep.subr.bf16.mxu0 %v1625
    %2172 = vmatpush1.bf16.msra.mxu0 %v1624
    %2173 = vmatprep.subr.bf16.mxu0 %v1631
    %2174 = vmatpush1.bf16.msra.mxu0 %v1630
    %2175 = vmatprep.subr.bf16.mxu0 %v1637
    %2176 = vmatpush1.bf16.msra.mxu0 %v1636
    %2177 = vmatprep.subr.bf16.mxu0 %v1643
    %2178 = vmatpush1.bf16.msra.mxu0 %v1642
    %2179 = vmatprep.subr.bf16.mxu0 %v1649
    %2180 = vmatpush1.bf16.msra.mxu0 %v1648
    %2181 = vmatprep.subr.bf16.mxu0 %v1655
    %2182 = vmatpush1.bf16.msra.mxu0 %v1654
    %2183 = vmatprep.mubr.bf16.mxu0 %v185
    %2184 = vmatmul.mubr.bf16.gmra.mrb[0].mxu0 %v184
    %v2185 = vpop.f32.mrb[0].mxu0
    %v2186 = vadd.f32 %v2145, %v2185
    %v2187 = vpop.f32.mrb[0].mxu0
    %v2188 = vadd.f32 %v2147, %v2187
    %v2189 = vpop.f32.mrb[0].mxu0
    %v2190 = vpop.f32.mrb[0].mxu0
    %2191 = vdwg.mxu0
    %2192 = vmatprep.subr.bf16.mxu0 %v1375
    %2193 = vmatpush1.bf16.msra.mxu0 %v1374
    %2194 = vmatprep.subr.bf16.mxu0 %v1381
    %2195 = vmatpush1.bf16.msra.mxu0 %v1380
    %2196 = vmatprep.subr.bf16.mxu0 %v1387
    %2197 = vmatpush1.bf16.msra.mxu0 %v1386
    %2198 = vmatprep.subr.bf16.mxu0 %v1393
    %2199 = vmatpush1.bf16.msra.mxu0 %v1392
    %2200 = vmatprep.subr.bf16.mxu0 %v1399
    %2201 = vmatpush1.bf16.msra.mxu0 %v1398
    %2202 = vmatprep.subr.bf16.mxu0 %v1405
    %2203 = vmatpush1.bf16.msra.mxu0 %v1404
    %2204 = vmatprep.subr.bf16.mxu0 %v1411
    %2205 = vmatpush1.bf16.msra.mxu0 %v1410
    %2206 = vmatprep.subr.bf16.mxu0 %v1417
    %2207 = vmatpush1.bf16.msra.mxu0 %v1416
    %2208 = vmatprep.subr.bf16.mxu0 %v1423
    %2209 = vmatpush1.bf16.msra.mxu0 %v1422
    %2210 = vmatprep.subr.bf16.mxu0 %v1429
    %2211 = vmatpush1.bf16.msra.mxu0 %v1428
    %2212 = vmatprep.subr.bf16.mxu0 %v1435
    %2213 = vmatpush1.bf16.msra.mxu0 %v1434
    %2214 = vmatprep.subr.bf16.mxu0 %v1441
    %2215 = vmatpush1.bf16.msra.mxu0 %v1440
    %2216 = vmatprep.subr.bf16.mxu0 %v1447
    %2217 = vmatpush1.bf16.msra.mxu0 %v1446
    %2218 = vmatprep.subr.bf16.mxu0 %v1453
    %2219 = vmatpush1.bf16.msra.mxu0 %v1452
    %2220 = vmatprep.subr.bf16.mxu0 %v1459
    %2221 = vmatpush1.bf16.msra.mxu0 %v1458
    %2222 = vmatprep.subr.bf16.mxu0 %v1465
    %2223 = vmatpush1.bf16.msra.mxu0 %v1464
    %2224 = vmatprep.mubr.bf16.mxu0 %v181
    %2225 = vmatmul.mubr.bf16.gmra.mrb[0].mxu0 %v180
    %v2226 = vpop.f32.mrb[0].mxu0
    %v2227 = vadd.f32 %v495, %v2226
    %v2228 = vpop.f32.mrb[0].mxu0
    %v2229 = vadd.f32 %v499, %v2228
    %v2230 = vpop.f32.mrb[0].mxu0
    %v2231 = vpop.f32.mrb[0].mxu0
    %2232 = vdwg.mxu0
    %2233 = vmatprep.subr.bf16.mxu0 %v1471
    %2234 = vmatpush1.bf16.msra.mxu0 %v1470
    %2235 = vmatprep.subr.bf16.mxu0 %v1477
    %2236 = vmatpush1.bf16.msra.mxu0 %v1476
    %2237 = vmatprep.subr.bf16.mxu0 %v1483
    %2238 = vmatpush1.bf16.msra.mxu0 %v1482
    %2239 = vmatprep.subr.bf16.mxu0 %v1489
    %2240 = vmatpush1.bf16.msra.mxu0 %v1488
    %2241 = vmatprep.subr.bf16.mxu0 %v1495
    %2242 = vmatpush1.bf16.msra.mxu0 %v1494
    %2243 = vmatprep.subr.bf16.mxu0 %v1501
    %2244 = vmatpush1.bf16.msra.mxu0 %v1500
    %2245 = vmatprep.subr.bf16.mxu0 %v1507
    %2246 = vmatpush1.bf16.msra.mxu0 %v1506
    %2247 = vmatprep.subr.bf16.mxu0 %v1513
    %2248 = vmatpush1.bf16.msra.mxu0 %v1512
    %2249 = vmatprep.subr.bf16.mxu0 %v1519
    %2250 = vmatpush1.bf16.msra.mxu0 %v1518
    %2251 = vmatprep.subr.bf16.mxu0 %v1525
    %2252 = vmatpush1.bf16.msra.mxu0 %v1524
    %2253 = vmatprep.subr.bf16.mxu0 %v1531
    %2254 = vmatpush1.bf16.msra.mxu0 %v1530
    %2255 = vmatprep.subr.bf16.mxu0 %v1537
    %2256 = vmatpush1.bf16.msra.mxu0 %v1536
    %2257 = vmatprep.subr.bf16.mxu0 %v1543
    %2258 = vmatpush1.bf16.msra.mxu0 %v1542
    %2259 = vmatprep.subr.bf16.mxu0 %v1549
    %2260 = vmatpush1.bf16.msra.mxu0 %v1548
    %2261 = vmatprep.subr.bf16.mxu0 %v1555
    %2262 = vmatpush1.bf16.msra.mxu0 %v1554
    %2263 = vmatprep.subr.bf16.mxu0 %v1561
    %2264 = vmatpush1.bf16.msra.mxu0 %v1560
    %2265 = vmatprep.mubr.bf16.mxu0 %v183
    %2266 = vmatmul.mubr.bf16.gmra.mrb[0].mxu0 %v182
    %v2267 = vpop.f32.mrb[0].mxu0
    %v2268 = vadd.f32 %v2227, %v2267
    %v2269 = vpop.f32.mrb[0].mxu0
    %v2270 = vadd.f32 %v2229, %v2269
    %v2271 = vpop.f32.mrb[0].mxu0
    %v2272 = vpop.f32.mrb[0].mxu0
    %2273 = vdwg.mxu0
    %2274 = vmatprep.subr.bf16.mxu0 %v1567
    %2275 = vmatpush1.bf16.msra.mxu0 %v1566
    %2276 = vmatprep.subr.bf16.mxu0 %v1573
    %2277 = vmatpush1.bf16.msra.mxu0 %v1572
    %2278 = vmatprep.subr.bf16.mxu0 %v1579
    %2279 = vmatpush1.bf16.msra.mxu0 %v1578
    %2280 = vmatprep.subr.bf16.mxu0 %v1585
    %2281 = vmatpush1.bf16.msra.mxu0 %v1584
    %2282 = vmatprep.subr.bf16.mxu0 %v1591
    %2283 = vmatpush1.bf16.msra.mxu0 %v1590
    %2284 = vmatprep.subr.bf16.mxu0 %v1597
    %2285 = vmatpush1.bf16.msra.mxu0 %v1596
    %2286 = vmatprep.subr.bf16.mxu0 %v1603
    %2287 = vmatpush1.bf16.msra.mxu0 %v1602
    %2288 = vmatprep.subr.bf16.mxu0 %v1609
    %2289 = vmatpush1.bf16.msra.mxu0 %v1608
    %2290 = vmatprep.subr.bf16.mxu0 %v1615
    %2291 = vmatpush1.bf16.msra.mxu0 %v1614
    %2292 = vmatprep.subr.bf16.mxu0 %v1621
    %2293 = vmatpush1.bf16.msra.mxu0 %v1620
    %2294 = vmatprep.subr.bf16.mxu0 %v1627
    %2295 = vmatpush1.bf16.msra.mxu0 %v1626
    %2296 = vmatprep.subr.bf16.mxu0 %v1633
    %2297 = vmatpush1.bf16.msra.mxu0 %v1632
    %2298 = vmatprep.subr.bf16.mxu0 %v1639
    %2299 = vmatpush1.bf16.msra.mxu0 %v1638
    %2300 = vmatprep.subr.bf16.mxu0 %v1645
    %2301 = vmatpush1.bf16.msra.mxu0 %v1644
    %2302 = vmatprep.subr.bf16.mxu0 %v1651
    %2303 = vmatpush1.bf16.msra.mxu0 %v1650
    %2304 = vmatprep.subr.bf16.mxu0 %v1657
    %2305 = vmatpush1.bf16.msra.mxu0 %v1656
    %2306 = vmatprep.mubr.bf16.mxu0 %v185
    %2307 = vmatmul.mubr.bf16.gmra.mrb[0].mxu0 %v184
    %v2308 = vpop.f32.mrb[0].mxu0
    %v2309 = vadd.f32 %v2268, %v2308
    %v2310 = vpop.f32.mrb[0].mxu0
    %v2311 = vadd.f32 %v2270, %v2310
    %v2312 = vpop.f32.mrb[0].mxu0
    %v2313 = vpop.f32.mrb[0].mxu0
    %2314 = vdwg.mxu0
    %v2315 = vtanh.pop %v2063
    %v2316 = vtanh.pop %v2065
    %v2317 = vtanh.pop %v2186
    %v2318 = vtanh.pop %v2188
    %v2319 = vtanh.pop %v2309
    %v2320 = vtanh.pop %v2311
    %v2321 = vpack.c.bf16 %v2315, %v2315
    %v2322 = vpack.c.bf16 %v2316, %v2316
    %v2323 = vpack.c.bf16 %v2317, %v2317
    %v2324 = vpack.c.bf16 %v2318, %v2318
    %v2325 = vpack.c.bf16 %v2319, %v2319
    %v2326 = vpack.c.bf16 %v2320, %v2320
    %v2327 = vld [vmem:[#allocation8] sm:$0xff]
    %v2328 = vld [vmem:[#allocation8 + $0x8] sm:$0xff]
    %v2329 = vld [vmem:[#allocation8 + $0x10] sm:$0xff]
    %v2330 = vld [vmem:[#allocation8 + $0x18] sm:$0xff]
    %v2331 = vld [vmem:[#allocation8 + $0x20] sm:$0xff]
    %v2332 = vld [vmem:[#allocation8 + $0x28] sm:$0xff]
    %v2333 = vld [vmem:[#allocation8 + $0x30] sm:$0xff]
    %v2334 = vld [vmem:[#allocation8 + $0x38] sm:$0xff]
    %v2335 = vld [vmem:[#allocation8 + $0x40] sm:$0xff]
    %v2336 = vld [vmem:[#allocation8 + $0x48] sm:$0xff]
    %v2337 = vld [vmem:[#allocation8 + $0x50] sm:$0xff]
    %v2338 = vld [vmem:[#allocation8 + $0x58] sm:$0xff]
    %v2339 = vld [vmem:[#allocation8 + $0x60] sm:$0xff]
    %v2340 = vld [vmem:[#allocation8 + $0x68] sm:$0xff]
    %v2341 = vld [vmem:[#allocation8 + $0x70] sm:$0xff]
    %v2342 = vld [vmem:[#allocation8 + $0x78] sm:$0xff]
    %v2343 = vld [vmem:[#allocation8 + $0x80] sm:$0xff]
    %v2344 = vld [vmem:[#allocation8 + $0x88] sm:$0xff]
    %v2345 = vld [vmem:[#allocation8 + $0x90] sm:$0xff]
    %v2346 = vld [vmem:[#allocation8 + $0x98] sm:$0xff]
    %v2347 = vld [vmem:[#allocation8 + $0xa0] sm:$0xff]
    %v2348 = vld [vmem:[#allocation8 + $0xa8] sm:$0xff]
    %v2349 = vld [vmem:[#allocation8 + $0xb0] sm:$0xff]
    %v2350 = vld [vmem:[#allocation8 + $0xb8] sm:$0xff]
    %v2351 = vld [vmem:[#allocation8 + $0xc0] sm:$0xff]
    %v2352 = vld [vmem:[#allocation8 + $0xc8] sm:$0xff]
    %v2353 = vld [vmem:[#allocation8 + $0xd0] sm:$0xff]
    %v2354 = vld [vmem:[#allocation8 + $0xd8] sm:$0xff]
    %v2355 = vld [vmem:[#allocation8 + $0xe0] sm:$0xff]
    %v2356 = vld [vmem:[#allocation8 + $0xe8] sm:$0xff]
    %v2357 = vld [vmem:[#allocation8 + $0xf0] sm:$0xff]
    %v2358 = vld [vmem:[#allocation8 + $0xf8] sm:$0xff]
    %v2359 = vld [vmem:[#allocation8 + $0x100] sm:$0xff]
    %v2360 = vld [vmem:[#allocation8 + $0x108] sm:$0xff]
    %v2361 = vld [vmem:[#allocation8 + $0x110] sm:$0xff]
    %v2362 = vld [vmem:[#allocation8 + $0x118] sm:$0xff]
    %v2363 = vld [vmem:[#allocation8 + $0x120] sm:$0xff]
    %v2364 = vld [vmem:[#allocation8 + $0x128] sm:$0xff]
    %v2365 = vld [vmem:[#allocation8 + $0x130] sm:$0xff]
    %v2366 = vld [vmem:[#allocation8 + $0x138] sm:$0xff]
    %v2367 = vld [vmem:[#allocation8 + $0x140] sm:$0xff]
    %v2368 = vld [vmem:[#allocation8 + $0x148] sm:$0xff]
    %v2369 = vld [vmem:[#allocation8 + $0x150] sm:$0xff]
    %v2370 = vld [vmem:[#allocation8 + $0x158] sm:$0xff]
    %v2371 = vld [vmem:[#allocation8 + $0x160] sm:$0xff]
    %v2372 = vld [vmem:[#allocation8 + $0x168] sm:$0xff]
    %v2373 = vld [vmem:[#allocation8 + $0x170] sm:$0xff]
    %v2374 = vld [vmem:[#allocation8 + $0x178] sm:$0xff]
    %v2375 = vld [vmem:[#allocation8 + $0x180] sm:$0xff]
    %v2376 = vld [vmem:[#allocation8 + $0x188] sm:$0xff]
    %v2377 = vld [vmem:[#allocation8 + $0x190] sm:$0xff]
    %v2378 = vld [vmem:[#allocation8 + $0x198] sm:$0xff]
    %v2379 = vld [vmem:[#allocation8 + $0x1a0] sm:$0xff]
    %v2380 = vld [vmem:[#allocation8 + $0x1a8] sm:$0xff]
    %v2381 = vld [vmem:[#allocation8 + $0x1b0] sm:$0xff]
    %v2382 = vld [vmem:[#allocation8 + $0x1b8] sm:$0xff]
    %v2383 = vld [vmem:[#allocation8 + $0x1c0] sm:$0xff]
    %v2384 = vld [vmem:[#allocation8 + $0x1c8] sm:$0xff]
    %v2385 = vld [vmem:[#allocation8 + $0x1d0] sm:$0xff]
    %v2386 = vld [vmem:[#allocation8 + $0x1d8] sm:$0xff]
    %v2387 = vld [vmem:[#allocation8 + $0x1e0] sm:$0xff]
    %v2388 = vld [vmem:[#allocation8 + $0x1e8] sm:$0xff]
    %v2389 = vld [vmem:[#allocation8 + $0x1f0] sm:$0xff]
    %v2390 = vld [vmem:[#allocation8 + $0x1f8] sm:$0xff]
    %v2391 = vld [vmem:[#allocation8 + $0x200] sm:$0xff]
    %v2392 = vld [vmem:[#allocation8 + $0x208] sm:$0xff]
    %v2393 = vld [vmem:[#allocation8 + $0x210] sm:$0xff]
    %v2394 = vld [vmem:[#allocation8 + $0x218] sm:$0xff]
    %v2395 = vld [vmem:[#allocation8 + $0x220] sm:$0xff]
    %v2396 = vld [vmem:[#allocation8 + $0x228] sm:$0xff]
    %v2397 = vld [vmem:[#allocation8 + $0x230] sm:$0xff]
    %v2398 = vld [vmem:[#allocation8 + $0x238] sm:$0xff]
    %v2399 = vld [vmem:[#allocation8 + $0x240] sm:$0xff]
    %v2400 = vld [vmem:[#allocation8 + $0x248] sm:$0xff]
    %v2401 = vld [vmem:[#allocation8 + $0x250] sm:$0xff]
    %v2402 = vld [vmem:[#allocation8 + $0x258] sm:$0xff]
    %v2403 = vld [vmem:[#allocation8 + $0x260] sm:$0xff]
    %v2404 = vld [vmem:[#allocation8 + $0x268] sm:$0xff]
    %v2405 = vld [vmem:[#allocation8 + $0x270] sm:$0xff]
    %v2406 = vld [vmem:[#allocation8 + $0x278] sm:$0xff]
    %v2407 = vld [vmem:[#allocation8 + $0x280] sm:$0xff]
    %v2408 = vld [vmem:[#allocation8 + $0x288] sm:$0xff]
    %v2409 = vld [vmem:[#allocation8 + $0x290] sm:$0xff]
    %v2410 = vld [vmem:[#allocation8 + $0x298] sm:$0xff]
    %v2411 = vld [vmem:[#allocation8 + $0x2a0] sm:$0xff]
    %v2412 = vld [vmem:[#allocation8 + $0x2a8] sm:$0xff]
    %v2413 = vld [vmem:[#allocation8 + $0x2b0] sm:$0xff]
    %v2414 = vld [vmem:[#allocation8 + $0x2b8] sm:$0xff]
    %v2415 = vld [vmem:[#allocation8 + $0x2c0] sm:$0xff]
    %v2416 = vld [vmem:[#allocation8 + $0x2c8] sm:$0xff]
    %v2417 = vld [vmem:[#allocation8 + $0x2d0] sm:$0xff]
    %v2418 = vld [vmem:[#allocation8 + $0x2d8] sm:$0xff]
    %v2419 = vld [vmem:[#allocation8 + $0x2e0] sm:$0xff]
    %v2420 = vld [vmem:[#allocation8 + $0x2e8] sm:$0xff]
    %v2421 = vld [vmem:[#allocation8 + $0x2f0] sm:$0xff]
    %v2422 = vld [vmem:[#allocation8 + $0x2f8] sm:$0xff]
    %v2423 = vld [vmem:[#allocation8 + $0x300] sm:$0xff]
    %v2424 = vld [vmem:[#allocation8 + $0x308] sm:$0xff]
    %v2425 = vld [vmem:[#allocation8 + $0x310] sm:$0xff]
    %v2426 = vld [vmem:[#allocation8 + $0x318] sm:$0xff]
    %v2427 = vld [vmem:[#allocation8 + $0x320] sm:$0xff]
    %v2428 = vld [vmem:[#allocation8 + $0x328] sm:$0xff]
    %v2429 = vld [vmem:[#allocation8 + $0x330] sm:$0xff]
    %v2430 = vld [vmem:[#allocation8 + $0x338] sm:$0xff]
    %v2431 = vld [vmem:[#allocation8 + $0x340] sm:$0xff]
    %v2432 = vld [vmem:[#allocation8 + $0x348] sm:$0xff]
    %v2433 = vld [vmem:[#allocation8 + $0x350] sm:$0xff]
    %v2434 = vld [vmem:[#allocation8 + $0x358] sm:$0xff]
    %v2435 = vld [vmem:[#allocation8 + $0x360] sm:$0xff]
    %v2436 = vld [vmem:[#allocation8 + $0x368] sm:$0xff]
    %v2437 = vld [vmem:[#allocation8 + $0x370] sm:$0xff]
    %v2438 = vld [vmem:[#allocation8 + $0x378] sm:$0xff]
    %v2439 = vld [vmem:[#allocation8 + $0x380] sm:$0xff]
    %v2440 = vld [vmem:[#allocation8 + $0x388] sm:$0xff]
    %v2441 = vld [vmem:[#allocation8 + $0x390] sm:$0xff]
    %v2442 = vld [vmem:[#allocation8 + $0x398] sm:$0xff]
    %v2443 = vld [vmem:[#allocation8 + $0x3a0] sm:$0xff]
    %v2444 = vld [vmem:[#allocation8 + $0x3a8] sm:$0xff]
    %v2445 = vld [vmem:[#allocation8 + $0x3b0] sm:$0xff]
    %v2446 = vld [vmem:[#allocation8 + $0x3b8] sm:$0xff]
    %v2447 = vld [vmem:[#allocation8 + $0x3c0] sm:$0xff]
    %v2448 = vld [vmem:[#allocation8 + $0x3c8] sm:$0xff]
    %v2449 = vld [vmem:[#allocation8 + $0x3d0] sm:$0xff]
    %v2450 = vld [vmem:[#allocation8 + $0x3d8] sm:$0xff]
    %v2451 = vld [vmem:[#allocation8 + $0x3e0] sm:$0xff]
    %v2452 = vld [vmem:[#allocation8 + $0x3e8] sm:$0xff]
    %v2453 = vld [vmem:[#allocation8 + $0x3f0] sm:$0xff]
    %v2454 = vld [vmem:[#allocation8 + $0x3f8] sm:$0xff]
    %v2455 = vld [vmem:[#allocation8 + $0x400] sm:$0xff]
    %v2456 = vld [vmem:[#allocation8 + $0x408] sm:$0xff]
    %v2457 = vld [vmem:[#allocation8 + $0x410] sm:$0xff]
    %v2458 = vld [vmem:[#allocation8 + $0x418] sm:$0xff]
    %v2459 = vld [vmem:[#allocation8 + $0x420] sm:$0xff]
    %v2460 = vld [vmem:[#allocation8 + $0x428] sm:$0xff]
    %v2461 = vld [vmem:[#allocation8 + $0x430] sm:$0xff]
    %v2462 = vld [vmem:[#allocation8 + $0x438] sm:$0xff]
    %v2463 = vld [vmem:[#allocation8 + $0x440] sm:$0xff]
    %v2464 = vld [vmem:[#allocation8 + $0x448] sm:$0xff]
    %v2465 = vld [vmem:[#allocation8 + $0x450] sm:$0xff]
    %v2466 = vld [vmem:[#allocation8 + $0x458] sm:$0xff]
    %v2467 = vld [vmem:[#allocation8 + $0x460] sm:$0xff]
    %v2468 = vld [vmem:[#allocation8 + $0x468] sm:$0xff]
    %v2469 = vld [vmem:[#allocation8 + $0x470] sm:$0xff]
    %v2470 = vld [vmem:[#allocation8 + $0x478] sm:$0xff]
    %v2471 = vld [vmem:[#allocation8 + $0x480] sm:$0xff]
    %v2472 = vld [vmem:[#allocation8 + $0x488] sm:$0xff]
    %v2473 = vld [vmem:[#allocation8 + $0x490] sm:$0xff]
    %v2474 = vld [vmem:[#allocation8 + $0x498] sm:$0xff]
    %v2475 = vld [vmem:[#allocation8 + $0x4a0] sm:$0xff]
    %v2476 = vld [vmem:[#allocation8 + $0x4a8] sm:$0xff]
    %v2477 = vld [vmem:[#allocation8 + $0x4b0] sm:$0xff]
    %v2478 = vld [vmem:[#allocation8 + $0x4b8] sm:$0xff]
    %v2479 = vld [vmem:[#allocation8 + $0x4c0] sm:$0xff]
    %v2480 = vld [vmem:[#allocation8 + $0x4c8] sm:$0xff]
    %v2481 = vld [vmem:[#allocation8 + $0x4d0] sm:$0xff]
    %v2482 = vld [vmem:[#allocation8 + $0x4d8] sm:$0xff]
    %v2483 = vld [vmem:[#allocation8 + $0x4e0] sm:$0xff]
    %v2484 = vld [vmem:[#allocation8 + $0x4e8] sm:$0xff]
    %v2485 = vld [vmem:[#allocation8 + $0x4f0] sm:$0xff]
    %v2486 = vld [vmem:[#allocation8 + $0x4f8] sm:$0xff]
    %v2487 = vld [vmem:[#allocation8 + $0x500] sm:$0xff]
    %v2488 = vld [vmem:[#allocation8 + $0x508] sm:$0xff]
    %v2489 = vld [vmem:[#allocation8 + $0x510] sm:$0xff]
    %v2490 = vld [vmem:[#allocation8 + $0x518] sm:$0xff]
    %v2491 = vld [vmem:[#allocation8 + $0x520] sm:$0xff]
    %v2492 = vld [vmem:[#allocation8 + $0x528] sm:$0xff]
    %v2493 = vld [vmem:[#allocation8 + $0x530] sm:$0xff]
    %v2494 = vld [vmem:[#allocation8 + $0x538] sm:$0xff]
    %v2495 = vld [vmem:[#allocation8 + $0x540] sm:$0xff]
    %v2496 = vld [vmem:[#allocation8 + $0x548] sm:$0xff]
    %v2497 = vld [vmem:[#allocation8 + $0x550] sm:$0xff]
    %v2498 = vld [vmem:[#allocation8 + $0x558] sm:$0xff]
    %v2499 = vld [vmem:[#allocation8 + $0x560] sm:$0xff]
    %v2500 = vld [vmem:[#allocation8 + $0x568] sm:$0xff]
    %v2501 = vld [vmem:[#allocation8 + $0x570] sm:$0xff]
    %v2502 = vld [vmem:[#allocation8 + $0x578] sm:$0xff]
    %v2503 = vld [vmem:[#allocation8 + $0x580] sm:$0xff]
    %v2504 = vld [vmem:[#allocation8 + $0x588] sm:$0xff]
    %v2505 = vld [vmem:[#allocation8 + $0x590] sm:$0xff]
    %v2506 = vld [vmem:[#allocation8 + $0x598] sm:$0xff]
    %v2507 = vld [vmem:[#allocation8 + $0x5a0] sm:$0xff]
    %v2508 = vld [vmem:[#allocation8 + $0x5a8] sm:$0xff]
    %v2509 = vld [vmem:[#allocation8 + $0x5b0] sm:$0xff]
    %v2510 = vld [vmem:[#allocation8 + $0x5b8] sm:$0xff]
    %v2511 = vld [vmem:[#allocation8 + $0x5c0] sm:$0xff]
    %v2512 = vld [vmem:[#allocation8 + $0x5c8] sm:$0xff]
    %v2513 = vld [vmem:[#allocation8 + $0x5d0] sm:$0xff]
    %v2514 = vld [vmem:[#allocation8 + $0x5d8] sm:$0xff]
    %v2515 = vld [vmem:[#allocation8 + $0x5e0] sm:$0xff]
    %v2516 = vld [vmem:[#allocation8 + $0x5e8] sm:$0xff]
    %v2517 = vld [vmem:[#allocation8 + $0x5f0] sm:$0xff]
    %v2518 = vld [vmem:[#allocation8 + $0x5f8] sm:$0xff]
    %v2519 = vld [vmem:[#allocation10] sm:$0xf]
    %v2521 = vlaneseq
    %v2522 = vshrl.u32 %v2521, 7
    %v2523 = vsub.s32 0, %v2522
    %v2524 = vrot.slane %v2519, %v2523
    %v2525 = vlaneseq
    %v2526 = vshrl.u32 %v2525, 7
    %v2527 = vsub.s32 1, %v2526
    %v2528 = vrot.slane %v2519, %v2527
    %v2529 = vlaneseq
    %v2530 = vshrl.u32 %v2529, 7
    %v2531 = vsub.s32 2, %v2530
    %v2532 = vrot.slane %v2519, %v2531
    %v2533 = vlaneseq
    %v2534 = vshrl.u32 %v2533, 7
    %v2535 = vsub.s32 3, %v2534
    %v2536 = vrot.slane %v2519, %v2535
    %v2733 = vunpack.c.l.b16 %v2327
    %v2734 = vunpack.c.h.b16 %v2327
    %v2735 = vunpack.c.l.b16 %v2328
    %v2736 = vunpack.c.h.b16 %v2328
    %v2737 = vunpack.c.l.b16 %v2329
    %v2738 = vunpack.c.h.b16 %v2329
    %v2739 = vunpack.c.l.b16 %v2330
    %v2740 = vunpack.c.h.b16 %v2330
    %v2741 = vunpack.c.l.b16 %v2331
    %v2742 = vunpack.c.h.b16 %v2331
    %v2743 = vunpack.c.l.b16 %v2332
    %v2744 = vunpack.c.h.b16 %v2332
    %v2745 = vunpack.c.l.b16 %v2333
    %v2746 = vunpack.c.h.b16 %v2333
    %v2747 = vunpack.c.l.b16 %v2334
    %v2748 = vunpack.c.h.b16 %v2334
    %v2749 = vunpack.c.l.b16 %v2335
    %v2750 = vunpack.c.h.b16 %v2335
    %v2751 = vunpack.c.l.b16 %v2336
    %v2752 = vunpack.c.h.b16 %v2336
    %v2753 = vunpack.c.l.b16 %v2337
    %v2754 = vunpack.c.h.b16 %v2337
    %v2755 = vunpack.c.l.b16 %v2338
    %v2756 = vunpack.c.h.b16 %v2338
    %v2757 = vunpack.c.l.b16 %v2339
    %v2758 = vunpack.c.h.b16 %v2339
    %v2759 = vunpack.c.l.b16 %v2340
    %v2760 = vunpack.c.h.b16 %v2340
    %v2761 = vunpack.c.l.b16 %v2341
    %v2762 = vunpack.c.h.b16 %v2341
    %v2763 = vunpack.c.l.b16 %v2342
    %v2764 = vunpack.c.h.b16 %v2342
    %v2765 = vunpack.c.l.b16 %v2343
    %v2766 = vunpack.c.h.b16 %v2343
    %v2767 = vunpack.c.l.b16 %v2344
    %v2768 = vunpack.c.h.b16 %v2344
    %v2769 = vunpack.c.l.b16 %v2345
    %v2770 = vunpack.c.h.b16 %v2345
    %v2771 = vunpack.c.l.b16 %v2346
    %v2772 = vunpack.c.h.b16 %v2346
    %v2773 = vunpack.c.l.b16 %v2347
    %v2774 = vunpack.c.h.b16 %v2347
    %v2775 = vunpack.c.l.b16 %v2348
    %v2776 = vunpack.c.h.b16 %v2348
    %v2777 = vunpack.c.l.b16 %v2349
    %v2778 = vunpack.c.h.b16 %v2349
    %v2779 = vunpack.c.l.b16 %v2350
    %v2780 = vunpack.c.h.b16 %v2350
    %v2781 = vunpack.c.l.b16 %v2351
    %v2782 = vunpack.c.h.b16 %v2351
    %v2783 = vunpack.c.l.b16 %v2352
    %v2784 = vunpack.c.h.b16 %v2352
    %v2785 = vunpack.c.l.b16 %v2353
    %v2786 = vunpack.c.h.b16 %v2353
    %v2787 = vunpack.c.l.b16 %v2354
    %v2788 = vunpack.c.h.b16 %v2354
    %v2789 = vunpack.c.l.b16 %v2355
    %v2790 = vunpack.c.h.b16 %v2355
    %v2791 = vunpack.c.l.b16 %v2356
    %v2792 = vunpack.c.h.b16 %v2356
    %v2793 = vunpack.c.l.b16 %v2357
    %v2794 = vunpack.c.h.b16 %v2357
    %v2795 = vunpack.c.l.b16 %v2358
    %v2796 = vunpack.c.h.b16 %v2358
    %v2797 = vunpack.c.l.b16 %v2359
    %v2798 = vunpack.c.h.b16 %v2359
    %v2799 = vunpack.c.l.b16 %v2360
    %v2800 = vunpack.c.h.b16 %v2360
    %v2801 = vunpack.c.l.b16 %v2361
    %v2802 = vunpack.c.h.b16 %v2361
    %v2803 = vunpack.c.l.b16 %v2362
    %v2804 = vunpack.c.h.b16 %v2362
    %v2805 = vunpack.c.l.b16 %v2363
    %v2806 = vunpack.c.h.b16 %v2363
    %v2807 = vunpack.c.l.b16 %v2364
    %v2808 = vunpack.c.h.b16 %v2364
    %v2809 = vunpack.c.l.b16 %v2365
    %v2810 = vunpack.c.h.b16 %v2365
    %v2811 = vunpack.c.l.b16 %v2366
    %v2812 = vunpack.c.h.b16 %v2366
    %v2813 = vunpack.c.l.b16 %v2367
    %v2814 = vunpack.c.h.b16 %v2367
    %v2815 = vunpack.c.l.b16 %v2368
    %v2816 = vunpack.c.h.b16 %v2368
    %v2817 = vunpack.c.l.b16 %v2369
    %v2818 = vunpack.c.h.b16 %v2369
    %v2819 = vunpack.c.l.b16 %v2370
    %v2820 = vunpack.c.h.b16 %v2370
    %v2821 = vunpack.c.l.b16 %v2371
    %v2822 = vunpack.c.h.b16 %v2371
    %v2823 = vunpack.c.l.b16 %v2372
    %v2824 = vunpack.c.h.b16 %v2372
    %v2825 = vunpack.c.l.b16 %v2373
    %v2826 = vunpack.c.h.b16 %v2373
    %v2827 = vunpack.c.l.b16 %v2374
    %v2828 = vunpack.c.h.b16 %v2374
    %v2829 = vunpack.c.l.b16 %v2375
    %v2830 = vunpack.c.h.b16 %v2375
    %v2831 = vunpack.c.l.b16 %v2376
    %v2832 = vunpack.c.h.b16 %v2376
    %v2833 = vunpack.c.l.b16 %v2377
    %v2834 = vunpack.c.h.b16 %v2377
    %v2835 = vunpack.c.l.b16 %v2378
    %v2836 = vunpack.c.h.b16 %v2378
    %v2837 = vunpack.c.l.b16 %v2379
    %v2838 = vunpack.c.h.b16 %v2379
    %v2839 = vunpack.c.l.b16 %v2380
    %v2840 = vunpack.c.h.b16 %v2380
    %v2841 = vunpack.c.l.b16 %v2381
    %v2842 = vunpack.c.h.b16 %v2381
    %v2843 = vunpack.c.l.b16 %v2382
    %v2844 = vunpack.c.h.b16 %v2382
    %v2845 = vunpack.c.l.b16 %v2383
    %v2846 = vunpack.c.h.b16 %v2383
    %v2847 = vunpack.c.l.b16 %v2384
    %v2848 = vunpack.c.h.b16 %v2384
    %v2849 = vunpack.c.l.b16 %v2385
    %v2850 = vunpack.c.h.b16 %v2385
    %v2851 = vunpack.c.l.b16 %v2386
    %v2852 = vunpack.c.h.b16 %v2386
    %v2853 = vunpack.c.l.b16 %v2387
    %v2854 = vunpack.c.h.b16 %v2387
    %v2855 = vunpack.c.l.b16 %v2388
    %v2856 = vunpack.c.h.b16 %v2388
    %v2857 = vunpack.c.l.b16 %v2389
    %v2858 = vunpack.c.h.b16 %v2389
    %v2859 = vunpack.c.l.b16 %v2390
    %v2860 = vunpack.c.h.b16 %v2390
    %v2861 = vunpack.c.l.b16 %v2391
    %v2862 = vunpack.c.h.b16 %v2391
    %v2863 = vunpack.c.l.b16 %v2392
    %v2864 = vunpack.c.h.b16 %v2392
    %v2865 = vunpack.c.l.b16 %v2393
    %v2866 = vunpack.c.h.b16 %v2393
    %v2867 = vunpack.c.l.b16 %v2394
    %v2868 = vunpack.c.h.b16 %v2394
    %v2869 = vunpack.c.l.b16 %v2395
    %v2870 = vunpack.c.h.b16 %v2395
    %v2871 = vunpack.c.l.b16 %v2396
    %v2872 = vunpack.c.h.b16 %v2396
    %v2873 = vunpack.c.l.b16 %v2397
    %v2874 = vunpack.c.h.b16 %v2397
    %v2875 = vunpack.c.l.b16 %v2398
    %v2876 = vunpack.c.h.b16 %v2398
    %v2877 = vunpack.c.l.b16 %v2399
    %v2878 = vunpack.c.h.b16 %v2399
    %v2879 = vunpack.c.l.b16 %v2400
    %v2880 = vunpack.c.h.b16 %v2400
    %v2881 = vunpack.c.l.b16 %v2401
    %v2882 = vunpack.c.h.b16 %v2401
    %v2883 = vunpack.c.l.b16 %v2402
    %v2884 = vunpack.c.h.b16 %v2402
    %v2885 = vunpack.c.l.b16 %v2403
    %v2886 = vunpack.c.h.b16 %v2403
    %v2887 = vunpack.c.l.b16 %v2404
    %v2888 = vunpack.c.h.b16 %v2404
    %v2889 = vunpack.c.l.b16 %v2405
    %v2890 = vunpack.c.h.b16 %v2405
    %v2891 = vunpack.c.l.b16 %v2406
    %v2892 = vunpack.c.h.b16 %v2406
    %v2893 = vunpack.c.l.b16 %v2407
    %v2894 = vunpack.c.h.b16 %v2407
    %v2895 = vunpack.c.l.b16 %v2408
    %v2896 = vunpack.c.h.b16 %v2408
    %v2897 = vunpack.c.l.b16 %v2409
    %v2898 = vunpack.c.h.b16 %v2409
    %v2899 = vunpack.c.l.b16 %v2410
    %v2900 = vunpack.c.h.b16 %v2410
    %v2901 = vunpack.c.l.b16 %v2411
    %v2902 = vunpack.c.h.b16 %v2411
    %v2903 = vunpack.c.l.b16 %v2412
    %v2904 = vunpack.c.h.b16 %v2412
    %v2905 = vunpack.c.l.b16 %v2413
    %v2906 = vunpack.c.h.b16 %v2413
    %v2907 = vunpack.c.l.b16 %v2414
    %v2908 = vunpack.c.h.b16 %v2414
    %v2909 = vunpack.c.l.b16 %v2415
    %v2910 = vunpack.c.h.b16 %v2415
    %v2911 = vunpack.c.l.b16 %v2416
    %v2912 = vunpack.c.h.b16 %v2416
    %v2913 = vunpack.c.l.b16 %v2417
    %v2914 = vunpack.c.h.b16 %v2417
    %v2915 = vunpack.c.l.b16 %v2418
    %v2916 = vunpack.c.h.b16 %v2418
    %v2917 = vunpack.c.l.b16 %v2419
    %v2918 = vunpack.c.h.b16 %v2419
    %v2919 = vunpack.c.l.b16 %v2420
    %v2920 = vunpack.c.h.b16 %v2420
    %v2921 = vunpack.c.l.b16 %v2421
    %v2922 = vunpack.c.h.b16 %v2421
    %v2923 = vunpack.c.l.b16 %v2422
    %v2924 = vunpack.c.h.b16 %v2422
    %v2925 = vunpack.c.l.b16 %v2423
    %v2926 = vunpack.c.h.b16 %v2423
    %v2927 = vunpack.c.l.b16 %v2424
    %v2928 = vunpack.c.h.b16 %v2424
    %v2929 = vunpack.c.l.b16 %v2425
    %v2930 = vunpack.c.h.b16 %v2425
    %v2931 = vunpack.c.l.b16 %v2426
    %v2932 = vunpack.c.h.b16 %v2426
    %v2933 = vunpack.c.l.b16 %v2427
    %v2934 = vunpack.c.h.b16 %v2427
    %v2935 = vunpack.c.l.b16 %v2428
    %v2936 = vunpack.c.h.b16 %v2428
    %v2937 = vunpack.c.l.b16 %v2429
    %v2938 = vunpack.c.h.b16 %v2429
    %v2939 = vunpack.c.l.b16 %v2430
    %v2940 = vunpack.c.h.b16 %v2430
    %v2941 = vunpack.c.l.b16 %v2431
    %v2942 = vunpack.c.h.b16 %v2431
    %v2943 = vunpack.c.l.b16 %v2432
    %v2944 = vunpack.c.h.b16 %v2432
    %v2945 = vunpack.c.l.b16 %v2433
    %v2946 = vunpack.c.h.b16 %v2433
    %v2947 = vunpack.c.l.b16 %v2434
    %v2948 = vunpack.c.h.b16 %v2434
    %v2949 = vunpack.c.l.b16 %v2435
    %v2950 = vunpack.c.h.b16 %v2435
    %v2951 = vunpack.c.l.b16 %v2436
    %v2952 = vunpack.c.h.b16 %v2436
    %v2953 = vunpack.c.l.b16 %v2437
    %v2954 = vunpack.c.h.b16 %v2437
    %v2955 = vunpack.c.l.b16 %v2438
    %v2956 = vunpack.c.h.b16 %v2438
    %v2957 = vunpack.c.l.b16 %v2439
    %v2958 = vunpack.c.h.b16 %v2439
    %v2959 = vunpack.c.l.b16 %v2440
    %v2960 = vunpack.c.h.b16 %v2440
    %v2961 = vunpack.c.l.b16 %v2441
    %v2962 = vunpack.c.h.b16 %v2441
    %v2963 = vunpack.c.l.b16 %v2442
    %v2964 = vunpack.c.h.b16 %v2442
    %v2965 = vunpack.c.l.b16 %v2443
    %v2966 = vunpack.c.h.b16 %v2443
    %v2967 = vunpack.c.l.b16 %v2444
    %v2968 = vunpack.c.h.b16 %v2444
    %v2969 = vunpack.c.l.b16 %v2445
    %v2970 = vunpack.c.h.b16 %v2445
    %v2971 = vunpack.c.l.b16 %v2446
    %v2972 = vunpack.c.h.b16 %v2446
    %v2973 = vunpack.c.l.b16 %v2447
    %v2974 = vunpack.c.h.b16 %v2447
    %v2975 = vunpack.c.l.b16 %v2448
    %v2976 = vunpack.c.h.b16 %v2448
    %v2977 = vunpack.c.l.b16 %v2449
    %v2978 = vunpack.c.h.b16 %v2449
    %v2979 = vunpack.c.l.b16 %v2450
    %v2980 = vunpack.c.h.b16 %v2450
    %v2981 = vunpack.c.l.b16 %v2451
    %v2982 = vunpack.c.h.b16 %v2451
    %v2983 = vunpack.c.l.b16 %v2452
    %v2984 = vunpack.c.h.b16 %v2452
    %v2985 = vunpack.c.l.b16 %v2453
    %v2986 = vunpack.c.h.b16 %v2453
    %v2987 = vunpack.c.l.b16 %v2454
    %v2988 = vunpack.c.h.b16 %v2454
    %v2989 = vunpack.c.l.b16 %v2455
    %v2990 = vunpack.c.h.b16 %v2455
    %v2991 = vunpack.c.l.b16 %v2456
    %v2992 = vunpack.c.h.b16 %v2456
    %v2993 = vunpack.c.l.b16 %v2457
    %v2994 = vunpack.c.h.b16 %v2457
    %v2995 = vunpack.c.l.b16 %v2458
    %v2996 = vunpack.c.h.b16 %v2458
    %v2997 = vunpack.c.l.b16 %v2459
    %v2998 = vunpack.c.h.b16 %v2459
    %v2999 = vunpack.c.l.b16 %v2460
    %v3000 = vunpack.c.h.b16 %v2460
    %v3001 = vunpack.c.l.b16 %v2461
    %v3002 = vunpack.c.h.b16 %v2461
    %v3003 = vunpack.c.l.b16 %v2462
    %v3004 = vunpack.c.h.b16 %v2462
    %v3005 = vunpack.c.l.b16 %v2463
    %v3006 = vunpack.c.h.b16 %v2463
    %v3007 = vunpack.c.l.b16 %v2464
    %v3008 = vunpack.c.h.b16 %v2464
    %v3009 = vunpack.c.l.b16 %v2465
    %v3010 = vunpack.c.h.b16 %v2465
    %v3011 = vunpack.c.l.b16 %v2466
    %v3012 = vunpack.c.h.b16 %v2466
    %v3013 = vunpack.c.l.b16 %v2467
    %v3014 = vunpack.c.h.b16 %v2467
    %v3015 = vunpack.c.l.b16 %v2468
    %v3016 = vunpack.c.h.b16 %v2468
    %v3017 = vunpack.c.l.b16 %v2469
    %v3018 = vunpack.c.h.b16 %v2469
    %v3019 = vunpack.c.l.b16 %v2470
    %v3020 = vunpack.c.h.b16 %v2470
    %v3021 = vunpack.c.l.b16 %v2471
    %v3022 = vunpack.c.h.b16 %v2471
    %v3023 = vunpack.c.l.b16 %v2472
    %v3024 = vunpack.c.h.b16 %v2472
    %v3025 = vunpack.c.l.b16 %v2473
    %v3026 = vunpack.c.h.b16 %v2473
    %v3027 = vunpack.c.l.b16 %v2474
    %v3028 = vunpack.c.h.b16 %v2474
    %v3029 = vunpack.c.l.b16 %v2475
    %v3030 = vunpack.c.h.b16 %v2475
    %v3031 = vunpack.c.l.b16 %v2476
    %v3032 = vunpack.c.h.b16 %v2476
    %v3033 = vunpack.c.l.b16 %v2477
    %v3034 = vunpack.c.h.b16 %v2477
    %v3035 = vunpack.c.l.b16 %v2478
    %v3036 = vunpack.c.h.b16 %v2478
    %v3037 = vunpack.c.l.b16 %v2479
    %v3038 = vunpack.c.h.b16 %v2479
    %v3039 = vunpack.c.l.b16 %v2480
    %v3040 = vunpack.c.h.b16 %v2480
    %v3041 = vunpack.c.l.b16 %v2481
    %v3042 = vunpack.c.h.b16 %v2481
    %v3043 = vunpack.c.l.b16 %v2482
    %v3044 = vunpack.c.h.b16 %v2482
    %v3045 = vunpack.c.l.b16 %v2483
    %v3046 = vunpack.c.h.b16 %v2483
    %v3047 = vunpack.c.l.b16 %v2484
    %v3048 = vunpack.c.h.b16 %v2484
    %v3049 = vunpack.c.l.b16 %v2485
    %v3050 = vunpack.c.h.b16 %v2485
    %v3051 = vunpack.c.l.b16 %v2486
    %v3052 = vunpack.c.h.b16 %v2486
    %v3053 = vunpack.c.l.b16 %v2487
    %v3054 = vunpack.c.h.b16 %v2487
    %v3055 = vunpack.c.l.b16 %v2488
    %v3056 = vunpack.c.h.b16 %v2488
    %v3057 = vunpack.c.l.b16 %v2489
    %v3058 = vunpack.c.h.b16 %v2489
    %v3059 = vunpack.c.l.b16 %v2490
    %v3060 = vunpack.c.h.b16 %v2490
    %v3061 = vunpack.c.l.b16 %v2491
    %v3062 = vunpack.c.h.b16 %v2491
    %v3063 = vunpack.c.l.b16 %v2492
    %v3064 = vunpack.c.h.b16 %v2492
    %v3065 = vunpack.c.l.b16 %v2493
    %v3066 = vunpack.c.h.b16 %v2493
    %v3067 = vunpack.c.l.b16 %v2494
    %v3068 = vunpack.c.h.b16 %v2494
    %v3069 = vunpack.c.l.b16 %v2495
    %v3070 = vunpack.c.h.b16 %v2495
    %v3071 = vunpack.c.l.b16 %v2496
    %v3072 = vunpack.c.h.b16 %v2496
    %v3073 = vunpack.c.l.b16 %v2497
    %v3074 = vunpack.c.h.b16 %v2497
    %v3075 = vunpack.c.l.b16 %v2498
    %v3076 = vunpack.c.h.b16 %v2498
    %v3077 = vunpack.c.l.b16 %v2499
    %v3078 = vunpack.c.h.b16 %v2499
    %v3079 = vunpack.c.l.b16 %v2500
    %v3080 = vunpack.c.h.b16 %v2500
    %v3081 = vunpack.c.l.b16 %v2501
    %v3082 = vunpack.c.h.b16 %v2501
    %v3083 = vunpack.c.l.b16 %v2502
    %v3084 = vunpack.c.h.b16 %v2502
    %v3085 = vunpack.c.l.b16 %v2503
    %v3086 = vunpack.c.h.b16 %v2503
    %v3087 = vunpack.c.l.b16 %v2504
    %v3088 = vunpack.c.h.b16 %v2504
    %v3089 = vunpack.c.l.b16 %v2505
    %v3090 = vunpack.c.h.b16 %v2505
    %v3091 = vunpack.c.l.b16 %v2506
    %v3092 = vunpack.c.h.b16 %v2506
    %v3093 = vunpack.c.l.b16 %v2507
    %v3094 = vunpack.c.h.b16 %v2507
    %v3095 = vunpack.c.l.b16 %v2508
    %v3096 = vunpack.c.h.b16 %v2508
    %v3097 = vunpack.c.l.b16 %v2509
    %v3098 = vunpack.c.h.b16 %v2509
    %v3099 = vunpack.c.l.b16 %v2510
    %v3100 = vunpack.c.h.b16 %v2510
    %v3101 = vunpack.c.l.b16 %v2511
    %v3102 = vunpack.c.h.b16 %v2511
    %v3103 = vunpack.c.l.b16 %v2512
    %v3104 = vunpack.c.h.b16 %v2512
    %v3105 = vunpack.c.l.b16 %v2513
    %v3106 = vunpack.c.h.b16 %v2513
    %v3107 = vunpack.c.l.b16 %v2514
    %v3108 = vunpack.c.h.b16 %v2514
    %v3109 = vunpack.c.l.b16 %v2515
    %v3110 = vunpack.c.h.b16 %v2515
    %v3111 = vunpack.c.l.b16 %v2516
    %v3112 = vunpack.c.h.b16 %v2516
    %v3113 = vunpack.c.l.b16 %v2517
    %v3114 = vunpack.c.h.b16 %v2517
    %v3115 = vunpack.c.l.b16 %v2518
    %v3116 = vunpack.c.h.b16 %v2518
    %v3117 = vpack.c.b16 %v2737, %v2733
    %v3118 = vpack.c.b16 %v2738, %v2734
    %v3119 = vpack.c.b16 %v2739, %v2735
    %v3120 = vpack.c.b16 %v2740, %v2736
    %v3121 = vpack.c.b16 %v2745, %v2741
    %v3122 = vpack.c.b16 %v2746, %v2742
    %v3123 = vpack.c.b16 %v2747, %v2743
    %v3124 = vpack.c.b16 %v2748, %v2744
    %v3125 = vpack.c.b16 %v2753, %v2749
    %v3126 = vpack.c.b16 %v2754, %v2750
    %v3127 = vpack.c.b16 %v2755, %v2751
    %v3128 = vpack.c.b16 %v2756, %v2752
    %v3129 = vpack.c.b16 %v2761, %v2757
    %v3130 = vpack.c.b16 %v2762, %v2758
    %v3131 = vpack.c.b16 %v2763, %v2759
    %v3132 = vpack.c.b16 %v2764, %v2760
    %v3133 = vpack.c.b16 %v2769, %v2765
    %v3134 = vpack.c.b16 %v2770, %v2766
    %v3135 = vpack.c.b16 %v2771, %v2767
    %v3136 = vpack.c.b16 %v2772, %v2768
    %v3137 = vpack.c.b16 %v2777, %v2773
    %v3138 = vpack.c.b16 %v2778, %v2774
    %v3139 = vpack.c.b16 %v2779, %v2775
    %v3140 = vpack.c.b16 %v2780, %v2776
    %v3141 = vpack.c.b16 %v2785, %v2781
    %v3142 = vpack.c.b16 %v2786, %v2782
    %v3143 = vpack.c.b16 %v2787, %v2783
    %v3144 = vpack.c.b16 %v2788, %v2784
    %v3145 = vpack.c.b16 %v2793, %v2789
    %v3146 = vpack.c.b16 %v2794, %v2790
    %v3147 = vpack.c.b16 %v2795, %v2791
    %v3148 = vpack.c.b16 %v2796, %v2792
    %v3149 = vpack.c.b16 %v2801, %v2797
    %v3150 = vpack.c.b16 %v2802, %v2798
    %v3151 = vpack.c.b16 %v2803, %v2799
    %v3152 = vpack.c.b16 %v2804, %v2800
    %v3153 = vpack.c.b16 %v2809, %v2805
    %v3154 = vpack.c.b16 %v2810, %v2806
    %v3155 = vpack.c.b16 %v2811, %v2807
    %v3156 = vpack.c.b16 %v2812, %v2808
    %v3157 = vpack.c.b16 %v2817, %v2813
    %v3158 = vpack.c.b16 %v2818, %v2814
    %v3159 = vpack.c.b16 %v2819, %v2815
    %v3160 = vpack.c.b16 %v2820, %v2816
    %v3161 = vpack.c.b16 %v2825, %v2821
    %v3162 = vpack.c.b16 %v2826, %v2822
    %v3163 = vpack.c.b16 %v2827, %v2823
    %v3164 = vpack.c.b16 %v2828, %v2824
    %v3165 = vpack.c.b16 %v2833, %v2829
    %v3166 = vpack.c.b16 %v2834, %v2830
    %v3167 = vpack.c.b16 %v2835, %v2831
    %v3168 = vpack.c.b16 %v2836, %v2832
    %v3169 = vpack.c.b16 %v2841, %v2837
    %v3170 = vpack.c.b16 %v2842, %v2838
    %v3171 = vpack.c.b16 %v2843, %v2839
    %v3172 = vpack.c.b16 %v2844, %v2840
    %v3173 = vpack.c.b16 %v2849, %v2845
    %v3174 = vpack.c.b16 %v2850, %v2846
    %v3175 = vpack.c.b16 %v2851, %v2847
    %v3176 = vpack.c.b16 %v2852, %v2848
    %v3177 = vpack.c.b16 %v2857, %v2853
    %v3178 = vpack.c.b16 %v2858, %v2854
    %v3179 = vpack.c.b16 %v2859, %v2855
    %v3180 = vpack.c.b16 %v2860, %v2856
    %v3181 = vpack.c.b16 %v2865, %v2861
    %v3182 = vpack.c.b16 %v2866, %v2862
    %v3183 = vpack.c.b16 %v2867, %v2863
    %v3184 = vpack.c.b16 %v2868, %v2864
    %v3185 = vpack.c.b16 %v2873, %v2869
    %v3186 = vpack.c.b16 %v2874, %v2870
    %v3187 = vpack.c.b16 %v2875, %v2871
    %v3188 = vpack.c.b16 %v2876, %v2872
    %v3189 = vpack.c.b16 %v2881, %v2877
    %v3190 = vpack.c.b16 %v2882, %v2878
    %v3191 = vpack.c.b16 %v2883, %v2879
    %v3192 = vpack.c.b16 %v2884, %v2880
    %v3193 = vpack.c.b16 %v2889, %v2885
    %v3194 = vpack.c.b16 %v2890, %v2886
    %v3195 = vpack.c.b16 %v2891, %v2887
    %v3196 = vpack.c.b16 %v2892, %v2888
    %v3197 = vpack.c.b16 %v2897, %v2893
    %v3198 = vpack.c.b16 %v2898, %v2894
    %v3199 = vpack.c.b16 %v2899, %v2895
    %v3200 = vpack.c.b16 %v2900, %v2896
    %v3201 = vpack.c.b16 %v2905, %v2901
    %v3202 = vpack.c.b16 %v2906, %v2902
    %v3203 = vpack.c.b16 %v2907, %v2903
    %v3204 = vpack.c.b16 %v2908, %v2904
    %v3205 = vpack.c.b16 %v2913, %v2909
    %v3206 = vpack.c.b16 %v2914, %v2910
    %v3207 = vpack.c.b16 %v2915, %v2911
    %v3208 = vpack.c.b16 %v2916, %v2912
    %v3209 = vpack.c.b16 %v2921, %v2917
    %v3210 = vpack.c.b16 %v2922, %v2918
    %v3211 = vpack.c.b16 %v2923, %v2919
    %v3212 = vpack.c.b16 %v2924, %v2920
    %v3213 = vpack.c.b16 %v2929, %v2925
    %v3214 = vpack.c.b16 %v2930, %v2926
    %v3215 = vpack.c.b16 %v2931, %v2927
    %v3216 = vpack.c.b16 %v2932, %v2928
    %v3217 = vpack.c.b16 %v2937, %v2933
    %v3218 = vpack.c.b16 %v2938, %v2934
    %v3219 = vpack.c.b16 %v2939, %v2935
    %v3220 = vpack.c.b16 %v2940, %v2936
    %v3221 = vpack.c.b16 %v2945, %v2941
    %v3222 = vpack.c.b16 %v2946, %v2942
    %v3223 = vpack.c.b16 %v2947, %v2943
    %v3224 = vpack.c.b16 %v2948, %v2944
    %v3225 = vpack.c.b16 %v2953, %v2949
    %v3226 = vpack.c.b16 %v2954, %v2950
    %v3227 = vpack.c.b16 %v2955, %v2951
    %v3228 = vpack.c.b16 %v2956, %v2952
    %v3229 = vpack.c.b16 %v2961, %v2957
    %v3230 = vpack.c.b16 %v2962, %v2958
    %v3231 = vpack.c.b16 %v2963, %v2959
    %v3232 = vpack.c.b16 %v2964, %v2960
    %v3233 = vpack.c.b16 %v2969, %v2965
    %v3234 = vpack.c.b16 %v2970, %v2966
    %v3235 = vpack.c.b16 %v2971, %v2967
    %v3236 = vpack.c.b16 %v2972, %v2968
    %v3237 = vpack.c.b16 %v2977, %v2973
    %v3238 = vpack.c.b16 %v2978, %v2974
    %v3239 = vpack.c.b16 %v2979, %v2975
    %v3240 = vpack.c.b16 %v2980, %v2976
    %v3241 = vpack.c.b16 %v2985, %v2981
    %v3242 = vpack.c.b16 %v2986, %v2982
    %v3243 = vpack.c.b16 %v2987, %v2983
    %v3244 = vpack.c.b16 %v2988, %v2984
    %v3245 = vpack.c.b16 %v2993, %v2989
    %v3246 = vpack.c.b16 %v2994, %v2990
    %v3247 = vpack.c.b16 %v2995, %v2991
    %v3248 = vpack.c.b16 %v2996, %v2992
    %v3249 = vpack.c.b16 %v3001, %v2997
    %v3250 = vpack.c.b16 %v3002, %v2998
    %v3251 = vpack.c.b16 %v3003, %v2999
    %v3252 = vpack.c.b16 %v3004, %v3000
    %v3253 = vpack.c.b16 %v3009, %v3005
    %v3254 = vpack.c.b16 %v3010, %v3006
    %v3255 = vpack.c.b16 %v3011, %v3007
    %v3256 = vpack.c.b16 %v3012, %v3008
    %v3257 = vpack.c.b16 %v3017, %v3013
    %v3258 = vpack.c.b16 %v3018, %v3014
    %v3259 = vpack.c.b16 %v3019, %v3015
    %v3260 = vpack.c.b16 %v3020, %v3016
    %v3261 = vpack.c.b16 %v3025, %v3021
    %v3262 = vpack.c.b16 %v3026, %v3022
    %v3263 = vpack.c.b16 %v3027, %v3023
    %v3264 = vpack.c.b16 %v3028, %v3024
    %v3265 = vpack.c.b16 %v3033, %v3029
    %v3266 = vpack.c.b16 %v3034, %v3030
    %v3267 = vpack.c.b16 %v3035, %v3031
    %v3268 = vpack.c.b16 %v3036, %v3032
    %v3269 = vpack.c.b16 %v3041, %v3037
    %v3270 = vpack.c.b16 %v3042, %v3038
    %v3271 = vpack.c.b16 %v3043, %v3039
    %v3272 = vpack.c.b16 %v3044, %v3040
    %v3273 = vpack.c.b16 %v3049, %v3045
    %v3274 = vpack.c.b16 %v3050, %v3046
    %v3275 = vpack.c.b16 %v3051, %v3047
    %v3276 = vpack.c.b16 %v3052, %v3048
    %v3277 = vpack.c.b16 %v3057, %v3053
    %v3278 = vpack.c.b16 %v3058, %v3054
    %v3279 = vpack.c.b16 %v3059, %v3055
    %v3280 = vpack.c.b16 %v3060, %v3056
    %v3281 = vpack.c.b16 %v3065, %v3061
    %v3282 = vpack.c.b16 %v3066, %v3062
    %v3283 = vpack.c.b16 %v3067, %v3063
    %v3284 = vpack.c.b16 %v3068, %v3064
    %v3285 = vpack.c.b16 %v3073, %v3069
    %v3286 = vpack.c.b16 %v3074, %v3070
    %v3287 = vpack.c.b16 %v3075, %v3071
    %v3288 = vpack.c.b16 %v3076, %v3072
    %v3289 = vpack.c.b16 %v3081, %v3077
    %v3290 = vpack.c.b16 %v3082, %v3078
    %v3291 = vpack.c.b16 %v3083, %v3079
    %v3292 = vpack.c.b16 %v3084, %v3080
    %v3293 = vpack.c.b16 %v3089, %v3085
    %v3294 = vpack.c.b16 %v3090, %v3086
    %v3295 = vpack.c.b16 %v3091, %v3087
    %v3296 = vpack.c.b16 %v3092, %v3088
    %v3297 = vpack.c.b16 %v3097, %v3093
    %v3298 = vpack.c.b16 %v3098, %v3094
    %v3299 = vpack.c.b16 %v3099, %v3095
    %v3300 = vpack.c.b16 %v3100, %v3096
    %v3301 = vpack.c.b16 %v3105, %v3101
    %v3302 = vpack.c.b16 %v3106, %v3102
    %v3303 = vpack.c.b16 %v3107, %v3103
    %v3304 = vpack.c.b16 %v3108, %v3104
    %v3305 = vpack.c.b16 %v3113, %v3109
    %v3306 = vpack.c.b16 %v3114, %v3110
    %v3307 = vpack.c.b16 %v3115, %v3111
    %v3308 = vpack.c.b16 %v3116, %v3112
    %3501 = vmatprep.subr.bf16.mxu0 %v3118
    %3502 = vmatpush1.bf16.msra.mxu0 %v3117
    %3503 = vmatprep.subr.bf16.mxu0 %v3122
    %3504 = vmatpush1.bf16.msra.mxu0 %v3121
    %3505 = vmatprep.subr.bf16.mxu0 %v3126
    %3506 = vmatpush1.bf16.msra.mxu0 %v3125
    %3507 = vmatprep.subr.bf16.mxu0 %v3130
    %3508 = vmatpush1.bf16.msra.mxu0 %v3129
    %3509 = vmatprep.subr.bf16.mxu0 %v3134
    %3510 = vmatpush1.bf16.msra.mxu0 %v3133
    %3511 = vmatprep.subr.bf16.mxu0 %v3138
    %3512 = vmatpush1.bf16.msra.mxu0 %v3137
    %3513 = vmatprep.subr.bf16.mxu0 %v3142
    %3514 = vmatpush1.bf16.msra.mxu0 %v3141
    %3515 = vmatprep.subr.bf16.mxu0 %v3146
    %3516 = vmatpush1.bf16.msra.mxu0 %v3145
    %3517 = vmatprep.subr.bf16.mxu0 %v3150
    %3518 = vmatpush1.bf16.msra.mxu0 %v3149
    %3519 = vmatprep.subr.bf16.mxu0 %v3154
    %3520 = vmatpush1.bf16.msra.mxu0 %v3153
    %3521 = vmatprep.subr.bf16.mxu0 %v3158
    %3522 = vmatpush1.bf16.msra.mxu0 %v3157
    %3523 = vmatprep.subr.bf16.mxu0 %v3162
    %3524 = vmatpush1.bf16.msra.mxu0 %v3161
    %3525 = vmatprep.subr.bf16.mxu0 %v3166
    %3526 = vmatpush1.bf16.msra.mxu0 %v3165
    %3527 = vmatprep.subr.bf16.mxu0 %v3170
    %3528 = vmatpush1.bf16.msra.mxu0 %v3169
    %3529 = vmatprep.subr.bf16.mxu0 %v3174
    %3530 = vmatpush1.bf16.msra.mxu0 %v3173
    %3531 = vmatprep.subr.bf16.mxu0 %v3178
    %3532 = vmatpush1.bf16.msra.mxu0 %v3177
    %3533 = vmatprep.mubr.bf16.mxu0 %v2322
    %3534 = vmatmul.mubr.bf16.gmra.mrb[0].mxu0 %v2321
    %v3535 = vpop.f32.mrb[0].mxu0
    %v3536 = vadd.f32 %v2524, %v3535
    %v3537 = vpop.f32.mrb[0].mxu0
    %v3538 = vadd.f32 %v2528, %v3537
    %v3539 = vpop.f32.mrb[0].mxu0
    %v3540 = vpop.f32.mrb[0].mxu0
    %3541 = vdwg.mxu0
    %3542 = vmatprep.subr.bf16.mxu0 %v3182
    %3543 = vmatpush1.bf16.msra.mxu0 %v3181
    %3544 = vmatprep.subr.bf16.mxu0 %v3186
    %3545 = vmatpush1.bf16.msra.mxu0 %v3185
    %3546 = vmatprep.subr.bf16.mxu0 %v3190
    %3547 = vmatpush1.bf16.msra.mxu0 %v3189
    %3548 = vmatprep.subr.bf16.mxu0 %v3194
    %3549 = vmatpush1.bf16.msra.mxu0 %v3193
    %3550 = vmatprep.subr.bf16.mxu0 %v3198
    %3551 = vmatpush1.bf16.msra.mxu0 %v3197
    %3552 = vmatprep.subr.bf16.mxu0 %v3202
    %3553 = vmatpush1.bf16.msra.mxu0 %v3201
    %3554 = vmatprep.subr.bf16.mxu0 %v3206
    %3555 = vmatpush1.bf16.msra.mxu0 %v3205
    %3556 = vmatprep.subr.bf16.mxu0 %v3210
    %3557 = vmatpush1.bf16.msra.mxu0 %v3209
    %3558 = vmatprep.subr.bf16.mxu0 %v3214
    %3559 = vmatpush1.bf16.msra.mxu0 %v3213
    %3560 = vmatprep.subr.bf16.mxu0 %v3218
    %3561 = vmatpush1.bf16.msra.mxu0 %v3217
    %3562 = vmatprep.subr.bf16.mxu0 %v3222
    %3563 = vmatpush1.bf16.msra.mxu0 %v3221
    %3564 = vmatprep.subr.bf16.mxu0 %v3226
    %3565 = vmatpush1.bf16.msra.mxu0 %v3225
    %3566 = vmatprep.subr.bf16.mxu0 %v3230
    %3567 = vmatpush1.bf16.msra.mxu0 %v3229
    %3568 = vmatprep.subr.bf16.mxu0 %v3234
    %3569 = vmatpush1.bf16.msra.mxu0 %v3233
    %3570 = vmatprep.subr.bf16.mxu0 %v3238
    %3571 = vmatpush1.bf16.msra.mxu0 %v3237
    %3572 = vmatprep.subr.bf16.mxu0 %v3242
    %3573 = vmatpush1.bf16.msra.mxu0 %v3241
    %3574 = vmatprep.mubr.bf16.mxu0 %v2324
    %3575 = vmatmul.mubr.bf16.gmra.mrb[0].mxu0 %v2323
    %v3576 = vpop.f32.mrb[0].mxu0
    %v3577 = vadd.f32 %v3536, %v3576
    %v3578 = vpop.f32.mrb[0].mxu0
    %v3579 = vadd.f32 %v3538, %v3578
    %v3580 = vpop.f32.mrb[0].mxu0
    %v3581 = vpop.f32.mrb[0].mxu0
    %3582 = vdwg.mxu0
    %3583 = vmatprep.subr.bf16.mxu0 %v3246
    %3584 = vmatpush1.bf16.msra.mxu0 %v3245
    %3585 = vmatprep.subr.bf16.mxu0 %v3250
    %3586 = vmatpush1.bf16.msra.mxu0 %v3249
    %3587 = vmatprep.subr.bf16.mxu0 %v3254
    %3588 = vmatpush1.bf16.msra.mxu0 %v3253
    %3589 = vmatprep.subr.bf16.mxu0 %v3258
    %3590 = vmatpush1.bf16.msra.mxu0 %v3257
    %3591 = vmatprep.subr.bf16.mxu0 %v3262
    %3592 = vmatpush1.bf16.msra.mxu0 %v3261
    %3593 = vmatprep.subr.bf16.mxu0 %v3266
    %3594 = vmatpush1.bf16.msra.mxu0 %v3265
    %3595 = vmatprep.subr.bf16.mxu0 %v3270
    %3596 = vmatpush1.bf16.msra.mxu0 %v3269
    %3597 = vmatprep.subr.bf16.mxu0 %v3274
    %3598 = vmatpush1.bf16.msra.mxu0 %v3273
    %3599 = vmatprep.subr.bf16.mxu0 %v3278
    %3600 = vmatpush1.bf16.msra.mxu0 %v3277
    %3601 = vmatprep.subr.bf16.mxu0 %v3282
    %3602 = vmatpush1.bf16.msra.mxu0 %v3281
    %3603 = vmatprep.subr.bf16.mxu0 %v3286
    %3604 = vmatpush1.bf16.msra.mxu0 %v3285
    %3605 = vmatprep.subr.bf16.mxu0 %v3290
    %3606 = vmatpush1.bf16.msra.mxu0 %v3289
    %3607 = vmatprep.subr.bf16.mxu0 %v3294
    %3608 = vmatpush1.bf16.msra.mxu0 %v3293
    %3609 = vmatprep.subr.bf16.mxu0 %v3298
    %3610 = vmatpush1.bf16.msra.mxu0 %v3297
    %3611 = vmatprep.subr.bf16.mxu0 %v3302
    %3612 = vmatpush1.bf16.msra.mxu0 %v3301
    %3613 = vmatprep.subr.bf16.mxu0 %v3306
    %3614 = vmatpush1.bf16.msra.mxu0 %v3305
    %3615 = vmatprep.mubr.bf16.mxu0 %v2326
    %3616 = vmatmul.mubr.bf16.gmra.mrb[0].mxu0 %v2325
    %v3617 = vpop.f32.mrb[0].mxu0
    %v3618 = vadd.f32 %v3577, %v3617
    %v3619 = vpop.f32.mrb[0].mxu0
    %v3620 = vadd.f32 %v3579, %v3619
    %v3621 = vpop.f32.mrb[0].mxu0
    %v3622 = vpop.f32.mrb[0].mxu0
    %3623 = vdwg.mxu0
    %3624 = vmatprep.subr.bf16.mxu0 %v3120
    %3625 = vmatpush1.bf16.msra.mxu0 %v3119
    %3626 = vmatprep.subr.bf16.mxu0 %v3124
    %3627 = vmatpush1.bf16.msra.mxu0 %v3123
    %3628 = vmatprep.subr.bf16.mxu0 %v3128
    %3629 = vmatpush1.bf16.msra.mxu0 %v3127
    %3630 = vmatprep.subr.bf16.mxu0 %v3132
    %3631 = vmatpush1.bf16.msra.mxu0 %v3131
    %3632 = vmatprep.subr.bf16.mxu0 %v3136
    %3633 = vmatpush1.bf16.msra.mxu0 %v3135
    %3634 = vmatprep.subr.bf16.mxu0 %v3140
    %3635 = vmatpush1.bf16.msra.mxu0 %v3139
    %3636 = vmatprep.subr.bf16.mxu0 %v3144
    %3637 = vmatpush1.bf16.msra.mxu0 %v3143
    %3638 = vmatprep.subr.bf16.mxu0 %v3148
    %3639 = vmatpush1.bf16.msra.mxu0 %v3147
    %3640 = vmatprep.subr.bf16.mxu0 %v3152
    %3641 = vmatpush1.bf16.msra.mxu0 %v3151
    %3642 = vmatprep.subr.bf16.mxu0 %v3156
    %3643 = vmatpush1.bf16.msra.mxu0 %v3155
    %3644 = vmatprep.subr.bf16.mxu0 %v3160
    %3645 = vmatpush1.bf16.msra.mxu0 %v3159
    %3646 = vmatprep.subr.bf16.mxu0 %v3164
    %3647 = vmatpush1.bf16.msra.mxu0 %v3163
    %3648 = vmatprep.subr.bf16.mxu0 %v3168
    %3649 = vmatpush1.bf16.msra.mxu0 %v3167
    %3650 = vmatprep.subr.bf16.mxu0 %v3172
    %3651 = vmatpush1.bf16.msra.mxu0 %v3171
    %3652 = vmatprep.subr.bf16.mxu0 %v3176
    %3653 = vmatpush1.bf16.msra.mxu0 %v3175
    %3654 = vmatprep.subr.bf16.mxu0 %v3180
    %3655 = vmatpush1.bf16.msra.mxu0 %v3179
    %3656 = vmatprep.mubr.bf16.mxu0 %v2322
    %3657 = vmatmul.mubr.bf16.gmra.mrb[0].mxu0 %v2321
    %v3658 = vpop.f32.mrb[0].mxu0
    %v3659 = vadd.f32 %v2532, %v3658
    %v3660 = vpop.f32.mrb[0].mxu0
    %v3661 = vadd.f32 %v2536, %v3660
    %v3662 = vpop.f32.mrb[0].mxu0
    %v3663 = vpop.f32.mrb[0].mxu0
    %3664 = vdwg.mxu0
    %3665 = vmatprep.subr.bf16.mxu0 %v3184
    %3666 = vmatpush1.bf16.msra.mxu0 %v3183
    %3667 = vmatprep.subr.bf16.mxu0 %v3188
    %3668 = vmatpush1.bf16.msra.mxu0 %v3187
    %3669 = vmatprep.subr.bf16.mxu0 %v3192
    %3670 = vmatpush1.bf16.msra.mxu0 %v3191
    %3671 = vmatprep.subr.bf16.mxu0 %v3196
    %3672 = vmatpush1.bf16.msra.mxu0 %v3195
    %3673 = vmatprep.subr.bf16.mxu0 %v3200
    %3674 = vmatpush1.bf16.msra.mxu0 %v3199
    %3675 = vmatprep.subr.bf16.mxu0 %v3204
    %3676 = vmatpush1.bf16.msra.mxu0 %v3203
    %3677 = vmatprep.subr.bf16.mxu0 %v3208
    %3678 = vmatpush1.bf16.msra.mxu0 %v3207
    %3679 = vmatprep.subr.bf16.mxu0 %v3212
    %3680 = vmatpush1.bf16.msra.mxu0 %v3211
    %3681 = vmatprep.subr.bf16.mxu0 %v3216
    %3682 = vmatpush1.bf16.msra.mxu0 %v3215
    %3683 = vmatprep.subr.bf16.mxu0 %v3220
    %3684 = vmatpush1.bf16.msra.mxu0 %v3219
    %3685 = vmatprep.subr.bf16.mxu0 %v3224
    %3686 = vmatpush1.bf16.msra.mxu0 %v3223
    %3687 = vmatprep.subr.bf16.mxu0 %v3228
    %3688 = vmatpush1.bf16.msra.mxu0 %v3227
    %3689 = vmatprep.subr.bf16.mxu0 %v3232
    %3690 = vmatpush1.bf16.msra.mxu0 %v3231
    %3691 = vmatprep.subr.bf16.mxu0 %v3236
    %3692 = vmatpush1.bf16.msra.mxu0 %v3235
    %3693 = vmatprep.subr.bf16.mxu0 %v3240
    %3694 = vmatpush1.bf16.msra.mxu0 %v3239
    %3695 = vmatprep.subr.bf16.mxu0 %v3244
    %3696 = vmatpush1.bf16.msra.mxu0 %v3243
    %3697 = vmatprep.mubr.bf16.mxu0 %v2324
    %3698 = vmatmul.mubr.bf16.gmra.mrb[0].mxu0 %v2323
    %v3699 = vpop.f32.mrb[0].mxu0
    %v3700 = vadd.f32 %v3659, %v3699
    %v3701 = vpop.f32.mrb[0].mxu0
    %v3702 = vadd.f32 %v3661, %v3701
    %v3703 = vpop.f32.mrb[0].mxu0
    %v3704 = vpop.f32.mrb[0].mxu0
    %3705 = vdwg.mxu0
    %3706 = vmatprep.subr.bf16.mxu0 %v3248
    %3707 = vmatpush1.bf16.msra.mxu0 %v3247
    %3708 = vmatprep.subr.bf16.mxu0 %v3252
    %3709 = vmatpush1.bf16.msra.mxu0 %v3251
    %3710 = vmatprep.subr.bf16.mxu0 %v3256
    %3711 = vmatpush1.bf16.msra.mxu0 %v3255
    %3712 = vmatprep.subr.bf16.mxu0 %v3260
    %3713 = vmatpush1.bf16.msra.mxu0 %v3259
    %3714 = vmatprep.subr.bf16.mxu0 %v3264
    %3715 = vmatpush1.bf16.msra.mxu0 %v3263
    %3716 = vmatprep.subr.bf16.mxu0 %v3268
    %3717 = vmatpush1.bf16.msra.mxu0 %v3267
    %3718 = vmatprep.subr.bf16.mxu0 %v3272
    %3719 = vmatpush1.bf16.msra.mxu0 %v3271
    %3720 = vmatprep.subr.bf16.mxu0 %v3276
    %3721 = vmatpush1.bf16.msra.mxu0 %v3275
    %3722 = vmatprep.subr.bf16.mxu0 %v3280
    %3723 = vmatpush1.bf16.msra.mxu0 %v3279
    %3724 = vmatprep.subr.bf16.mxu0 %v3284
    %3725 = vmatpush1.bf16.msra.mxu0 %v3283
    %3726 = vmatprep.subr.bf16.mxu0 %v3288
    %3727 = vmatpush1.bf16.msra.mxu0 %v3287
    %3728 = vmatprep.subr.bf16.mxu0 %v3292
    %3729 = vmatpush1.bf16.msra.mxu0 %v3291
    %3730 = vmatprep.subr.bf16.mxu0 %v3296
    %3731 = vmatpush1.bf16.msra.mxu0 %v3295
    %3732 = vmatprep.subr.bf16.mxu0 %v3300
    %3733 = vmatpush1.bf16.msra.mxu0 %v3299
    %3734 = vmatprep.subr.bf16.mxu0 %v3304
    %3735 = vmatpush1.bf16.msra.mxu0 %v3303
    %3736 = vmatprep.subr.bf16.mxu0 %v3308
    %3737 = vmatpush1.bf16.msra.mxu0 %v3307
    %3738 = vmatprep.mubr.bf16.mxu0 %v2326
    %3739 = vmatmul.mubr.bf16.gmra.mrb[0].mxu0 %v2325
    %v3740 = vpop.f32.mrb[0].mxu0
    %v3741 = vadd.f32 %v3700, %v3740
    %v3742 = vpop.f32.mrb[0].mxu0
    %v3743 = vadd.f32 %v3702, %v3742
    %v3744 = vpop.f32.mrb[0].mxu0
    %v3745 = vpop.f32.mrb[0].mxu0
    %3746 = vdwg.mxu0
    %v3747 = vmax.f32 %v3618, 0.0
    %v3748 = vmax.f32 %v3620, 0.0
    %v3749 = vmax.f32 %v3741, 0.0
    %v3750 = vmax.f32 %v3743, 0.0
    %v3751 = vpack.c.bf16 %v3747, %v3747
    %v3752 = vpack.c.bf16 %v3748, %v3748
    %v3753 = vpack.c.bf16 %v3749, %v3749
    %v3754 = vpack.c.bf16 %v3750, %v3750
    %v3755 = vld [vmem:[%s5] sm:$0xf]
    %v3756 = vld [vmem:[%s5 + $0x4] sm:$0xf]
    %v3757 = vld [vmem:[%s5 + $0x8] sm:$0xf]
    %v3758 = vld [vmem:[%s5 + $0xc] sm:$0xf]
    %v3759 = vld [vmem:[%s5 + $0x10] sm:$0xf]
    %v3760 = vld [vmem:[%s5 + $0x14] sm:$0xf]
    %v3761 = vld [vmem:[%s5 + $0x18] sm:$0xf]
    %v3762 = vld [vmem:[%s5 + $0x1c] sm:$0xf]
    %v3763 = vld [vmem:[%s5 + $0x20] sm:$0xf]
    %v3764 = vld [vmem:[%s5 + $0x24] sm:$0xf]
    %v3765 = vld [vmem:[%s5 + $0x28] sm:$0xf]
    %v3766 = vld [vmem:[%s5 + $0x2c] sm:$0xf]
    %v3767 = vld [vmem:[%s5 + $0x30] sm:$0xf]
    %v3768 = vld [vmem:[%s5 + $0x34] sm:$0xf]
    %v3769 = vld [vmem:[%s5 + $0x38] sm:$0xf]
    %v3770 = vld [vmem:[%s5 + $0x3c] sm:$0xf]
    %v3771 = vld [vmem:[%s5 + $0x40] sm:$0xf]
    %v3772 = vld [vmem:[%s5 + $0x44] sm:$0xf]
    %v3773 = vld [vmem:[%s5 + $0x48] sm:$0xf]
    %v3774 = vld [vmem:[%s5 + $0x4c] sm:$0xf]
    %v3775 = vld [vmem:[%s5 + $0x50] sm:$0xf]
    %v3776 = vld [vmem:[%s5 + $0x54] sm:$0xf]
    %v3777 = vld [vmem:[%s5 + $0x58] sm:$0xf]
    %v3778 = vld [vmem:[%s5 + $0x5c] sm:$0xf]
    %v3779 = vld [vmem:[%s5 + $0x60] sm:$0xf]
    %v3780 = vld [vmem:[%s5 + $0x64] sm:$0xf]
    %v3781 = vld [vmem:[%s5 + $0x68] sm:$0xf]
    %v3782 = vld [vmem:[%s5 + $0x6c] sm:$0xf]
    %v3783 = vld [vmem:[%s5 + $0x70] sm:$0xf]
    %v3784 = vld [vmem:[%s5 + $0x74] sm:$0xf]
    %v3785 = vld [vmem:[%s5 + $0x78] sm:$0xf]
    %v3786 = vld [vmem:[%s5 + $0x7c] sm:$0xf]
    %v3787 = vld [vmem:[%s5 + $0x80] sm:$0xf]
    %v3788 = vld [vmem:[%s5 + $0x84] sm:$0xf]
    %v3789 = vld [vmem:[%s5 + $0x88] sm:$0xf]
    %v3790 = vld [vmem:[%s5 + $0x8c] sm:$0xf]
    %v3791 = vld [vmem:[%s5 + $0x90] sm:$0xf]
    %v3792 = vld [vmem:[%s5 + $0x94] sm:$0xf]
    %v3793 = vld [vmem:[%s5 + $0x98] sm:$0xf]
    %v3794 = vld [vmem:[%s5 + $0x9c] sm:$0xf]
    %v3795 = vld [vmem:[%s5 + $0xa0] sm:$0xf]
    %v3796 = vld [vmem:[%s5 + $0xa4] sm:$0xf]
    %v3797 = vld [vmem:[%s5 + $0xa8] sm:$0xf]
    %v3798 = vld [vmem:[%s5 + $0xac] sm:$0xf]
    %v3799 = vld [vmem:[%s5 + $0xb0] sm:$0xf]
    %v3800 = vld [vmem:[%s5 + $0xb4] sm:$0xf]
    %v3801 = vld [vmem:[%s5 + $0xb8] sm:$0xf]
    %v3802 = vld [vmem:[%s5 + $0xbc] sm:$0xf]
    %v3803 = vld [vmem:[%s5 + $0xc0] sm:$0xf]
    %v3804 = vld [vmem:[%s5 + $0xc4] sm:$0xf]
    %v3805 = vld [vmem:[%s5 + $0xc8] sm:$0xf]
    %v3806 = vld [vmem:[%s5 + $0xcc] sm:$0xf]
    %v3807 = vld [vmem:[%s5 + $0xd0] sm:$0xf]
    %v3808 = vld [vmem:[%s5 + $0xd4] sm:$0xf]
    %v3809 = vld [vmem:[%s5 + $0xd8] sm:$0xf]
    %v3810 = vld [vmem:[%s5 + $0xdc] sm:$0xf]
    %v3811 = vld [vmem:[%s5 + $0xe0] sm:$0xf]
    %v3812 = vld [vmem:[%s5 + $0xe4] sm:$0xf]
    %v3813 = vld [vmem:[%s5 + $0xe8] sm:$0xf]
    %v3814 = vld [vmem:[%s5 + $0xec] sm:$0xf]
    %v3815 = vld [vmem:[%s5 + $0xf0] sm:$0xf]
    %v3816 = vld [vmem:[%s5 + $0xf4] sm:$0xf]
    %v3817 = vld [vmem:[%s5 + $0xf8] sm:$0xf]
    %v3818 = vld [vmem:[%s5 + $0xfc] sm:$0xf]
    %v3819 = vld [vmem:[#allocation11] sm:$0x1]
    %v3821 = vlaneseq
    %v3822 = vshrl.u32 %v3821, 7
    %v3823 = vsub.s32 0, %v3822
    %v3824 = vrot.slane %v3819, %v3823
    %v3890 = vunpack.c.l.b16 %v3755
    %v3891 = vunpack.c.l.b16 %v3756
    %v3892 = vunpack.c.l.b16 %v3757
    %v3893 = vunpack.c.l.b16 %v3758
    %v3894 = vunpack.c.l.b16 %v3759
    %v3895 = vunpack.c.l.b16 %v3760
    %v3896 = vunpack.c.l.b16 %v3761
    %v3897 = vunpack.c.l.b16 %v3762
    %v3898 = vunpack.c.l.b16 %v3763
    %v3899 = vunpack.c.l.b16 %v3764
    %v3900 = vunpack.c.l.b16 %v3765
    %v3901 = vunpack.c.l.b16 %v3766
    %v3902 = vunpack.c.l.b16 %v3767
    %v3903 = vunpack.c.l.b16 %v3768
    %v3904 = vunpack.c.l.b16 %v3769
    %v3905 = vunpack.c.l.b16 %v3770
    %v3906 = vunpack.c.l.b16 %v3771
    %v3907 = vunpack.c.l.b16 %v3772
    %v3908 = vunpack.c.l.b16 %v3773
    %v3909 = vunpack.c.l.b16 %v3774
    %v3910 = vunpack.c.l.b16 %v3775
    %v3911 = vunpack.c.l.b16 %v3776
    %v3912 = vunpack.c.l.b16 %v3777
    %v3913 = vunpack.c.l.b16 %v3778
    %v3914 = vunpack.c.l.b16 %v3779
    %v3915 = vunpack.c.l.b16 %v3780
    %v3916 = vunpack.c.l.b16 %v3781
    %v3917 = vunpack.c.l.b16 %v3782
    %v3918 = vunpack.c.l.b16 %v3783
    %v3919 = vunpack.c.l.b16 %v3784
    %v3920 = vunpack.c.l.b16 %v3785
    %v3921 = vunpack.c.l.b16 %v3786
    %v3922 = vunpack.c.l.b16 %v3787
    %v3923 = vunpack.c.l.b16 %v3788
    %v3924 = vunpack.c.l.b16 %v3789
    %v3925 = vunpack.c.l.b16 %v3790
    %v3926 = vunpack.c.l.b16 %v3791
    %v3927 = vunpack.c.l.b16 %v3792
    %v3928 = vunpack.c.l.b16 %v3793
    %v3929 = vunpack.c.l.b16 %v3794
    %v3930 = vunpack.c.l.b16 %v3795
    %v3931 = vunpack.c.l.b16 %v3796
    %v3932 = vunpack.c.l.b16 %v3797
    %v3933 = vunpack.c.l.b16 %v3798
    %v3934 = vunpack.c.l.b16 %v3799
    %v3935 = vunpack.c.l.b16 %v3800
    %v3936 = vunpack.c.l.b16 %v3801
    %v3937 = vunpack.c.l.b16 %v3802
    %v3938 = vunpack.c.l.b16 %v3803
    %v3939 = vunpack.c.l.b16 %v3804
    %v3940 = vunpack.c.l.b16 %v3805
    %v3941 = vunpack.c.l.b16 %v3806
    %v3942 = vunpack.c.l.b16 %v3807
    %v3943 = vunpack.c.l.b16 %v3808
    %v3944 = vunpack.c.l.b16 %v3809
    %v3945 = vunpack.c.l.b16 %v3810
    %v3946 = vunpack.c.l.b16 %v3811
    %v3947 = vunpack.c.l.b16 %v3812
    %v3948 = vunpack.c.l.b16 %v3813
    %v3949 = vunpack.c.l.b16 %v3814
    %v3950 = vunpack.c.l.b16 %v3815
    %v3951 = vunpack.c.l.b16 %v3816
    %v3952 = vunpack.c.l.b16 %v3817
    %v3953 = vunpack.c.l.b16 %v3818
    %v3954 = vpack.c.b16 %v3891, %v3890
    %v3955 = vpack.c.b16 %v3893, %v3892
    %v3956 = vpack.c.b16 %v3895, %v3894
    %v3957 = vpack.c.b16 %v3897, %v3896
    %v3958 = vpack.c.b16 %v3899, %v3898
    %v3959 = vpack.c.b16 %v3901, %v3900
    %v3960 = vpack.c.b16 %v3903, %v3902
    %v3961 = vpack.c.b16 %v3905, %v3904
    %v3962 = vpack.c.b16 %v3907, %v3906
    %v3963 = vpack.c.b16 %v3909, %v3908
    %v3964 = vpack.c.b16 %v3911, %v3910
    %v3965 = vpack.c.b16 %v3913, %v3912
    %v3966 = vpack.c.b16 %v3915, %v3914
    %v3967 = vpack.c.b16 %v3917, %v3916
    %v3968 = vpack.c.b16 %v3919, %v3918
    %v3969 = vpack.c.b16 %v3921, %v3920
    %v3970 = vpack.c.b16 %v3923, %v3922
    %v3971 = vpack.c.b16 %v3925, %v3924
    %v3972 = vpack.c.b16 %v3927, %v3926
    %v3973 = vpack.c.b16 %v3929, %v3928
    %v3974 = vpack.c.b16 %v3931, %v3930
    %v3975 = vpack.c.b16 %v3933, %v3932
    %v3976 = vpack.c.b16 %v3935, %v3934
    %v3977 = vpack.c.b16 %v3937, %v3936
    %v3978 = vpack.c.b16 %v3939, %v3938
    %v3979 = vpack.c.b16 %v3941, %v3940
    %v3980 = vpack.c.b16 %v3943, %v3942
    %v3981 = vpack.c.b16 %v3945, %v3944
    %v3982 = vpack.c.b16 %v3947, %v3946
    %v3983 = vpack.c.b16 %v3949, %v3948
    %v3984 = vpack.c.b16 %v3951, %v3950
    %v3985 = vpack.c.b16 %v3953, %v3952
    %4018 = vmatprep.subr.bf16.mxu0 0
    %4019 = vmatpush1.bf16.msra.mxu0 %v3954
    %4020 = vmatprep.subr.bf16.mxu0 0
    %4021 = vmatpush1.bf16.msra.mxu0 %v3955
    %4022 = vmatprep.subr.bf16.mxu0 0
    %4023 = vmatpush1.bf16.msra.mxu0 %v3956
    %4024 = vmatprep.subr.bf16.mxu0 0
    %4025 = vmatpush1.bf16.msra.mxu0 %v3957
    %4026 = vmatprep.subr.bf16.mxu0 0
    %4027 = vmatpush1.bf16.msra.mxu0 %v3958
    %4028 = vmatprep.subr.bf16.mxu0 0
    %4029 = vmatpush1.bf16.msra.mxu0 %v3959
    %4030 = vmatprep.subr.bf16.mxu0 0
    %4031 = vmatpush1.bf16.msra.mxu0 %v3960
    %4032 = vmatprep.subr.bf16.mxu0 0
    %4033 = vmatpush1.bf16.msra.mxu0 %v3961
    %4034 = vmatprep.subr.bf16.mxu0 0
    %4035 = vmatpush1.bf16.msra.mxu0 %v3962
    %4036 = vmatprep.subr.bf16.mxu0 0
    %4037 = vmatpush1.bf16.msra.mxu0 %v3963
    %4038 = vmatprep.subr.bf16.mxu0 0
    %4039 = vmatpush1.bf16.msra.mxu0 %v3964
    %4040 = vmatprep.subr.bf16.mxu0 0
    %4041 = vmatpush1.bf16.msra.mxu0 %v3965
    %4042 = vmatprep.subr.bf16.mxu0 0
    %4043 = vmatpush1.bf16.msra.mxu0 %v3966
    %4044 = vmatprep.subr.bf16.mxu0 0
    %4045 = vmatpush1.bf16.msra.mxu0 %v3967
    %4046 = vmatprep.subr.bf16.mxu0 0
    %4047 = vmatpush1.bf16.msra.mxu0 %v3968
    %4048 = vmatprep.subr.bf16.mxu0 0
    %4049 = vmatpush1.bf16.msra.mxu0 %v3969
    %4050 = vmatprep.mubr.bf16.mxu0 %v3752
    %4051 = vmatmul.mubr.bf16.gmra.mrb[0].mxu0 %v3751
    %v4052 = vpop.f32.mrb[0].mxu0
    %v4053 = vadd.f32 %v3824, %v4052
    %v4054 = vpop.f32.mrb[0].mxu0
    %v4055 = vpop.f32.mrb[0].mxu0
    %v4056 = vpop.f32.mrb[0].mxu0
    %4057 = vdwg.mxu0
    %4058 = vmatprep.subr.bf16.mxu0 0
    %4059 = vmatpush1.bf16.msra.mxu0 %v3970
    %4060 = vmatprep.subr.bf16.mxu0 0
    %4061 = vmatpush1.bf16.msra.mxu0 %v3971
    %4062 = vmatprep.subr.bf16.mxu0 0
    %4063 = vmatpush1.bf16.msra.mxu0 %v3972
    %4064 = vmatprep.subr.bf16.mxu0 0
    %4065 = vmatpush1.bf16.msra.mxu0 %v3973
    %4066 = vmatprep.subr.bf16.mxu0 0
    %4067 = vmatpush1.bf16.msra.mxu0 %v3974
    %4068 = vmatprep.subr.bf16.mxu0 0
    %4069 = vmatpush1.bf16.msra.mxu0 %v3975
    %4070 = vmatprep.subr.bf16.mxu0 0
    %4071 = vmatpush1.bf16.msra.mxu0 %v3976
    %4072 = vmatprep.subr.bf16.mxu0 0
    %4073 = vmatpush1.bf16.msra.mxu0 %v3977
    %4074 = vmatprep.subr.bf16.mxu0 0
    %4075 = vmatpush1.bf16.msra.mxu0 %v3978
    %4076 = vmatprep.subr.bf16.mxu0 0
    %4077 = vmatpush1.bf16.msra.mxu0 %v3979
    %4078 = vmatprep.subr.bf16.mxu0 0
    %4079 = vmatpush1.bf16.msra.mxu0 %v3980
    %4080 = vmatprep.subr.bf16.mxu0 0
    %4081 = vmatpush1.bf16.msra.mxu0 %v3981
    %4082 = vmatprep.subr.bf16.mxu0 0
    %4083 = vmatpush1.bf16.msra.mxu0 %v3982
    %4084 = vmatprep.subr.bf16.mxu0 0
    %4085 = vmatpush1.bf16.msra.mxu0 %v3983
    %4086 = vmatprep.subr.bf16.mxu0 0
    %4087 = vmatpush1.bf16.msra.mxu0 %v3984
    %4088 = vmatprep.subr.bf16.mxu0 0
    %4089 = vmatpush1.bf16.msra.mxu0 %v3985
    %4090 = vmatprep.mubr.bf16.mxu0 %v3754
    %4091 = vmatmul.mubr.bf16.gmra.mrb[0].mxu0 %v3753
    %v4092 = vpop.f32.mrb[0].mxu0
    %v4093 = vadd.f32 %v4053, %v4092
    %v4094 = vpop.f32.mrb[0].mxu0
    %v4095 = vpop.f32.mrb[0].mxu0
    %v4096 = vpop.f32.mrb[0].mxu0
    %4097 = vdwg.mxu0
    %vm4098 = vcmask 15360
    %v4099 = vsel %vm4098, %v4093, -inf
    %4100 = vmax.xlane.f32.xlu0 %v4099
    %v4101 = vpop.xlane.xlu0 %4100
    %v4102 = vsub.f32 %v4093, %v4101
    %v4103 = vmul.f32 %v4102, 1.442695
    %v4104 = vpow.pop %v4103
    %v4105 = vsel %vm4098, %v4104, 0.0
    %4106 = vadd.xlane.f32.xlu0 %v4105
    %v4107 = vpop.xlane.xlu0 %4106
    %v4108 = vlog2.pop %v4107
    %v4109 = vmul.f32 %v4108, 0.6931472
    %v4110 = vadd.f32 %v4109, %v4101
    %v4111 = vsub.f32 %v4093, %v4110
    %4112 = vst.msk [vmem:[#allocation13] sm:$0xff] %vm4098, %v4111
    // Predicated region
    $region54: #{tpu_custom_call.1} parent=1 // pred_check
      _
    $region55: #{tpu_custom_call.1} parent=1 // pred_check_branch
      %4114 = sbr.rel (0) target = $region57
    $region56: #{tpu_custom_call.1} parent=1 // pred_region
      %s4116 = ssub.s32 128, 32
      %4117 = vsyncadd [#allocation4], %s4116
      %s4118 = sshll.u32 [#allocation13], 4
      %s4119 = int_to_ptr.vmem [resolvable:$true] %s4118
      %4124 = dma.vmem_to_hbm [thread:$0]  %s4119, 32, %s7, [#allocation4], 32, 32, 2
    $region57: #{tpu_custom_call.1} parent=1 // pred_fallthru
      _
    // Predicated region
    $region58: #{tpu_custom_call.1} parent=1 // pred_check
      _
    $region59: #{tpu_custom_call.1} parent=1 // pred_check_branch
      %4126 = sbr.rel (0) target = $region61
    $region60: #{tpu_custom_call.1} parent=1 // pred_region
      %4127 = dma.done [#allocation4], 128
    $region61: #{tpu_custom_call.1} parent=1 // pred_fallthru
      _
    %4128 = vsyncpa [#allocation3], 1
    %4129 = vsyncpa [#allocation6], 1
    %4130 = vsyncpa [#allocation9], 1
    %4131 = vsyncpa [#allocation12], 1
    %4132 = vsyncpa [#allocation4], 1

</llo_original>
